<compile_context>
chip_gen: v7x
topology: tpu7x:2x2x1
jax: 0.10.0
libtpu: 0.0.40
codegen_flags: <defaults>
</compile_context>

<pallas_src>
import jax
import jax.numpy as jnp
from jax.experimental import pallas as pl
from jax.experimental.pallas import tpu as pltpu

# ----------------------------- hyper-params ---------------------------------
B, T = 8, 8            # batch, sequence length   (B must be a power of two, see mask)
E, H = 32, 32          # embedding dim, GRU hidden dim
V_SRC, V_TGT = 64, 64  # vocab sizes
GP = 128               # 3*H = 96 gate lanes padded to a full 128-lane tile
VP = 128               # V_TGT = 64 vocab lanes padded to 128 for lane-dense stores
NEG = -1e30            # "minus infinity" that stays finite in f32 arithmetic
TB = T * B

assert B & (B - 1) == 0, "batch must be a power of two for the bitwise batch-id mask"


# ----------------------------- fused kernel ---------------------------------
def tagger_kernel(src_ids_ref, tgt_ids_ref,
                  src_emb_ref, tgt_emb_ref,
                  enc_wi_ref, enc_wh_ref, enc_bi_ref, enc_bh_ref,
                  dec_wi_ref, dec_wh_ref, dec_bi_ref, dec_bh_ref,
                  wc_ctx_ref, wc_dec_ref, wo_ref, bo_ref,
                  out_ref,
                  enc_out_ref, dec_out_ref):
    """Embedding + encoder GRU + decoder GRU + dot attention + log_softmax in VMEM.

    Row blocks are time-major: row index = t * B + b.
    """

    # ---- in-kernel embedding lookup as a one-hot MXU matmul (no XLA gather) ----
    def embed(ids_ref, emb_ref, vocab):
        ids = ids_ref[...]                                          # (TB, 1) int32
        lane = jax.lax.broadcasted_iota(jnp.int32, (TB, vocab), 1)  # (TB, V)
        one_hot = (ids == lane).astype(jnp.float32)
        return jnp.dot(one_hot, emb_ref[...],
                       preferred_element_type=jnp.float32)          # (TB, E)

    x_enc = embed(src_ids_ref, src_emb_ref, V_SRC)
    x_dec = embed(tgt_ids_ref, tgt_emb_ref, V_TGT)

    # ---- hoisted input-to-hidden projections for BOTH GRUs, issued up front so the
    # decoder's projection overlaps the encoder recurrence (off the critical chain).
    gi_enc = (jnp.dot(x_enc, enc_wi_ref[...], preferred_element_type=jnp.float32)
              + enc_bi_ref[...])                                    # (TB, GP)
    gi_dec = (jnp.dot(x_dec, dec_wi_ref[...], preferred_element_type=jnp.float32)
              + dec_bi_ref[...])                                    # (TB, GP)

    def gru(gi_all, h0, wh, bh, hs_ref):
        h = h0
        # Statically unrolled time loop (T is compile-time); only h @ W_hh and the
        # gate nonlinearities remain on the serial chain.
        for t in range(T):
            gi = gi_all[t * B:(t + 1) * B, :]                             # (B, GP)
            gh = jnp.dot(h, wh, preferred_element_type=jnp.float32) + bh  # (B, GP)
            pre = gi + gh                              # full 128-lane VALU add
            # gates [r | z | n] live in lanes [0:H | H:2H | 2H:3H]  (nn.GRU semantics)
            rz = jax.nn.sigmoid(pre[:, 0:2 * H])       # ONE EUP push for r and z
            r = rz[:, 0:H]
            z = rz[:, H:2 * H]
            n = jnp.tanh(gi[:, 2 * H:3 * H] + r * gh[:, 2 * H:3 * H])
            h = n + z * (h - n)                        # == (1-z)*n + z*h, 3 VALU ops
            hs_ref[t * B:(t + 1) * B, :] = h           # static-offset scratch store
        return h

    h0 = jnp.zeros((B, H), jnp.float32)
    enc_h = gru(gi_enc, h0, enc_wh_ref[...], enc_bh_ref[...], enc_out_ref)
    # decoder initial hidden = final encoder hidden (1-layer, unidirectional, brnn=False)
    gru(gi_dec, enc_h, dec_wh_ref[...], dec_bh_ref[...], dec_out_ref)

    enc_out = enc_out_ref[...]                                        # (TB, H)
    dec_out = dec_out_ref[...]                                        # (TB, H)

    # ---- Luong dot attention: all B*T rows in one M=64 matmul, no transpose --------
    scores = jax.lax.dot_general(
        dec_out, enc_out,
        dimension_numbers=(((1,), (1,)), ((), ())),
        preferred_element_type=jnp.float32)                           # (TB, TB)
    rows = jax.lax.broadcasted_iota(jnp.int32, (TB, TB), 0)
    cols = jax.lax.broadcasted_iota(jnp.int32, (TB, TB), 1)
    # batch id of a time-major row is row & (B-1); mask cross-batch attention.
    scores = jnp.where((rows & (B - 1)) == (cols & (B - 1)), scores, NEG)
    m = jnp.max(scores, axis=-1, keepdims=True)
    e = jnp.exp(scores - m)
    attn = e * pl.reciprocal(jnp.sum(e, axis=-1, keepdims=True), approx=True)
    ctx = jnp.dot(attn, enc_out, preferred_element_type=jnp.float32)  # (TB, H)

    # combined = tanh(W_c [ctx; dec])   (weight split into two dots -> no lane concat)
    comb = jnp.tanh(
        jnp.dot(ctx, wc_ctx_ref[...], preferred_element_type=jnp.float32)
        + jnp.dot(dec_out, wc_dec_ref[...], preferred_element_type=jnp.float32))

    # ---- vocab projection (lane-padded to 128) + exact log_softmax -----------------
    logits = (jnp.dot(comb, wo_ref[...], preferred_element_type=jnp.float32)
              + bo_ref[...])                                          # (TB, VP)
    lm = jnp.max(logits, axis=-1, keepdims=True)
    shifted = logits - lm
    lse = jnp.log(jnp.sum(jnp.exp(shifted), axis=-1, keepdims=True))
    out_ref[...] = shifted - lse                       # lane-dense (TB, 128) store


def run_tagger_kernel(src_ids, tgt_ids, p):
    # Single invocation, no grid: total working set is < 200 KB so every operand fits
    # in VMEM whole (default whole-array blocks) and nothing round-trips HBM.
    cost = pl.CostEstimate(flops=4_200_000, transcendentals=27_000,
                           bytes_accessed=150_000)
    return pl.pallas_call(
        tagger_kernel,
        out_shape=jax.ShapeDtypeStruct((TB, VP), jnp.float32),
        scratch_shapes=[pltpu.VMEM((TB, H), jnp.float32),    # enc_out slab
                        pltpu.VMEM((TB, H), jnp.float32)],   # dec_out slab
        cost_estimate=cost,
    )(src_ids, tgt_ids,
      p["src_emb"], p["tgt_emb"],
      p["enc_wi"], p["enc_wh"], p["enc_bi"], p["enc_bh"],
      p["dec_wi"], p["dec_wh"], p["dec_bi"], p["dec_bh"],
      p["wc_ctx"], p["wc_dec"], p["wo"], p["bo"])


# ----------------------------- parameters ------------------------------------
def init_params(key):
    ks = jax.random.split(key, 13)
    s = 0.1

    def nrm(k, shape):
        return s * jax.random.normal(k, shape, dtype=jnp.float32)

    def gru_params(k_i, k_h, k_bi, k_bh, in_dim):
        # PyTorch nn.GRU holds (3H, in)/(3H, H) weights for gates [r|z|n]; we store them
        # pre-transposed, gate-fused and zero-padded to a full 128-lane tile.
        wi = jnp.zeros((in_dim, GP), jnp.float32).at[:, :3 * H].set(nrm(k_i, (in_dim, 3 * H)))
        wh = jnp.zeros((H, GP), jnp.float32).at[:, :3 * H].set(nrm(k_h, (H, 3 * H)))
        bi = jnp.zeros((1, GP), jnp.float32).at[:, :3 * H].set(nrm(k_bi, (1, 3 * H)))
        bh = jnp.zeros((1, GP), jnp.float32).at[:, :3 * H].set(nrm(k_bh, (1, 3 * H)))
        return wi, wh, bi, bh

    enc_wi, enc_wh, enc_bi, enc_bh = gru_params(ks[2], ks[3], ks[4], ks[5], E)
    dec_wi, dec_wh, dec_bi, dec_bh = gru_params(ks[6], ks[7], ks[8], ks[9], E)

    # output projection padded V_TGT=64 -> 128 lanes; pad columns get a -1e30 bias so
    # they contribute nothing to the log_softmax normalizer.
    wo = jnp.zeros((H, VP), jnp.float32).at[:, :V_TGT].set(nrm(ks[12], (H, V_TGT)))
    bo = jnp.full((1, VP), NEG, jnp.float32).at[:, :V_TGT].set(0.0)

    return {
        "src_emb": nrm(ks[0], (V_SRC, E)),
        "tgt_emb": nrm(ks[1], (V_TGT, E)),
        "enc_wi": enc_wi, "enc_wh": enc_wh, "enc_bi": enc_bi, "enc_bh": enc_bh,
        "dec_wi": dec_wi, "dec_wh": dec_wh, "dec_bi": dec_bi, "dec_bh": dec_bh,
        "wc_ctx": nrm(ks[10], (H, H)),
        "wc_dec": nrm(ks[11], (H, H)),
        "wo": wo, "bo": bo,
    }


# ----------------------------- model forward ---------------------------------
def tagger_forward(params, src_seq, input_lengths=None, tgt_seq=None):
    # TaggerModel.forward: tgt_seq is None -> decoder input = src_seq.
    if tgt_seq is None:
        tgt_seq = src_seq
    # TODO(synk): input_lengths masking not implemented (full-length sequences assumed).

    # Only the tiny int32 id matrices are rearranged host-side (time-major (T*B, 1));
    # the embedding gather itself happens inside the kernel.
    src_ids = src_seq.T.reshape(TB, 1).astype(jnp.int32)
    tgt_ids = tgt_seq.T.reshape(TB, 1).astype(jnp.int32)

    out = run_tagger_kernel(src_ids, tgt_ids, params)               # (TB, 128), time-major
    log_probs = out.reshape(T, B, VP)[:, :, :V_TGT].swapaxes(0, 1)  # (B, T, V_TGT)
    return log_probs


# ----------------------------- main -------------------------------------------
if __name__ == "__main__":
    key = jax.random.PRNGKey(0)
    k_param, k_tok = jax.random.split(key)

    params = init_params(k_param)
    src_seq = jax.random.randint(k_tok, (B, T), 0, V_SRC, dtype=jnp.int32)

    out = jax.jit(tagger_forward)(params, src_seq)
    out = jax.block_until_ready(out)

    assert out.shape == (B, T, V_TGT), out.shape
    assert bool(jnp.all(jnp.isfinite(out)))
    # rows of exp(log_probs) should sum to ~1
    assert bool(jnp.allclose(jnp.sum(jnp.exp(out), axis=-1), 1.0, atol=1e-4))

    print("KERNEL_OK")
</pallas_src>

<mosaic_0001>
module attributes {stable_mosaic.version = 11 : i64} {
  func.func @tagger_kernel(%arg0: memref<64x1xi32, #tpu.memory_space<vmem>>, %arg1: memref<64x1xi32, #tpu.memory_space<vmem>>, %arg2: memref<64x32xf32, #tpu.memory_space<vmem>>, %arg3: memref<64x32xf32, #tpu.memory_space<vmem>>, %arg4: memref<32x128xf32, #tpu.memory_space<vmem>>, %arg5: memref<32x128xf32, #tpu.memory_space<vmem>>, %arg6: memref<1x128xf32, #tpu.memory_space<vmem>>, %arg7: memref<1x128xf32, #tpu.memory_space<vmem>>, %arg8: memref<32x128xf32, #tpu.memory_space<vmem>>, %arg9: memref<32x128xf32, #tpu.memory_space<vmem>>, %arg10: memref<1x128xf32, #tpu.memory_space<vmem>>, %arg11: memref<1x128xf32, #tpu.memory_space<vmem>>, %arg12: memref<32x32xf32, #tpu.memory_space<vmem>>, %arg13: memref<32x32xf32, #tpu.memory_space<vmem>>, %arg14: memref<32x128xf32, #tpu.memory_space<vmem>>, %arg15: memref<1x128xf32, #tpu.memory_space<vmem>>, %arg16: memref<64x128xf32, #tpu.memory_space<vmem>>, %arg17: memref<64x32xf32, #tpu.memory_space<vmem>>, %arg18: memref<64x32xf32, #tpu.memory_space<vmem>>) attributes {dimension_semantics = [], scalar_prefetch = 0 : i64, scratch_operands = 2 : i64, tpu.core_type = #tpu.core_type<tc>} {
    %c0 = arith.constant 0 : index
    %c0_0 = arith.constant 0 : index
    %0 = vector.load %arg0[%c0, %c0_0] : memref<64x1xi32, #tpu.memory_space<vmem>>, vector<64x1xi32>
    %1 = tpu.iota {dimensions = array<i32: 1>} : vector<64x64xi32>
    %2 = vector.broadcast %0 : vector<64x1xi32> to vector<64x64xi32>
    %3 = arith.cmpi eq, %2, %1 : vector<64x64xi32>
    %4 = arith.extui %3 : vector<64x64xi1> to vector<64x64xi32>
    %5 = arith.sitofp %4 : vector<64x64xi32> to vector<64x64xf32>
    %c0_1 = arith.constant 0 : index
    %c0_2 = arith.constant 0 : index
    %6 = vector.load %arg2[%c0_1, %c0_2] : memref<64x32xf32, #tpu.memory_space<vmem>>, vector<64x32xf32>
    %cst = arith.constant dense<0.000000e+00> : vector<64x32xf32>
    %7 = tpu.matmul %5, %6, %cst {dimension_numbers = #tpu.dot_dimension_numbers<[1], [0], [0], [1], [0, 0, 1, 1], [], []>} : vector<64x64xf32>, vector<64x32xf32>, vector<64x32xf32> -> vector<64x32xf32>
    %c0_3 = arith.constant 0 : index
    %c0_4 = arith.constant 0 : index
    %8 = vector.load %arg1[%c0_3, %c0_4] : memref<64x1xi32, #tpu.memory_space<vmem>>, vector<64x1xi32>
    %9 = tpu.iota {dimensions = array<i32: 1>} : vector<64x64xi32>
    %10 = vector.broadcast %8 : vector<64x1xi32> to vector<64x64xi32>
    %11 = arith.cmpi eq, %10, %9 : vector<64x64xi32>
    %12 = arith.extui %11 : vector<64x64xi1> to vector<64x64xi32>
    %13 = arith.sitofp %12 : vector<64x64xi32> to vector<64x64xf32>
    %c0_5 = arith.constant 0 : index
    %c0_6 = arith.constant 0 : index
    %14 = vector.load %arg3[%c0_5, %c0_6] : memref<64x32xf32, #tpu.memory_space<vmem>>, vector<64x32xf32>
    %cst_7 = arith.constant dense<0.000000e+00> : vector<64x32xf32>
    %15 = tpu.matmul %13, %14, %cst_7 {dimension_numbers = #tpu.dot_dimension_numbers<[1], [0], [0], [1], [0, 0, 1, 1], [], []>} : vector<64x64xf32>, vector<64x32xf32>, vector<64x32xf32> -> vector<64x32xf32>
    %c0_8 = arith.constant 0 : index
    %c0_9 = arith.constant 0 : index
    %16 = vector.load %arg4[%c0_8, %c0_9] : memref<32x128xf32, #tpu.memory_space<vmem>>, vector<32x128xf32>
    %cst_10 = arith.constant dense<0.000000e+00> : vector<64x128xf32>
    %17 = tpu.matmul %7, %16, %cst_10 {dimension_numbers = #tpu.dot_dimension_numbers<[1], [0], [0], [1], [0, 0, 1, 1], [], []>} : vector<64x32xf32>, vector<32x128xf32>, vector<64x128xf32> -> vector<64x128xf32>
    %c0_11 = arith.constant 0 : index
    %c0_12 = arith.constant 0 : index
    %18 = vector.load %arg6[%c0_11, %c0_12] : memref<1x128xf32, #tpu.memory_space<vmem>>, vector<1x128xf32>
    %19 = vector.broadcast %18 : vector<1x128xf32> to vector<64x128xf32>
    %20 = arith.addf %17, %19 : vector<64x128xf32>
    %c0_13 = arith.constant 0 : index
    %c0_14 = arith.constant 0 : index
    %21 = vector.load %arg8[%c0_13, %c0_14] : memref<32x128xf32, #tpu.memory_space<vmem>>, vector<32x128xf32>
    %cst_15 = arith.constant dense<0.000000e+00> : vector<64x128xf32>
    %22 = tpu.matmul %15, %21, %cst_15 {dimension_numbers = #tpu.dot_dimension_numbers<[1], [0], [0], [1], [0, 0, 1, 1], [], []>} : vector<64x32xf32>, vector<32x128xf32>, vector<64x128xf32> -> vector<64x128xf32>
    %c0_16 = arith.constant 0 : index
    %c0_17 = arith.constant 0 : index
    %23 = vector.load %arg10[%c0_16, %c0_17] : memref<1x128xf32, #tpu.memory_space<vmem>>, vector<1x128xf32>
    %24 = vector.broadcast %23 : vector<1x128xf32> to vector<64x128xf32>
    %25 = arith.addf %22, %24 : vector<64x128xf32>
    %cst_18 = arith.constant 0.000000e+00 : f32
    %26 = vector.broadcast %cst_18 : f32 to vector<8x32xf32>
    %c0_19 = arith.constant 0 : index
    %c0_20 = arith.constant 0 : index
    %27 = vector.load %arg5[%c0_19, %c0_20] : memref<32x128xf32, #tpu.memory_space<vmem>>, vector<32x128xf32>
    %c0_21 = arith.constant 0 : index
    %c0_22 = arith.constant 0 : index
    %28 = vector.load %arg7[%c0_21, %c0_22] : memref<1x128xf32, #tpu.memory_space<vmem>>, vector<1x128xf32>
    %29 = vector.extract_strided_slice %20 {offsets = [0, 0], sizes = [8, 128], strides = [1, 1]} : vector<64x128xf32> to vector<8x128xf32>
    %cst_23 = arith.constant dense<0.000000e+00> : vector<8x128xf32>
    %30 = tpu.matmul %26, %27, %cst_23 {dimension_numbers = #tpu.dot_dimension_numbers<[1], [0], [0], [1], [0, 0, 1, 1], [], []>} : vector<8x32xf32>, vector<32x128xf32>, vector<8x128xf32> -> vector<8x128xf32>
    %31 = vector.broadcast %28 : vector<1x128xf32> to vector<8x128xf32>
    %32 = arith.addf %30, %31 : vector<8x128xf32>
    %33 = arith.addf %29, %32 : vector<8x128xf32>
    %34 = vector.extract_strided_slice %33 {offsets = [0, 0], sizes = [8, 64], strides = [1, 1]} : vector<8x128xf32> to vector<8x64xf32>
    %35 = arith.negf %34 : vector<8x64xf32>
    %36 = math.exp %35 : vector<8x64xf32>
    %cst_24 = arith.constant 1.000000e+00 : f32
    %37 = vector.broadcast %cst_24 : f32 to vector<8x64xf32>
    %38 = arith.addf %37, %36 : vector<8x64xf32>
    %39 = arith.divf %37, %38 : vector<8x64xf32>
    %40 = vector.extract_strided_slice %39 {offsets = [0, 0], sizes = [8, 32], strides = [1, 1]} : vector<8x64xf32> to vector<8x32xf32>
    %41 = vector.extract_strided_slice %39 {offsets = [0, 32], sizes = [8, 32], strides = [1, 1]} : vector<8x64xf32> to vector<8x32xf32>
    %42 = vector.extract_strided_slice %29 {offsets = [0, 64], sizes = [8, 32], strides = [1, 1]} : vector<8x128xf32> to vector<8x32xf32>
    %43 = vector.extract_strided_slice %32 {offsets = [0, 64], sizes = [8, 32], strides = [1, 1]} : vector<8x128xf32> to vector<8x32xf32>
    %44 = arith.mulf %40, %43 : vector<8x32xf32>
    %45 = arith.addf %42, %44 : vector<8x32xf32>
    %46 = math.tanh %45 : vector<8x32xf32>
    %47 = arith.subf %26, %46 : vector<8x32xf32>
    %48 = arith.mulf %41, %47 : vector<8x32xf32>
    %49 = arith.addf %46, %48 : vector<8x32xf32>
    %c0_25 = arith.constant 0 : index
    %c0_26 = arith.constant 0 : index
    %50 = vector.load %arg17[%c0_25, %c0_26] : memref<64x32xf32, #tpu.memory_space<vmem>>, vector<8x32xf32>
    tpu.vector_store %arg17[%c0_25, %c0_26], %49 {strides = array<i32>} : memref<64x32xf32, #tpu.memory_space<vmem>>, vector<8x32xf32>,
    %51 = vector.extract_strided_slice %20 {offsets = [8, 0], sizes = [8, 128], strides = [1, 1]} : vector<64x128xf32> to vector<8x128xf32>
    %cst_27 = arith.constant dense<0.000000e+00> : vector<8x128xf32>
    %52 = tpu.matmul %49, %27, %cst_27 {dimension_numbers = #tpu.dot_dimension_numbers<[1], [0], [0], [1], [0, 0, 1, 1], [], []>} : vector<8x32xf32>, vector<32x128xf32>, vector<8x128xf32> -> vector<8x128xf32>
    %53 = vector.broadcast %28 : vector<1x128xf32> to vector<8x128xf32>
    %54 = arith.addf %52, %53 : vector<8x128xf32>
    %55 = arith.addf %51, %54 : vector<8x128xf32>
    %56 = vector.extract_strided_slice %55 {offsets = [0, 0], sizes = [8, 64], strides = [1, 1]} : vector<8x128xf32> to vector<8x64xf32>
    %57 = arith.negf %56 : vector<8x64xf32>
    %58 = math.exp %57 : vector<8x64xf32>
    %cst_28 = arith.constant 1.000000e+00 : f32
    %59 = vector.broadcast %cst_28 : f32 to vector<8x64xf32>
    %60 = arith.addf %59, %58 : vector<8x64xf32>
    %61 = arith.divf %59, %60 : vector<8x64xf32>
    %62 = vector.extract_strided_slice %61 {offsets = [0, 0], sizes = [8, 32], strides = [1, 1]} : vector<8x64xf32> to vector<8x32xf32>
    %63 = vector.extract_strided_slice %61 {offsets = [0, 32], sizes = [8, 32], strides = [1, 1]} : vector<8x64xf32> to vector<8x32xf32>
    %64 = vector.extract_strided_slice %51 {offsets = [0, 64], sizes = [8, 32], strides = [1, 1]} : vector<8x128xf32> to vector<8x32xf32>
    %65 = vector.extract_strided_slice %54 {offsets = [0, 64], sizes = [8, 32], strides = [1, 1]} : vector<8x128xf32> to vector<8x32xf32>
    %66 = arith.mulf %62, %65 : vector<8x32xf32>
    %67 = arith.addf %64, %66 : vector<8x32xf32>
    %68 = math.tanh %67 : vector<8x32xf32>
    %69 = arith.subf %49, %68 : vector<8x32xf32>
    %70 = arith.mulf %63, %69 : vector<8x32xf32>
    %71 = arith.addf %68, %70 : vector<8x32xf32>
    %c8 = arith.constant 8 : index
    %c0_29 = arith.constant 0 : index
    %72 = vector.load %arg17[%c8, %c0_29] : memref<64x32xf32, #tpu.memory_space<vmem>>, vector<8x32xf32>
    tpu.vector_store %arg17[%c8, %c0_29], %71 {strides = array<i32>} : memref<64x32xf32, #tpu.memory_space<vmem>>, vector<8x32xf32>,
    %73 = vector.extract_strided_slice %20 {offsets = [16, 0], sizes = [8, 128], strides = [1, 1]} : vector<64x128xf32> to vector<8x128xf32>
    %cst_30 = arith.constant dense<0.000000e+00> : vector<8x128xf32>
    %74 = tpu.matmul %71, %27, %cst_30 {dimension_numbers = #tpu.dot_dimension_numbers<[1], [0], [0], [1], [0, 0, 1, 1], [], []>} : vector<8x32xf32>, vector<32x128xf32>, vector<8x128xf32> -> vector<8x128xf32>
    %75 = vector.broadcast %28 : vector<1x128xf32> to vector<8x128xf32>
    %76 = arith.addf %74, %75 : vector<8x128xf32>
    %77 = arith.addf %73, %76 : vector<8x128xf32>
    %78 = vector.extract_strided_slice %77 {offsets = [0, 0], sizes = [8, 64], strides = [1, 1]} : vector<8x128xf32> to vector<8x64xf32>
    %79 = arith.negf %78 : vector<8x64xf32>
    %80 = math.exp %79 : vector<8x64xf32>
    %cst_31 = arith.constant 1.000000e+00 : f32
    %81 = vector.broadcast %cst_31 : f32 to vector<8x64xf32>
    %82 = arith.addf %81, %80 : vector<8x64xf32>
    %83 = arith.divf %81, %82 : vector<8x64xf32>
    %84 = vector.extract_strided_slice %83 {offsets = [0, 0], sizes = [8, 32], strides = [1, 1]} : vector<8x64xf32> to vector<8x32xf32>
    %85 = vector.extract_strided_slice %83 {offsets = [0, 32], sizes = [8, 32], strides = [1, 1]} : vector<8x64xf32> to vector<8x32xf32>
    %86 = vector.extract_strided_slice %73 {offsets = [0, 64], sizes = [8, 32], strides = [1, 1]} : vector<8x128xf32> to vector<8x32xf32>
    %87 = vector.extract_strided_slice %76 {offsets = [0, 64], sizes = [8, 32], strides = [1, 1]} : vector<8x128xf32> to vector<8x32xf32>
    %88 = arith.mulf %84, %87 : vector<8x32xf32>
    %89 = arith.addf %86, %88 : vector<8x32xf32>
    %90 = math.tanh %89 : vector<8x32xf32>
    %91 = arith.subf %71, %90 : vector<8x32xf32>
    %92 = arith.mulf %85, %91 : vector<8x32xf32>
    %93 = arith.addf %90, %92 : vector<8x32xf32>
    %c16 = arith.constant 16 : index
    %c0_32 = arith.constant 0 : index
    %94 = vector.load %arg17[%c16, %c0_32] : memref<64x32xf32, #tpu.memory_space<vmem>>, vector<8x32xf32>
    tpu.vector_store %arg17[%c16, %c0_32], %93 {strides = array<i32>} : memref<64x32xf32, #tpu.memory_space<vmem>>, vector<8x32xf32>,
    %95 = vector.extract_strided_slice %20 {offsets = [24, 0], sizes = [8, 128], strides = [1, 1]} : vector<64x128xf32> to vector<8x128xf32>
    %cst_33 = arith.constant dense<0.000000e+00> : vector<8x128xf32>
    %96 = tpu.matmul %93, %27, %cst_33 {dimension_numbers = #tpu.dot_dimension_numbers<[1], [0], [0], [1], [0, 0, 1, 1], [], []>} : vector<8x32xf32>, vector<32x128xf32>, vector<8x128xf32> -> vector<8x128xf32>
    %97 = vector.broadcast %28 : vector<1x128xf32> to vector<8x128xf32>
    %98 = arith.addf %96, %97 : vector<8x128xf32>
    %99 = arith.addf %95, %98 : vector<8x128xf32>
    %100 = vector.extract_strided_slice %99 {offsets = [0, 0], sizes = [8, 64], strides = [1, 1]} : vector<8x128xf32> to vector<8x64xf32>
    %101 = arith.negf %100 : vector<8x64xf32>
    %102 = math.exp %101 : vector<8x64xf32>
    %cst_34 = arith.constant 1.000000e+00 : f32
    %103 = vector.broadcast %cst_34 : f32 to vector<8x64xf32>
    %104 = arith.addf %103, %102 : vector<8x64xf32>
    %105 = arith.divf %103, %104 : vector<8x64xf32>
    %106 = vector.extract_strided_slice %105 {offsets = [0, 0], sizes = [8, 32], strides = [1, 1]} : vector<8x64xf32> to vector<8x32xf32>
    %107 = vector.extract_strided_slice %105 {offsets = [0, 32], sizes = [8, 32], strides = [1, 1]} : vector<8x64xf32> to vector<8x32xf32>
    %108 = vector.extract_strided_slice %95 {offsets = [0, 64], sizes = [8, 32], strides = [1, 1]} : vector<8x128xf32> to vector<8x32xf32>
    %109 = vector.extract_strided_slice %98 {offsets = [0, 64], sizes = [8, 32], strides = [1, 1]} : vector<8x128xf32> to vector<8x32xf32>
    %110 = arith.mulf %106, %109 : vector<8x32xf32>
    %111 = arith.addf %108, %110 : vector<8x32xf32>
    %112 = math.tanh %111 : vector<8x32xf32>
    %113 = arith.subf %93, %112 : vector<8x32xf32>
    %114 = arith.mulf %107, %113 : vector<8x32xf32>
    %115 = arith.addf %112, %114 : vector<8x32xf32>
    %c24 = arith.constant 24 : index
    %c0_35 = arith.constant 0 : index
    %116 = vector.load %arg17[%c24, %c0_35] : memref<64x32xf32, #tpu.memory_space<vmem>>, vector<8x32xf32>
    tpu.vector_store %arg17[%c24, %c0_35], %115 {strides = array<i32>} : memref<64x32xf32, #tpu.memory_space<vmem>>, vector<8x32xf32>,
    %117 = vector.extract_strided_slice %20 {offsets = [32, 0], sizes = [8, 128], strides = [1, 1]} : vector<64x128xf32> to vector<8x128xf32>
    %cst_36 = arith.constant dense<0.000000e+00> : vector<8x128xf32>
    %118 = tpu.matmul %115, %27, %cst_36 {dimension_numbers = #tpu.dot_dimension_numbers<[1], [0], [0], [1], [0, 0, 1, 1], [], []>} : vector<8x32xf32>, vector<32x128xf32>, vector<8x128xf32> -> vector<8x128xf32>
    %119 = vector.broadcast %28 : vector<1x128xf32> to vector<8x128xf32>
    %120 = arith.addf %118, %119 : vector<8x128xf32>
    %121 = arith.addf %117, %120 : vector<8x128xf32>
    %122 = vector.extract_strided_slice %121 {offsets = [0, 0], sizes = [8, 64], strides = [1, 1]} : vector<8x128xf32> to vector<8x64xf32>
    %123 = arith.negf %122 : vector<8x64xf32>
    %124 = math.exp %123 : vector<8x64xf32>
    %cst_37 = arith.constant 1.000000e+00 : f32
    %125 = vector.broadcast %cst_37 : f32 to vector<8x64xf32>
    %126 = arith.addf %125, %124 : vector<8x64xf32>
    %127 = arith.divf %125, %126 : vector<8x64xf32>
    %128 = vector.extract_strided_slice %127 {offsets = [0, 0], sizes = [8, 32], strides = [1, 1]} : vector<8x64xf32> to vector<8x32xf32>
    %129 = vector.extract_strided_slice %127 {offsets = [0, 32], sizes = [8, 32], strides = [1, 1]} : vector<8x64xf32> to vector<8x32xf32>
    %130 = vector.extract_strided_slice %117 {offsets = [0, 64], sizes = [8, 32], strides = [1, 1]} : vector<8x128xf32> to vector<8x32xf32>
    %131 = vector.extract_strided_slice %120 {offsets = [0, 64], sizes = [8, 32], strides = [1, 1]} : vector<8x128xf32> to vector<8x32xf32>
    %132 = arith.mulf %128, %131 : vector<8x32xf32>
    %133 = arith.addf %130, %132 : vector<8x32xf32>
    %134 = math.tanh %133 : vector<8x32xf32>
    %135 = arith.subf %115, %134 : vector<8x32xf32>
    %136 = arith.mulf %129, %135 : vector<8x32xf32>
    %137 = arith.addf %134, %136 : vector<8x32xf32>
    %c32 = arith.constant 32 : index
    %c0_38 = arith.constant 0 : index
    %138 = vector.load %arg17[%c32, %c0_38] : memref<64x32xf32, #tpu.memory_space<vmem>>, vector<8x32xf32>
    tpu.vector_store %arg17[%c32, %c0_38], %137 {strides = array<i32>} : memref<64x32xf32, #tpu.memory_space<vmem>>, vector<8x32xf32>,
    %139 = vector.extract_strided_slice %20 {offsets = [40, 0], sizes = [8, 128], strides = [1, 1]} : vector<64x128xf32> to vector<8x128xf32>
    %cst_39 = arith.constant dense<0.000000e+00> : vector<8x128xf32>
    %140 = tpu.matmul %137, %27, %cst_39 {dimension_numbers = #tpu.dot_dimension_numbers<[1], [0], [0], [1], [0, 0, 1, 1], [], []>} : vector<8x32xf32>, vector<32x128xf32>, vector<8x128xf32> -> vector<8x128xf32>
    %141 = vector.broadcast %28 : vector<1x128xf32> to vector<8x128xf32>
    %142 = arith.addf %140, %141 : vector<8x128xf32>
    %143 = arith.addf %139, %142 : vector<8x128xf32>
    %144 = vector.extract_strided_slice %143 {offsets = [0, 0], sizes = [8, 64], strides = [1, 1]} : vector<8x128xf32> to vector<8x64xf32>
    %145 = arith.negf %144 : vector<8x64xf32>
    %146 = math.exp %145 : vector<8x64xf32>
    %cst_40 = arith.constant 1.000000e+00 : f32
    %147 = vector.broadcast %cst_40 : f32 to vector<8x64xf32>
    %148 = arith.addf %147, %146 : vector<8x64xf32>
    %149 = arith.divf %147, %148 : vector<8x64xf32>
    %150 = vector.extract_strided_slice %149 {offsets = [0, 0], sizes = [8, 32], strides = [1, 1]} : vector<8x64xf32> to vector<8x32xf32>
    %151 = vector.extract_strided_slice %149 {offsets = [0, 32], sizes = [8, 32], strides = [1, 1]} : vector<8x64xf32> to vector<8x32xf32>
    %152 = vector.extract_strided_slice %139 {offsets = [0, 64], sizes = [8, 32], strides = [1, 1]} : vector<8x128xf32> to vector<8x32xf32>
    %153 = vector.extract_strided_slice %142 {offsets = [0, 64], sizes = [8, 32], strides = [1, 1]} : vector<8x128xf32> to vector<8x32xf32>
    %154 = arith.mulf %150, %153 : vector<8x32xf32>
    %155 = arith.addf %152, %154 : vector<8x32xf32>
    %156 = math.tanh %155 : vector<8x32xf32>
    %157 = arith.subf %137, %156 : vector<8x32xf32>
    %158 = arith.mulf %151, %157 : vector<8x32xf32>
    %159 = arith.addf %156, %158 : vector<8x32xf32>
    %c40 = arith.constant 40 : index
    %c0_41 = arith.constant 0 : index
    %160 = vector.load %arg17[%c40, %c0_41] : memref<64x32xf32, #tpu.memory_space<vmem>>, vector<8x32xf32>
    tpu.vector_store %arg17[%c40, %c0_41], %159 {strides = array<i32>} : memref<64x32xf32, #tpu.memory_space<vmem>>, vector<8x32xf32>,
    %161 = vector.extract_strided_slice %20 {offsets = [48, 0], sizes = [8, 128], strides = [1, 1]} : vector<64x128xf32> to vector<8x128xf32>
    %cst_42 = arith.constant dense<0.000000e+00> : vector<8x128xf32>
    %162 = tpu.matmul %159, %27, %cst_42 {dimension_numbers = #tpu.dot_dimension_numbers<[1], [0], [0], [1], [0, 0, 1, 1], [], []>} : vector<8x32xf32>, vector<32x128xf32>, vector<8x128xf32> -> vector<8x128xf32>
    %163 = vector.broadcast %28 : vector<1x128xf32> to vector<8x128xf32>
    %164 = arith.addf %162, %163 : vector<8x128xf32>
    %165 = arith.addf %161, %164 : vector<8x128xf32>
    %166 = vector.extract_strided_slice %165 {offsets = [0, 0], sizes = [8, 64], strides = [1, 1]} : vector<8x128xf32> to vector<8x64xf32>
    %167 = arith.negf %166 : vector<8x64xf32>
    %168 = math.exp %167 : vector<8x64xf32>
    %cst_43 = arith.constant 1.000000e+00 : f32
    %169 = vector.broadcast %cst_43 : f32 to vector<8x64xf32>
    %170 = arith.addf %169, %168 : vector<8x64xf32>
    %171 = arith.divf %169, %170 : vector<8x64xf32>
    %172 = vector.extract_strided_slice %171 {offsets = [0, 0], sizes = [8, 32], strides = [1, 1]} : vector<8x64xf32> to vector<8x32xf32>
    %173 = vector.extract_strided_slice %171 {offsets = [0, 32], sizes = [8, 32], strides = [1, 1]} : vector<8x64xf32> to vector<8x32xf32>
    %174 = vector.extract_strided_slice %161 {offsets = [0, 64], sizes = [8, 32], strides = [1, 1]} : vector<8x128xf32> to vector<8x32xf32>
    %175 = vector.extract_strided_slice %164 {offsets = [0, 64], sizes = [8, 32], strides = [1, 1]} : vector<8x128xf32> to vector<8x32xf32>
    %176 = arith.mulf %172, %175 : vector<8x32xf32>
    %177 = arith.addf %174, %176 : vector<8x32xf32>
    %178 = math.tanh %177 : vector<8x32xf32>
    %179 = arith.subf %159, %178 : vector<8x32xf32>
    %180 = arith.mulf %173, %179 : vector<8x32xf32>
    %181 = arith.addf %178, %180 : vector<8x32xf32>
    %c48 = arith.constant 48 : index
    %c0_44 = arith.constant 0 : index
    %182 = vector.load %arg17[%c48, %c0_44] : memref<64x32xf32, #tpu.memory_space<vmem>>, vector<8x32xf32>
    tpu.vector_store %arg17[%c48, %c0_44], %181 {strides = array<i32>} : memref<64x32xf32, #tpu.memory_space<vmem>>, vector<8x32xf32>,
    %183 = vector.extract_strided_slice %20 {offsets = [56, 0], sizes = [8, 128], strides = [1, 1]} : vector<64x128xf32> to vector<8x128xf32>
    %cst_45 = arith.constant dense<0.000000e+00> : vector<8x128xf32>
    %184 = tpu.matmul %181, %27, %cst_45 {dimension_numbers = #tpu.dot_dimension_numbers<[1], [0], [0], [1], [0, 0, 1, 1], [], []>} : vector<8x32xf32>, vector<32x128xf32>, vector<8x128xf32> -> vector<8x128xf32>
    %185 = vector.broadcast %28 : vector<1x128xf32> to vector<8x128xf32>
    %186 = arith.addf %184, %185 : vector<8x128xf32>
    %187 = arith.addf %183, %186 : vector<8x128xf32>
    %188 = vector.extract_strided_slice %187 {offsets = [0, 0], sizes = [8, 64], strides = [1, 1]} : vector<8x128xf32> to vector<8x64xf32>
    %189 = arith.negf %188 : vector<8x64xf32>
    %190 = math.exp %189 : vector<8x64xf32>
    %cst_46 = arith.constant 1.000000e+00 : f32
    %191 = vector.broadcast %cst_46 : f32 to vector<8x64xf32>
    %192 = arith.addf %191, %190 : vector<8x64xf32>
    %193 = arith.divf %191, %192 : vector<8x64xf32>
    %194 = vector.extract_strided_slice %193 {offsets = [0, 0], sizes = [8, 32], strides = [1, 1]} : vector<8x64xf32> to vector<8x32xf32>
    %195 = vector.extract_strided_slice %193 {offsets = [0, 32], sizes = [8, 32], strides = [1, 1]} : vector<8x64xf32> to vector<8x32xf32>
    %196 = vector.extract_strided_slice %183 {offsets = [0, 64], sizes = [8, 32], strides = [1, 1]} : vector<8x128xf32> to vector<8x32xf32>
    %197 = vector.extract_strided_slice %186 {offsets = [0, 64], sizes = [8, 32], strides = [1, 1]} : vector<8x128xf32> to vector<8x32xf32>
    %198 = arith.mulf %194, %197 : vector<8x32xf32>
    %199 = arith.addf %196, %198 : vector<8x32xf32>
    %200 = math.tanh %199 : vector<8x32xf32>
    %201 = arith.subf %181, %200 : vector<8x32xf32>
    %202 = arith.mulf %195, %201 : vector<8x32xf32>
    %203 = arith.addf %200, %202 : vector<8x32xf32>
    %c56 = arith.constant 56 : index
    %c0_47 = arith.constant 0 : index
    %204 = vector.load %arg17[%c56, %c0_47] : memref<64x32xf32, #tpu.memory_space<vmem>>, vector<8x32xf32>
    tpu.vector_store %arg17[%c56, %c0_47], %203 {strides = array<i32>} : memref<64x32xf32, #tpu.memory_space<vmem>>, vector<8x32xf32>,
    %c0_48 = arith.constant 0 : index
    %c0_49 = arith.constant 0 : index
    %205 = vector.load %arg9[%c0_48, %c0_49] : memref<32x128xf32, #tpu.memory_space<vmem>>, vector<32x128xf32>
    %c0_50 = arith.constant 0 : index
    %c0_51 = arith.constant 0 : index
    %206 = vector.load %arg11[%c0_50, %c0_51] : memref<1x128xf32, #tpu.memory_space<vmem>>, vector<1x128xf32>
    %207 = vector.extract_strided_slice %25 {offsets = [0, 0], sizes = [8, 128], strides = [1, 1]} : vector<64x128xf32> to vector<8x128xf32>
    %cst_52 = arith.constant dense<0.000000e+00> : vector<8x128xf32>
    %208 = tpu.matmul %203, %205, %cst_52 {dimension_numbers = #tpu.dot_dimension_numbers<[1], [0], [0], [1], [0, 0, 1, 1], [], []>} : vector<8x32xf32>, vector<32x128xf32>, vector<8x128xf32> -> vector<8x128xf32>
    %209 = vector.broadcast %206 : vector<1x128xf32> to vector<8x128xf32>
    %210 = arith.addf %208, %209 : vector<8x128xf32>
    %211 = arith.addf %207, %210 : vector<8x128xf32>
    %212 = vector.extract_strided_slice %211 {offsets = [0, 0], sizes = [8, 64], strides = [1, 1]} : vector<8x128xf32> to vector<8x64xf32>
    %213 = arith.negf %212 : vector<8x64xf32>
    %214 = math.exp %213 : vector<8x64xf32>
    %cst_53 = arith.constant 1.000000e+00 : f32
    %215 = vector.broadcast %cst_53 : f32 to vector<8x64xf32>
    %216 = arith.addf %215, %214 : vector<8x64xf32>
    %217 = arith.divf %215, %216 : vector<8x64xf32>
    %218 = vector.extract_strided_slice %217 {offsets = [0, 0], sizes = [8, 32], strides = [1, 1]} : vector<8x64xf32> to vector<8x32xf32>
    %219 = vector.extract_strided_slice %217 {offsets = [0, 32], sizes = [8, 32], strides = [1, 1]} : vector<8x64xf32> to vector<8x32xf32>
    %220 = vector.extract_strided_slice %207 {offsets = [0, 64], sizes = [8, 32], strides = [1, 1]} : vector<8x128xf32> to vector<8x32xf32>
    %221 = vector.extract_strided_slice %210 {offsets = [0, 64], sizes = [8, 32], strides = [1, 1]} : vector<8x128xf32> to vector<8x32xf32>
    %222 = arith.mulf %218, %221 : vector<8x32xf32>
    %223 = arith.addf %220, %222 : vector<8x32xf32>
    %224 = math.tanh %223 : vector<8x32xf32>
    %225 = arith.subf %203, %224 : vector<8x32xf32>
    %226 = arith.mulf %219, %225 : vector<8x32xf32>
    %227 = arith.addf %224, %226 : vector<8x32xf32>
    %c0_54 = arith.constant 0 : index
    %c0_55 = arith.constant 0 : index
    %228 = vector.load %arg18[%c0_54, %c0_55] : memref<64x32xf32, #tpu.memory_space<vmem>>, vector<8x32xf32>
    tpu.vector_store %arg18[%c0_54, %c0_55], %227 {strides = array<i32>} : memref<64x32xf32, #tpu.memory_space<vmem>>, vector<8x32xf32>,
    %229 = vector.extract_strided_slice %25 {offsets = [8, 0], sizes = [8, 128], strides = [1, 1]} : vector<64x128xf32> to vector<8x128xf32>
    %cst_56 = arith.constant dense<0.000000e+00> : vector<8x128xf32>
    %230 = tpu.matmul %227, %205, %cst_56 {dimension_numbers = #tpu.dot_dimension_numbers<[1], [0], [0], [1], [0, 0, 1, 1], [], []>} : vector<8x32xf32>, vector<32x128xf32>, vector<8x128xf32> -> vector<8x128xf32>
    %231 = vector.broadcast %206 : vector<1x128xf32> to vector<8x128xf32>
    %232 = arith.addf %230, %231 : vector<8x128xf32>
    %233 = arith.addf %229, %232 : vector<8x128xf32>
    %234 = vector.extract_strided_slice %233 {offsets = [0, 0], sizes = [8, 64], strides = [1, 1]} : vector<8x128xf32> to vector<8x64xf32>
    %235 = arith.negf %234 : vector<8x64xf32>
    %236 = math.exp %235 : vector<8x64xf32>
    %cst_57 = arith.constant 1.000000e+00 : f32
    %237 = vector.broadcast %cst_57 : f32 to vector<8x64xf32>
    %238 = arith.addf %237, %236 : vector<8x64xf32>
    %239 = arith.divf %237, %238 : vector<8x64xf32>
    %240 = vector.extract_strided_slice %239 {offsets = [0, 0], sizes = [8, 32], strides = [1, 1]} : vector<8x64xf32> to vector<8x32xf32>
    %241 = vector.extract_strided_slice %239 {offsets = [0, 32], sizes = [8, 32], strides = [1, 1]} : vector<8x64xf32> to vector<8x32xf32>
    %242 = vector.extract_strided_slice %229 {offsets = [0, 64], sizes = [8, 32], strides = [1, 1]} : vector<8x128xf32> to vector<8x32xf32>
    %243 = vector.extract_strided_slice %232 {offsets = [0, 64], sizes = [8, 32], strides = [1, 1]} : vector<8x128xf32> to vector<8x32xf32>
    %244 = arith.mulf %240, %243 : vector<8x32xf32>
    %245 = arith.addf %242, %244 : vector<8x32xf32>
    %246 = math.tanh %245 : vector<8x32xf32>
    %247 = arith.subf %227, %246 : vector<8x32xf32>
    %248 = arith.mulf %241, %247 : vector<8x32xf32>
    %249 = arith.addf %246, %248 : vector<8x32xf32>
    %c8_58 = arith.constant 8 : index
    %c0_59 = arith.constant 0 : index
    %250 = vector.load %arg18[%c8_58, %c0_59] : memref<64x32xf32, #tpu.memory_space<vmem>>, vector<8x32xf32>
    tpu.vector_store %arg18[%c8_58, %c0_59], %249 {strides = array<i32>} : memref<64x32xf32, #tpu.memory_space<vmem>>, vector<8x32xf32>,
    %251 = vector.extract_strided_slice %25 {offsets = [16, 0], sizes = [8, 128], strides = [1, 1]} : vector<64x128xf32> to vector<8x128xf32>
    %cst_60 = arith.constant dense<0.000000e+00> : vector<8x128xf32>
    %252 = tpu.matmul %249, %205, %cst_60 {dimension_numbers = #tpu.dot_dimension_numbers<[1], [0], [0], [1], [0, 0, 1, 1], [], []>} : vector<8x32xf32>, vector<32x128xf32>, vector<8x128xf32> -> vector<8x128xf32>
    %253 = vector.broadcast %206 : vector<1x128xf32> to vector<8x128xf32>
    %254 = arith.addf %252, %253 : vector<8x128xf32>
    %255 = arith.addf %251, %254 : vector<8x128xf32>
    %256 = vector.extract_strided_slice %255 {offsets = [0, 0], sizes = [8, 64], strides = [1, 1]} : vector<8x128xf32> to vector<8x64xf32>
    %257 = arith.negf %256 : vector<8x64xf32>
    %258 = math.exp %257 : vector<8x64xf32>
    %cst_61 = arith.constant 1.000000e+00 : f32
    %259 = vector.broadcast %cst_61 : f32 to vector<8x64xf32>
    %260 = arith.addf %259, %258 : vector<8x64xf32>
    %261 = arith.divf %259, %260 : vector<8x64xf32>
    %262 = vector.extract_strided_slice %261 {offsets = [0, 0], sizes = [8, 32], strides = [1, 1]} : vector<8x64xf32> to vector<8x32xf32>
    %263 = vector.extract_strided_slice %261 {offsets = [0, 32], sizes = [8, 32], strides = [1, 1]} : vector<8x64xf32> to vector<8x32xf32>
    %264 = vector.extract_strided_slice %251 {offsets = [0, 64], sizes = [8, 32], strides = [1, 1]} : vector<8x128xf32> to vector<8x32xf32>
    %265 = vector.extract_strided_slice %254 {offsets = [0, 64], sizes = [8, 32], strides = [1, 1]} : vector<8x128xf32> to vector<8x32xf32>
    %266 = arith.mulf %262, %265 : vector<8x32xf32>
    %267 = arith.addf %264, %266 : vector<8x32xf32>
    %268 = math.tanh %267 : vector<8x32xf32>
    %269 = arith.subf %249, %268 : vector<8x32xf32>
    %270 = arith.mulf %263, %269 : vector<8x32xf32>
    %271 = arith.addf %268, %270 : vector<8x32xf32>
    %c16_62 = arith.constant 16 : index
    %c0_63 = arith.constant 0 : index
    %272 = vector.load %arg18[%c16_62, %c0_63] : memref<64x32xf32, #tpu.memory_space<vmem>>, vector<8x32xf32>
    tpu.vector_store %arg18[%c16_62, %c0_63], %271 {strides = array<i32>} : memref<64x32xf32, #tpu.memory_space<vmem>>, vector<8x32xf32>,
    %273 = vector.extract_strided_slice %25 {offsets = [24, 0], sizes = [8, 128], strides = [1, 1]} : vector<64x128xf32> to vector<8x128xf32>
    %cst_64 = arith.constant dense<0.000000e+00> : vector<8x128xf32>
    %274 = tpu.matmul %271, %205, %cst_64 {dimension_numbers = #tpu.dot_dimension_numbers<[1], [0], [0], [1], [0, 0, 1, 1], [], []>} : vector<8x32xf32>, vector<32x128xf32>, vector<8x128xf32> -> vector<8x128xf32>
    %275 = vector.broadcast %206 : vector<1x128xf32> to vector<8x128xf32>
    %276 = arith.addf %274, %275 : vector<8x128xf32>
    %277 = arith.addf %273, %276 : vector<8x128xf32>
    %278 = vector.extract_strided_slice %277 {offsets = [0, 0], sizes = [8, 64], strides = [1, 1]} : vector<8x128xf32> to vector<8x64xf32>
    %279 = arith.negf %278 : vector<8x64xf32>
    %280 = math.exp %279 : vector<8x64xf32>
    %cst_65 = arith.constant 1.000000e+00 : f32
    %281 = vector.broadcast %cst_65 : f32 to vector<8x64xf32>
    %282 = arith.addf %281, %280 : vector<8x64xf32>
    %283 = arith.divf %281, %282 : vector<8x64xf32>
    %284 = vector.extract_strided_slice %283 {offsets = [0, 0], sizes = [8, 32], strides = [1, 1]} : vector<8x64xf32> to vector<8x32xf32>
    %285 = vector.extract_strided_slice %283 {offsets = [0, 32], sizes = [8, 32], strides = [1, 1]} : vector<8x64xf32> to vector<8x32xf32>
    %286 = vector.extract_strided_slice %273 {offsets = [0, 64], sizes = [8, 32], strides = [1, 1]} : vector<8x128xf32> to vector<8x32xf32>
    %287 = vector.extract_strided_slice %276 {offsets = [0, 64], sizes = [8, 32], strides = [1, 1]} : vector<8x128xf32> to vector<8x32xf32>
    %288 = arith.mulf %284, %287 : vector<8x32xf32>
    %289 = arith.addf %286, %288 : vector<8x32xf32>
    %290 = math.tanh %289 : vector<8x32xf32>
    %291 = arith.subf %271, %290 : vector<8x32xf32>
    %292 = arith.mulf %285, %291 : vector<8x32xf32>
    %293 = arith.addf %290, %292 : vector<8x32xf32>
    %c24_66 = arith.constant 24 : index
    %c0_67 = arith.constant 0 : index
    %294 = vector.load %arg18[%c24_66, %c0_67] : memref<64x32xf32, #tpu.memory_space<vmem>>, vector<8x32xf32>
    tpu.vector_store %arg18[%c24_66, %c0_67], %293 {strides = array<i32>} : memref<64x32xf32, #tpu.memory_space<vmem>>, vector<8x32xf32>,
    %295 = vector.extract_strided_slice %25 {offsets = [32, 0], sizes = [8, 128], strides = [1, 1]} : vector<64x128xf32> to vector<8x128xf32>
    %cst_68 = arith.constant dense<0.000000e+00> : vector<8x128xf32>
    %296 = tpu.matmul %293, %205, %cst_68 {dimension_numbers = #tpu.dot_dimension_numbers<[1], [0], [0], [1], [0, 0, 1, 1], [], []>} : vector<8x32xf32>, vector<32x128xf32>, vector<8x128xf32> -> vector<8x128xf32>
    %297 = vector.broadcast %206 : vector<1x128xf32> to vector<8x128xf32>
    %298 = arith.addf %296, %297 : vector<8x128xf32>
    %299 = arith.addf %295, %298 : vector<8x128xf32>
    %300 = vector.extract_strided_slice %299 {offsets = [0, 0], sizes = [8, 64], strides = [1, 1]} : vector<8x128xf32> to vector<8x64xf32>
    %301 = arith.negf %300 : vector<8x64xf32>
    %302 = math.exp %301 : vector<8x64xf32>
    %cst_69 = arith.constant 1.000000e+00 : f32
    %303 = vector.broadcast %cst_69 : f32 to vector<8x64xf32>
    %304 = arith.addf %303, %302 : vector<8x64xf32>
    %305 = arith.divf %303, %304 : vector<8x64xf32>
    %306 = vector.extract_strided_slice %305 {offsets = [0, 0], sizes = [8, 32], strides = [1, 1]} : vector<8x64xf32> to vector<8x32xf32>
    %307 = vector.extract_strided_slice %305 {offsets = [0, 32], sizes = [8, 32], strides = [1, 1]} : vector<8x64xf32> to vector<8x32xf32>
    %308 = vector.extract_strided_slice %295 {offsets = [0, 64], sizes = [8, 32], strides = [1, 1]} : vector<8x128xf32> to vector<8x32xf32>
    %309 = vector.extract_strided_slice %298 {offsets = [0, 64], sizes = [8, 32], strides = [1, 1]} : vector<8x128xf32> to vector<8x32xf32>
    %310 = arith.mulf %306, %309 : vector<8x32xf32>
    %311 = arith.addf %308, %310 : vector<8x32xf32>
    %312 = math.tanh %311 : vector<8x32xf32>
    %313 = arith.subf %293, %312 : vector<8x32xf32>
    %314 = arith.mulf %307, %313 : vector<8x32xf32>
    %315 = arith.addf %312, %314 : vector<8x32xf32>
    %c32_70 = arith.constant 32 : index
    %c0_71 = arith.constant 0 : index
    %316 = vector.load %arg18[%c32_70, %c0_71] : memref<64x32xf32, #tpu.memory_space<vmem>>, vector<8x32xf32>
    tpu.vector_store %arg18[%c32_70, %c0_71], %315 {strides = array<i32>} : memref<64x32xf32, #tpu.memory_space<vmem>>, vector<8x32xf32>,
    %317 = vector.extract_strided_slice %25 {offsets = [40, 0], sizes = [8, 128], strides = [1, 1]} : vector<64x128xf32> to vector<8x128xf32>
    %cst_72 = arith.constant dense<0.000000e+00> : vector<8x128xf32>
    %318 = tpu.matmul %315, %205, %cst_72 {dimension_numbers = #tpu.dot_dimension_numbers<[1], [0], [0], [1], [0, 0, 1, 1], [], []>} : vector<8x32xf32>, vector<32x128xf32>, vector<8x128xf32> -> vector<8x128xf32>
    %319 = vector.broadcast %206 : vector<1x128xf32> to vector<8x128xf32>
    %320 = arith.addf %318, %319 : vector<8x128xf32>
    %321 = arith.addf %317, %320 : vector<8x128xf32>
    %322 = vector.extract_strided_slice %321 {offsets = [0, 0], sizes = [8, 64], strides = [1, 1]} : vector<8x128xf32> to vector<8x64xf32>
    %323 = arith.negf %322 : vector<8x64xf32>
    %324 = math.exp %323 : vector<8x64xf32>
    %cst_73 = arith.constant 1.000000e+00 : f32
    %325 = vector.broadcast %cst_73 : f32 to vector<8x64xf32>
    %326 = arith.addf %325, %324 : vector<8x64xf32>
    %327 = arith.divf %325, %326 : vector<8x64xf32>
    %328 = vector.extract_strided_slice %327 {offsets = [0, 0], sizes = [8, 32], strides = [1, 1]} : vector<8x64xf32> to vector<8x32xf32>
    %329 = vector.extract_strided_slice %327 {offsets = [0, 32], sizes = [8, 32], strides = [1, 1]} : vector<8x64xf32> to vector<8x32xf32>
    %330 = vector.extract_strided_slice %317 {offsets = [0, 64], sizes = [8, 32], strides = [1, 1]} : vector<8x128xf32> to vector<8x32xf32>
    %331 = vector.extract_strided_slice %320 {offsets = [0, 64], sizes = [8, 32], strides = [1, 1]} : vector<8x128xf32> to vector<8x32xf32>
    %332 = arith.mulf %328, %331 : vector<8x32xf32>
    %333 = arith.addf %330, %332 : vector<8x32xf32>
    %334 = math.tanh %333 : vector<8x32xf32>
    %335 = arith.subf %315, %334 : vector<8x32xf32>
    %336 = arith.mulf %329, %335 : vector<8x32xf32>
    %337 = arith.addf %334, %336 : vector<8x32xf32>
    %c40_74 = arith.constant 40 : index
    %c0_75 = arith.constant 0 : index
    %338 = vector.load %arg18[%c40_74, %c0_75] : memref<64x32xf32, #tpu.memory_space<vmem>>, vector<8x32xf32>
    tpu.vector_store %arg18[%c40_74, %c0_75], %337 {strides = array<i32>} : memref<64x32xf32, #tpu.memory_space<vmem>>, vector<8x32xf32>,
    %339 = vector.extract_strided_slice %25 {offsets = [48, 0], sizes = [8, 128], strides = [1, 1]} : vector<64x128xf32> to vector<8x128xf32>
    %cst_76 = arith.constant dense<0.000000e+00> : vector<8x128xf32>
    %340 = tpu.matmul %337, %205, %cst_76 {dimension_numbers = #tpu.dot_dimension_numbers<[1], [0], [0], [1], [0, 0, 1, 1], [], []>} : vector<8x32xf32>, vector<32x128xf32>, vector<8x128xf32> -> vector<8x128xf32>
    %341 = vector.broadcast %206 : vector<1x128xf32> to vector<8x128xf32>
    %342 = arith.addf %340, %341 : vector<8x128xf32>
    %343 = arith.addf %339, %342 : vector<8x128xf32>
    %344 = vector.extract_strided_slice %343 {offsets = [0, 0], sizes = [8, 64], strides = [1, 1]} : vector<8x128xf32> to vector<8x64xf32>
    %345 = arith.negf %344 : vector<8x64xf32>
    %346 = math.exp %345 : vector<8x64xf32>
    %cst_77 = arith.constant 1.000000e+00 : f32
    %347 = vector.broadcast %cst_77 : f32 to vector<8x64xf32>
    %348 = arith.addf %347, %346 : vector<8x64xf32>
    %349 = arith.divf %347, %348 : vector<8x64xf32>
    %350 = vector.extract_strided_slice %349 {offsets = [0, 0], sizes = [8, 32], strides = [1, 1]} : vector<8x64xf32> to vector<8x32xf32>
    %351 = vector.extract_strided_slice %349 {offsets = [0, 32], sizes = [8, 32], strides = [1, 1]} : vector<8x64xf32> to vector<8x32xf32>
    %352 = vector.extract_strided_slice %339 {offsets = [0, 64], sizes = [8, 32], strides = [1, 1]} : vector<8x128xf32> to vector<8x32xf32>
    %353 = vector.extract_strided_slice %342 {offsets = [0, 64], sizes = [8, 32], strides = [1, 1]} : vector<8x128xf32> to vector<8x32xf32>
    %354 = arith.mulf %350, %353 : vector<8x32xf32>
    %355 = arith.addf %352, %354 : vector<8x32xf32>
    %356 = math.tanh %355 : vector<8x32xf32>
    %357 = arith.subf %337, %356 : vector<8x32xf32>
    %358 = arith.mulf %351, %357 : vector<8x32xf32>
    %359 = arith.addf %356, %358 : vector<8x32xf32>
    %c48_78 = arith.constant 48 : index
    %c0_79 = arith.constant 0 : index
    %360 = vector.load %arg18[%c48_78, %c0_79] : memref<64x32xf32, #tpu.memory_space<vmem>>, vector<8x32xf32>
    tpu.vector_store %arg18[%c48_78, %c0_79], %359 {strides = array<i32>} : memref<64x32xf32, #tpu.memory_space<vmem>>, vector<8x32xf32>,
    %361 = vector.extract_strided_slice %25 {offsets = [56, 0], sizes = [8, 128], strides = [1, 1]} : vector<64x128xf32> to vector<8x128xf32>
    %cst_80 = arith.constant dense<0.000000e+00> : vector<8x128xf32>
    %362 = tpu.matmul %359, %205, %cst_80 {dimension_numbers = #tpu.dot_dimension_numbers<[1], [0], [0], [1], [0, 0, 1, 1], [], []>} : vector<8x32xf32>, vector<32x128xf32>, vector<8x128xf32> -> vector<8x128xf32>
    %363 = vector.broadcast %206 : vector<1x128xf32> to vector<8x128xf32>
    %364 = arith.addf %362, %363 : vector<8x128xf32>
    %365 = arith.addf %361, %364 : vector<8x128xf32>
    %366 = vector.extract_strided_slice %365 {offsets = [0, 0], sizes = [8, 64], strides = [1, 1]} : vector<8x128xf32> to vector<8x64xf32>
    %367 = arith.negf %366 : vector<8x64xf32>
    %368 = math.exp %367 : vector<8x64xf32>
    %cst_81 = arith.constant 1.000000e+00 : f32
    %369 = vector.broadcast %cst_81 : f32 to vector<8x64xf32>
    %370 = arith.addf %369, %368 : vector<8x64xf32>
    %371 = arith.divf %369, %370 : vector<8x64xf32>
    %372 = vector.extract_strided_slice %371 {offsets = [0, 0], sizes = [8, 32], strides = [1, 1]} : vector<8x64xf32> to vector<8x32xf32>
    %373 = vector.extract_strided_slice %371 {offsets = [0, 32], sizes = [8, 32], strides = [1, 1]} : vector<8x64xf32> to vector<8x32xf32>
    %374 = vector.extract_strided_slice %361 {offsets = [0, 64], sizes = [8, 32], strides = [1, 1]} : vector<8x128xf32> to vector<8x32xf32>
    %375 = vector.extract_strided_slice %364 {offsets = [0, 64], sizes = [8, 32], strides = [1, 1]} : vector<8x128xf32> to vector<8x32xf32>
    %376 = arith.mulf %372, %375 : vector<8x32xf32>
    %377 = arith.addf %374, %376 : vector<8x32xf32>
    %378 = math.tanh %377 : vector<8x32xf32>
    %379 = arith.subf %359, %378 : vector<8x32xf32>
    %380 = arith.mulf %373, %379 : vector<8x32xf32>
    %381 = arith.addf %378, %380 : vector<8x32xf32>
    %c56_82 = arith.constant 56 : index
    %c0_83 = arith.constant 0 : index
    %382 = vector.load %arg18[%c56_82, %c0_83] : memref<64x32xf32, #tpu.memory_space<vmem>>, vector<8x32xf32>
    tpu.vector_store %arg18[%c56_82, %c0_83], %381 {strides = array<i32>} : memref<64x32xf32, #tpu.memory_space<vmem>>, vector<8x32xf32>,
    %c0_84 = arith.constant 0 : index
    %c0_85 = arith.constant 0 : index
    %383 = vector.load %arg17[%c0_84, %c0_85] : memref<64x32xf32, #tpu.memory_space<vmem>>, vector<64x32xf32>
    %c0_86 = arith.constant 0 : index
    %c0_87 = arith.constant 0 : index
    %384 = vector.load %arg18[%c0_86, %c0_87] : memref<64x32xf32, #tpu.memory_space<vmem>>, vector<64x32xf32>
    %cst_88 = arith.constant dense<0.000000e+00> : vector<64x64xf32>
    %385 = tpu.matmul %384, %383, %cst_88 {dimension_numbers = #tpu.dot_dimension_numbers<[1], [1], [0], [0], [0, 0, 1, 0], [], []>} : vector<64x32xf32>, vector<64x32xf32>, vector<64x64xf32> -> vector<64x64xf32>
    %386 = tpu.iota {dimensions = array<i32: 0>} : vector<64x64xi32>
    %387 = tpu.iota {dimensions = array<i32: 1>} : vector<64x64xi32>
    %c7_i32 = arith.constant 7 : i32
    %388 = vector.broadcast %c7_i32 : i32 to vector<64x64xi32>
    %389 = arith.andi %386, %388 : vector<64x64xi32>
    %c7_i32_89 = arith.constant 7 : i32
    %390 = vector.broadcast %c7_i32_89 : i32 to vector<64x64xi32>
    %391 = arith.andi %387, %390 : vector<64x64xi32>
    %392 = arith.cmpi eq, %389, %391 : vector<64x64xi32>
    %cst_90 = arith.constant -1.000000e+30 : f32
    %393 = vector.broadcast %cst_90 : f32 to vector<64x64xf32>
    %394 = arith.select %392, %385, %393 : vector<64x64xi1>, vector<64x64xf32>
    %cst_91 = arith.constant dense<0xFF800000> : vector<64xf32>
    %395 = vector.multi_reduction <maximumf>, %394, %cst_91 [1] : vector<64x64xf32> to vector<64xf32>
    %396 = vector.shape_cast %395 : vector<64xf32> to vector<64x1xf32>
    %397 = vector.broadcast %396 : vector<64x1xf32> to vector<64x64xf32>
    %398 = arith.subf %394, %397 : vector<64x64xf32>
    %399 = math.exp %398 : vector<64x64xf32>
    %cst_92 = arith.constant dense<0.000000e+00> : vector<64xf32>
    %400 = vector.multi_reduction <add>, %399, %cst_92 [1] : vector<64x64xf32> to vector<64xf32>
    %401 = vector.shape_cast %400 : vector<64xf32> to vector<64x1xf32>
    %402 = tpu.reciprocal %401 {approx = true} : vector<64x1xf32> -> vector<64x1xf32>
    %403 = vector.broadcast %402 : vector<64x1xf32> to vector<64x64xf32>
    %404 = arith.mulf %399, %403 : vector<64x64xf32>
    %cst_93 = arith.constant dense<0.000000e+00> : vector<64x32xf32>
    %405 = tpu.matmul %404, %383, %cst_93 {dimension_numbers = #tpu.dot_dimension_numbers<[1], [0], [0], [1], [0, 0, 1, 1], [], []>} : vector<64x64xf32>, vector<64x32xf32>, vector<64x32xf32> -> vector<64x32xf32>
    %c0_94 = arith.constant 0 : index
    %c0_95 = arith.constant 0 : index
    %406 = vector.load %arg12[%c0_94, %c0_95] : memref<32x32xf32, #tpu.memory_space<vmem>>, vector<32x32xf32>
    %cst_96 = arith.constant dense<0.000000e+00> : vector<64x32xf32>
    %407 = tpu.matmul %405, %406, %cst_96 {dimension_numbers = #tpu.dot_dimension_numbers<[1], [0], [0], [1], [0, 0, 1, 1], [], []>} : vector<64x32xf32>, vector<32x32xf32>, vector<64x32xf32> -> vector<64x32xf32>
    %c0_97 = arith.constant 0 : index
    %c0_98 = arith.constant 0 : index
    %408 = vector.load %arg13[%c0_97, %c0_98] : memref<32x32xf32, #tpu.memory_space<vmem>>, vector<32x32xf32>
    %cst_99 = arith.constant dense<0.000000e+00> : vector<64x32xf32>
    %409 = tpu.matmul %384, %408, %cst_99 {dimension_numbers = #tpu.dot_dimension_numbers<[1], [0], [0], [1], [0, 0, 1, 1], [], []>} : vector<64x32xf32>, vector<32x32xf32>, vector<64x32xf32> -> vector<64x32xf32>
    %410 = arith.addf %407, %409 : vector<64x32xf32>
    %411 = math.tanh %410 : vector<64x32xf32>
    %c0_100 = arith.constant 0 : index
    %c0_101 = arith.constant 0 : index
    %412 = vector.load %arg14[%c0_100, %c0_101] : memref<32x128xf32, #tpu.memory_space<vmem>>, vector<32x128xf32>
    %cst_102 = arith.constant dense<0.000000e+00> : vector<64x128xf32>
    %413 = tpu.matmul %411, %412, %cst_102 {dimension_numbers = #tpu.dot_dimension_numbers<[1], [0], [0], [1], [0, 0, 1, 1], [], []>} : vector<64x32xf32>, vector<32x128xf32>, vector<64x128xf32> -> vector<64x128xf32>
    %c0_103 = arith.constant 0 : index
    %c0_104 = arith.constant 0 : index
    %414 = vector.load %arg15[%c0_103, %c0_104] : memref<1x128xf32, #tpu.memory_space<vmem>>, vector<1x128xf32>
    %415 = vector.broadcast %414 : vector<1x128xf32> to vector<64x128xf32>
    %416 = arith.addf %413, %415 : vector<64x128xf32>
    %cst_105 = arith.constant dense<0xFF800000> : vector<64xf32>
    %417 = vector.multi_reduction <maximumf>, %416, %cst_105 [1] : vector<64x128xf32> to vector<64xf32>
    %418 = vector.shape_cast %417 : vector<64xf32> to vector<64x1xf32>
    %419 = vector.broadcast %418 : vector<64x1xf32> to vector<64x128xf32>
    %420 = arith.subf %416, %419 : vector<64x128xf32>
    %421 = math.exp %420 : vector<64x128xf32>
    %cst_106 = arith.constant dense<0.000000e+00> : vector<64xf32>
    %422 = vector.multi_reduction <add>, %421, %cst_106 [1] : vector<64x128xf32> to vector<64xf32>
    %423 = vector.shape_cast %422 : vector<64xf32> to vector<64x1xf32>
    %424 = math.log %423 : vector<64x1xf32>
    %425 = vector.broadcast %424 : vector<64x1xf32> to vector<64x128xf32>
    %426 = arith.subf %420, %425 : vector<64x128xf32>
    %c0_107 = arith.constant 0 : index
    %c0_108 = arith.constant 0 : index
    %427 = vector.load %arg16[%c0_107, %c0_108] : memref<64x128xf32, #tpu.memory_space<vmem>>, vector<64x128xf32>
    tpu.vector_store %arg16[%c0_107, %c0_108], %426 {strides = array<i32>} : memref<64x128xf32, #tpu.memory_space<vmem>>, vector<64x128xf32>,
    return
  }
}

</mosaic_0001>

<llo_original>
// kernel: tagger_forward.1
$region0: #{tagger_forward.1}
  #allocation0 [shape = 'u32[]', space=smem, size = 0x4, offset = 0x4, fixed_abs, tag = 'smem constant byte address 0x4 - core index']
  #allocation1 [shape = 'u32[144,128]{1,0:T(1,128)}', space=vmem, size = 0x12000, scoped, tag = 'internal scratch']
  #allocation2 [shape = 'f32[64,32]{1,0:T(8,128)}', space=vmem, size = 0x8000, scoped, tag = 'scratch operand']
  #allocation3 [shape = 'f32[64,32]{1,0:T(8,128)}', space=vmem, size = 0x8000, scoped, tag = 'scratch operand']
  %s0 = inlined_call_operand.vmem [shape: s32[64,1], index: 0, kind: input, shape index: {}, may-alias: {0,1}]
  %s1 = inlined_call_operand.vmem [shape: s32[64,1], index: 1, kind: input, shape index: {}, may-alias: {0,1}]
  %s2 = inlined_call_operand.vmem [shape: f32[64,32], index: 2, kind: input, shape index: {}]
  %s3 = inlined_call_operand.vmem [shape: f32[64,32], index: 3, kind: input, shape index: {}]
  %s4 = inlined_call_operand.vmem [shape: f32[32,128], index: 4, kind: input, shape index: {}]
  %s5 = inlined_call_operand.vmem [shape: f32[32,128], index: 5, kind: input, shape index: {}]
  %s6 = inlined_call_operand.vmem [shape: f32[1,128], index: 6, kind: input, shape index: {}]
  %s7 = inlined_call_operand.vmem [shape: f32[1,128], index: 7, kind: input, shape index: {}]
  %s8 = inlined_call_operand.vmem [shape: f32[32,128], index: 8, kind: input, shape index: {}]
  %s9 = inlined_call_operand.vmem [shape: f32[32,128], index: 9, kind: input, shape index: {}]
  %s10 = inlined_call_operand.hbm [shape: f32[1,128], index: 10, kind: input, shape index: {}]
  %s11 = inlined_call_operand.hbm [shape: f32[1,128], index: 11, kind: input, shape index: {}]
  %s12 = inlined_call_operand.vmem [shape: f32[32,32], index: 12, kind: input, shape index: {}]
  %s13 = inlined_call_operand.vmem [shape: f32[32,32], index: 13, kind: input, shape index: {}]
  %s14 = inlined_call_operand.vmem [shape: f32[32,128], index: 14, kind: input, shape index: {}]
  %s15 = inlined_call_operand.hbm [shape: f32[1,128], index: 15, kind: input, shape index: {}]
  %s16 = inlined_call_operand.vmem [shape: f32[64,128], index: 16, kind: output, shape index: {}]
  %s17 = sld [smem:[#allocation0]]
  $region86: #{tagger_forward.1} parent=0
    _
  %s19 = ssub.s32 1, %s17
  %s20 = scalar_select 0, %s19, %s17
  $region1: #{tagger_forward.1} parent=0
    #allocation4 [shape = 'u8[512]{0}', space=vmem, size = 0x400, scoped, tag = 'input window, operand 10, single buffered']
    #allocation5 [shape = 's32[1]{0}', space=sflag, size = 0x4, scoped, tag = 'scoped memory for tagger_forward.1']
    #allocation6 [shape = 'u8[512]{0}', space=vmem, size = 0x400, scoped, tag = 'input window, operand 11, single buffered']
    #allocation7 [shape = 's32[1]{0}', space=sflag, size = 0x4, scoped, tag = 'scoped memory for tagger_forward.1']
    #allocation8 [shape = 'u8[512]{0}', space=vmem, size = 0x400, scoped, tag = 'input window, operand 15, single buffered']
    %21 = vsyncpa [#allocation5], 0
    %22 = vsyncpa [#allocation7], 0
    // Predicated region
    $region2: #{tagger_forward.1} parent=1 // pred_check
      _
    $region3: #{tagger_forward.1} parent=1 // pred_check_branch
      %24 = sbr.rel (0) target = $region5
    $region4: #{tagger_forward.1} parent=1 // pred_region
      _
    $region5: #{tagger_forward.1} parent=1 // pred_fallthru
      _
    // Predicated region
    $region6: #{tagger_forward.1} parent=1 // pred_check
      _
    $region7: #{tagger_forward.1} parent=1 // pred_check_branch
      %26 = sbr.rel (0) target = $region9
    $region8: #{tagger_forward.1} parent=1 // pred_region
      _
    $region9: #{tagger_forward.1} parent=1 // pred_fallthru
      _
    // Predicated region
    $region10: #{tagger_forward.1} parent=1 // pred_check
      _
    $region11: #{tagger_forward.1} parent=1 // pred_check_branch
      %28 = sbr.rel (0) target = $region13
    $region12: #{tagger_forward.1} parent=1 // pred_region
      _
    $region13: #{tagger_forward.1} parent=1 // pred_fallthru
      _
    // Predicated region
    $region14: #{tagger_forward.1} parent=1 // pred_check
      _
    $region15: #{tagger_forward.1} parent=1 // pred_check_branch
      %30 = sbr.rel (0) target = $region17
    $region16: #{tagger_forward.1} parent=1 // pred_region
      _
    $region17: #{tagger_forward.1} parent=1 // pred_fallthru
      _
    // Predicated region
    $region18: #{tagger_forward.1} parent=1 // pred_check
      _
    $region19: #{tagger_forward.1} parent=1 // pred_check_branch
      %32 = sbr.rel (0) target = $region21
    $region20: #{tagger_forward.1} parent=1 // pred_region
      _
    $region21: #{tagger_forward.1} parent=1 // pred_fallthru
      _
    // Predicated region
    $region22: #{tagger_forward.1} parent=1 // pred_check
      _
    $region23: #{tagger_forward.1} parent=1 // pred_check_branch
      %34 = sbr.rel (0) target = $region25
    $region24: #{tagger_forward.1} parent=1 // pred_region
      _
    $region25: #{tagger_forward.1} parent=1 // pred_fallthru
      _
    // Predicated region
    $region26: #{tagger_forward.1} parent=1 // pred_check
      _
    $region27: #{tagger_forward.1} parent=1 // pred_check_branch
      %36 = sbr.rel (0) target = $region29
    $region28: #{tagger_forward.1} parent=1 // pred_region
      _
    $region29: #{tagger_forward.1} parent=1 // pred_fallthru
      _
    // Predicated region
    $region30: #{tagger_forward.1} parent=1 // pred_check
      _
    $region31: #{tagger_forward.1} parent=1 // pred_check_branch
      %38 = sbr.rel (0) target = $region33
    $region32: #{tagger_forward.1} parent=1 // pred_region
      _
    $region33: #{tagger_forward.1} parent=1 // pred_fallthru
      _
    // Predicated region
    $region34: #{tagger_forward.1} parent=1 // pred_check
      _
    $region35: #{tagger_forward.1} parent=1 // pred_check_branch
      %40 = sbr.rel (0) target = $region37
    $region36: #{tagger_forward.1} parent=1 // pred_region
      _
    $region37: #{tagger_forward.1} parent=1 // pred_fallthru
      _
    // Predicated region
    $region38: #{tagger_forward.1} parent=1 // pred_check
      _
    $region39: #{tagger_forward.1} parent=1 // pred_check_branch
      %42 = sbr.rel (0) target = $region41
    $region40: #{tagger_forward.1} parent=1 // pred_region
      _
    $region41: #{tagger_forward.1} parent=1 // pred_fallthru
      _
    // Predicated region
    $region42: #{tagger_forward.1} parent=1 // pred_check
      _
    $region43: #{tagger_forward.1} parent=1 // pred_check_branch
      %44 = sbr.rel (0) target = $region45
    $region44: #{tagger_forward.1} parent=1 // pred_region
      %s46 = ssub.s32 16, 16
      %47 = vsyncadd [#allocation5], %s46
      %s49 = sshll.u32 [#allocation4], 4
      %s50 = int_to_ptr.vmem [resolvable:$true] %s49
      %52 = dma.hbm_to_vmem [thread:$0]  %s10, 16, %s50, [#allocation5]
    $region45: #{tagger_forward.1} parent=1 // pred_fallthru
      _
    // Predicated region
    $region46: #{tagger_forward.1} parent=1 // pred_check
      _
    $region47: #{tagger_forward.1} parent=1 // pred_check_branch
      %54 = sbr.rel (0) target = $region49
    $region48: #{tagger_forward.1} parent=1 // pred_region
      %s56 = ssub.s32 16, 16
      %57 = vsyncadd [#allocation7], %s56
      %s59 = sshll.u32 [#allocation6], 4
      %s60 = int_to_ptr.vmem [resolvable:$true] %s59
      %62 = dma.hbm_to_vmem [thread:$0]  %s11, 16, %s60, [#allocation7]
    $region49: #{tagger_forward.1} parent=1 // pred_fallthru
      _
    // Predicated region
    $region50: #{tagger_forward.1} parent=1 // pred_check
      _
    $region51: #{tagger_forward.1} parent=1 // pred_check_branch
      %64 = sbr.rel (0) target = $region53
    $region52: #{tagger_forward.1} parent=1 // pred_region
      _
    $region53: #{tagger_forward.1} parent=1 // pred_fallthru
      _
    // Predicated region
    $region54: #{tagger_forward.1} parent=1 // pred_check
      _
    $region55: #{tagger_forward.1} parent=1 // pred_check_branch
      %66 = sbr.rel (0) target = $region57
    $region56: #{tagger_forward.1} parent=1 // pred_region
      _
    $region57: #{tagger_forward.1} parent=1 // pred_fallthru
      _
    // Predicated region
    $region58: #{tagger_forward.1} parent=1 // pred_check
      _
    $region59: #{tagger_forward.1} parent=1 // pred_check_branch
      %68 = sbr.rel (0) target = $region61
    $region60: #{tagger_forward.1} parent=1 // pred_region
      _
    $region61: #{tagger_forward.1} parent=1 // pred_fallthru
      _
    // Predicated region
    $region62: #{tagger_forward.1} parent=1 // pred_check
      _
    $region63: #{tagger_forward.1} parent=1 // pred_check_branch
      %70 = sbr.rel (0) target = $region65
    $region64: #{tagger_forward.1} parent=1 // pred_region
      %s72 = ssub.s32 16, 16
      %73 = vsyncadd [#allocation7], %s72
      %s75 = sshll.u32 [#allocation8], 4
      %s76 = int_to_ptr.vmem [resolvable:$true] %s75
      %78 = dma.hbm_to_vmem [thread:$0]  %s15, 16, %s76, [#allocation7]
    $region65: #{tagger_forward.1} parent=1 // pred_fallthru
      _
    // Predicated region
    $region66: #{tagger_forward.1} parent=1 // pred_check
      _
    $region67: #{tagger_forward.1} parent=1 // pred_check_branch
      %80 = sbr.rel (0) target = $region69
    $region68: #{tagger_forward.1} parent=1 // pred_region
      %81 = dma.done [#allocation5], 16
    $region69: #{tagger_forward.1} parent=1 // pred_fallthru
      _
    // Predicated region
    $region70: #{tagger_forward.1} parent=1 // pred_check
      _
    $region71: #{tagger_forward.1} parent=1 // pred_check_branch
      %83 = sbr.rel (0) target = $region73
    $region72: #{tagger_forward.1} parent=1 // pred_region
      %84 = dma.done [#allocation7], 16
    $region73: #{tagger_forward.1} parent=1 // pred_fallthru
      _
    // Predicated region
    $region74: #{tagger_forward.1} parent=1 // pred_check
      _
    $region75: #{tagger_forward.1} parent=1 // pred_check_branch
      %86 = sbr.rel (0) target = $region77
    $region76: #{tagger_forward.1} parent=1 // pred_region
      %87 = dma.done [#allocation7], 16
    $region77: #{tagger_forward.1} parent=1 // pred_fallthru
      _
    %v88 = vld [vmem:[%s0] sm:$0xff]
    %v89 = vld [vmem:[%s0 + $0x8] sm:$0xff]
    %v90 = vld [vmem:[%s0 + $0x10] sm:$0xff]
    %v91 = vld [vmem:[%s0 + $0x18] sm:$0xff]
    %v92 = vld [vmem:[%s0 + $0x20] sm:$0xff]
    %v93 = vld [vmem:[%s0 + $0x28] sm:$0xff]
    %v94 = vld [vmem:[%s0 + $0x30] sm:$0xff]
    %v95 = vld [vmem:[%s0 + $0x38] sm:$0xff]
    %v96 = vlaneseq
    %v97 = vand.u32 %v96, 127
    %98 = vset.pattern.permute.xlu0 0
    %99 = vperm.xlu0 %98, %v88
    %v100 = vpop.permute.xlu0 %99
    %101 = vset.pattern.permute.xlu0 0
    %102 = vperm.xlu0 %101, %v89
    %v103 = vpop.permute.xlu0 %102
    %104 = vset.pattern.permute.xlu0 0
    %105 = vperm.xlu0 %104, %v90
    %v106 = vpop.permute.xlu0 %105
    %107 = vset.pattern.permute.xlu0 0
    %108 = vperm.xlu0 %107, %v91
    %v109 = vpop.permute.xlu0 %108
    %110 = vset.pattern.permute.xlu0 0
    %111 = vperm.xlu0 %110, %v92
    %v112 = vpop.permute.xlu0 %111
    %113 = vset.pattern.permute.xlu0 0
    %114 = vperm.xlu0 %113, %v93
    %v115 = vpop.permute.xlu0 %114
    %116 = vset.pattern.permute.xlu0 0
    %117 = vperm.xlu0 %116, %v94
    %v118 = vpop.permute.xlu0 %117
    %119 = vset.pattern.permute.xlu0 0
    %120 = vperm.xlu0 %119, %v95
    %v121 = vpop.permute.xlu0 %120
    %vm122 = vcmp.eq.s32.totalorder %v100, %v97
    %vm123 = vcmp.eq.s32.totalorder %v103, %v97
    %vm124 = vcmp.eq.s32.totalorder %v106, %v97
    %vm125 = vcmp.eq.s32.totalorder %v109, %v97
    %vm126 = vcmp.eq.s32.totalorder %v112, %v97
    %vm127 = vcmp.eq.s32.totalorder %v115, %v97
    %vm128 = vcmp.eq.s32.totalorder %v118, %v97
    %vm129 = vcmp.eq.s32.totalorder %v121, %v97
    %v130 = vsel %vm122, 1, 0
    %v131 = vsel %vm123, 1, 0
    %v132 = vsel %vm124, 1, 0
    %v133 = vsel %vm125, 1, 0
    %v134 = vsel %vm126, 1, 0
    %v135 = vsel %vm127, 1, 0
    %v136 = vsel %vm128, 1, 0
    %v137 = vsel %vm129, 1, 0
    %v138 = vcvt.s32.f32 %v130
    %v139 = vcvt.s32.f32 %v131
    %v140 = vcvt.s32.f32 %v132
    %v141 = vcvt.s32.f32 %v133
    %v142 = vcvt.s32.f32 %v134
    %v143 = vcvt.s32.f32 %v135
    %v144 = vcvt.s32.f32 %v136
    %v145 = vcvt.s32.f32 %v137
    %v146 = vld [vmem:[%s2] sm:$0xff]
    %v147 = vld [vmem:[%s2 + $0x8] sm:$0xff]
    %v148 = vld [vmem:[%s2 + $0x10] sm:$0xff]
    %v149 = vld [vmem:[%s2 + $0x18] sm:$0xff]
    %v150 = vld [vmem:[%s2 + $0x20] sm:$0xff]
    %v151 = vld [vmem:[%s2 + $0x28] sm:$0xff]
    %v152 = vld [vmem:[%s2 + $0x30] sm:$0xff]
    %v153 = vld [vmem:[%s2 + $0x38] sm:$0xff]
    %vm154 = vcmask 523264
    %v156 = vsel %vm154, %v138, 0
    %v159 = vsel %vm154, %v139, 0
    %v162 = vsel %vm154, %v140, 0
    %v165 = vsel %vm154, %v141, 0
    %v168 = vsel %vm154, %v142, 0
    %v171 = vsel %vm154, %v143, 0
    %v174 = vsel %vm154, %v144, 0
    %v177 = vsel %vm154, %v145, 0
    %179 = vmatprep.subr.mxu0 0.0
    %180 = vmatpush1.msra.mxu0 %v146
    %181 = vmatprep.subr.mxu0 0.0
    %182 = vmatpush1.msra.mxu0 %v147
    %183 = vmatprep.subr.mxu0 0.0
    %184 = vmatpush1.msra.mxu0 %v148
    %185 = vmatprep.subr.mxu0 0.0
    %186 = vmatpush1.msra.mxu0 %v149
    %187 = vmatprep.subr.mxu0 0.0
    %188 = vmatpush1.msra.mxu0 %v150
    %189 = vmatprep.subr.mxu0 0.0
    %190 = vmatpush1.msra.mxu0 %v151
    %191 = vmatprep.subr.mxu0 0.0
    %192 = vmatpush1.msra.mxu0 %v152
    %193 = vmatprep.subr.mxu0 0.0
    %194 = vmatpush1.msra.mxu0 %v153
    %195 = vmatprep.subr.mxu0 0.0
    %196 = vmatpush1.msra.mxu0 0.0
    %197 = vmatprep.subr.mxu0 0.0
    %198 = vmatpush1.msra.mxu0 0.0
    %199 = vmatprep.subr.mxu0 0.0
    %200 = vmatpush1.msra.mxu0 0.0
    %201 = vmatprep.subr.mxu0 0.0
    %202 = vmatpush1.msra.mxu0 0.0
    %203 = vmatprep.subr.mxu0 0.0
    %204 = vmatpush1.msra.mxu0 0.0
    %205 = vmatprep.subr.mxu0 0.0
    %206 = vmatpush1.msra.mxu0 0.0
    %207 = vmatprep.subr.mxu0 0.0
    %208 = vmatpush1.msra.mxu0 0.0
    %209 = vmatprep.subr.mxu0 0.0
    %210 = vmatpush1.msra.mxu0 0.0
    %211 = vmatprep.subr.mxu0 0.0
    %212 = vmatpush1.msra.mxu0 0.0
    %213 = vmatprep.subr.mxu0 0.0
    %214 = vmatpush1.msra.mxu0 0.0
    %215 = vmatprep.subr.mxu0 0.0
    %216 = vmatpush1.msra.mxu0 0.0
    %217 = vmatprep.subr.mxu0 0.0
    %218 = vmatpush1.msra.mxu0 0.0
    %219 = vmatprep.subr.mxu0 0.0
    %220 = vmatpush1.msra.mxu0 0.0
    %221 = vmatprep.subr.mxu0 0.0
    %222 = vmatpush1.msra.mxu0 0.0
    %223 = vmatprep.subr.mxu0 0.0
    %224 = vmatpush1.msra.mxu0 0.0
    %225 = vmatprep.subr.mxu0 0.0
    %226 = vmatpush1.msra.mxu0 0.0
    %227 = vmatprep.subr.mxu0 0.0
    %228 = vmatpush1.msra.mxu0 0.0
    %229 = vmatprep.subr.mxu0 0.0
    %230 = vmatpush1.msra.mxu0 0.0
    %231 = vmatprep.subr.mxu0 0.0
    %232 = vmatpush1.msra.mxu0 0.0
    %233 = vmatprep.subr.mxu0 0.0
    %234 = vmatpush1.msra.mxu0 0.0
    %235 = vmatprep.subr.mxu0 0.0
    %236 = vmatpush1.msra.mxu0 0.0
    %237 = vmatprep.subr.mxu0 0.0
    %238 = vmatpush1.msra.mxu0 0.0
    %239 = vmatprep.subr.mxu0 0.0
    %240 = vmatpush1.msra.mxu0 0.0
    %241 = vmatprep.subr.mxu0 0.0
    %242 = vmatpush1.msra.mxu0 0.0
    %243 = vmatprep.mubr.f32.mxu0 0.0
    %244 = vmatmul.mubr.f32.gmra.mrb[0].mxu0 %v156
    %v245 = vpop.f32.mrb[0].mxu0
    %v246 = vadd.f32 0.0, %v245
    %v247 = vpop.f32.mrb[0].mxu0
    %248 = vmatprep.mubr.f32.mxu0 0.0
    %249 = vmatmul.mubr.f32.gmra.mrb[0].mxu0 %v159
    %v250 = vpop.f32.mrb[0].mxu0
    %v251 = vadd.f32 0.0, %v250
    %v252 = vpop.f32.mrb[0].mxu0
    %253 = vmatprep.mubr.f32.mxu0 0.0
    %254 = vmatmul.mubr.f32.gmra.mrb[0].mxu0 %v162
    %v255 = vpop.f32.mrb[0].mxu0
    %v256 = vadd.f32 0.0, %v255
    %v257 = vpop.f32.mrb[0].mxu0
    %258 = vmatprep.mubr.f32.mxu0 0.0
    %259 = vmatmul.mubr.f32.gmra.mrb[0].mxu0 %v165
    %v260 = vpop.f32.mrb[0].mxu0
    %v261 = vadd.f32 0.0, %v260
    %v262 = vpop.f32.mrb[0].mxu0
    %263 = vmatprep.mubr.f32.mxu0 0.0
    %264 = vmatmul.mubr.f32.gmra.mrb[0].mxu0 %v168
    %v265 = vpop.f32.mrb[0].mxu0
    %v266 = vadd.f32 0.0, %v265
    %v267 = vpop.f32.mrb[0].mxu0
    %268 = vmatprep.mubr.f32.mxu0 0.0
    %269 = vmatmul.mubr.f32.gmra.mrb[0].mxu0 %v171
    %v270 = vpop.f32.mrb[0].mxu0
    %v271 = vadd.f32 0.0, %v270
    %v272 = vpop.f32.mrb[0].mxu0
    %273 = vmatprep.mubr.f32.mxu0 0.0
    %274 = vmatmul.mubr.f32.gmra.mrb[0].mxu0 %v174
    %v275 = vpop.f32.mrb[0].mxu0
    %v276 = vadd.f32 0.0, %v275
    %v277 = vpop.f32.mrb[0].mxu0
    %278 = vmatprep.mubr.f32.mxu0 0.0
    %279 = vmatmul.mubr.f32.gmra.mrb[0].mxu0 %v177
    %v280 = vpop.f32.mrb[0].mxu0
    %v281 = vadd.f32 0.0, %v280
    %v282 = vpop.f32.mrb[0].mxu0
    %283 = vdwg.mxu0
    %v284 = vld [vmem:[%s1] sm:$0xff]
    %v285 = vld [vmem:[%s1 + $0x8] sm:$0xff]
    %v286 = vld [vmem:[%s1 + $0x10] sm:$0xff]
    %v287 = vld [vmem:[%s1 + $0x18] sm:$0xff]
    %v288 = vld [vmem:[%s1 + $0x20] sm:$0xff]
    %v289 = vld [vmem:[%s1 + $0x28] sm:$0xff]
    %v290 = vld [vmem:[%s1 + $0x30] sm:$0xff]
    %v291 = vld [vmem:[%s1 + $0x38] sm:$0xff]
    %292 = vset.pattern.permute.xlu0 0
    %293 = vperm.xlu0 %292, %v284
    %v294 = vpop.permute.xlu0 %293
    %295 = vset.pattern.permute.xlu0 0
    %296 = vperm.xlu0 %295, %v285
    %v297 = vpop.permute.xlu0 %296
    %298 = vset.pattern.permute.xlu0 0
    %299 = vperm.xlu0 %298, %v286
    %v300 = vpop.permute.xlu0 %299
    %301 = vset.pattern.permute.xlu0 0
    %302 = vperm.xlu0 %301, %v287
    %v303 = vpop.permute.xlu0 %302
    %304 = vset.pattern.permute.xlu0 0
    %305 = vperm.xlu0 %304, %v288
    %v306 = vpop.permute.xlu0 %305
    %307 = vset.pattern.permute.xlu0 0
    %308 = vperm.xlu0 %307, %v289
    %v309 = vpop.permute.xlu0 %308
    %310 = vset.pattern.permute.xlu0 0
    %311 = vperm.xlu0 %310, %v290
    %v312 = vpop.permute.xlu0 %311
    %313 = vset.pattern.permute.xlu0 0
    %314 = vperm.xlu0 %313, %v291
    %v315 = vpop.permute.xlu0 %314
    %vm316 = vcmp.eq.s32.totalorder %v294, %v97
    %vm317 = vcmp.eq.s32.totalorder %v297, %v97
    %vm318 = vcmp.eq.s32.totalorder %v300, %v97
    %vm319 = vcmp.eq.s32.totalorder %v303, %v97
    %vm320 = vcmp.eq.s32.totalorder %v306, %v97
    %vm321 = vcmp.eq.s32.totalorder %v309, %v97
    %vm322 = vcmp.eq.s32.totalorder %v312, %v97
    %vm323 = vcmp.eq.s32.totalorder %v315, %v97
    %v324 = vsel %vm316, 1, 0
    %v325 = vsel %vm317, 1, 0
    %v326 = vsel %vm318, 1, 0
    %v327 = vsel %vm319, 1, 0
    %v328 = vsel %vm320, 1, 0
    %v329 = vsel %vm321, 1, 0
    %v330 = vsel %vm322, 1, 0
    %v331 = vsel %vm323, 1, 0
    %v332 = vcvt.s32.f32 %v324
    %v333 = vcvt.s32.f32 %v325
    %v334 = vcvt.s32.f32 %v326
    %v335 = vcvt.s32.f32 %v327
    %v336 = vcvt.s32.f32 %v328
    %v337 = vcvt.s32.f32 %v329
    %v338 = vcvt.s32.f32 %v330
    %v339 = vcvt.s32.f32 %v331
    %v340 = vld [vmem:[%s3] sm:$0xff]
    %v341 = vld [vmem:[%s3 + $0x8] sm:$0xff]
    %v342 = vld [vmem:[%s3 + $0x10] sm:$0xff]
    %v343 = vld [vmem:[%s3 + $0x18] sm:$0xff]
    %v344 = vld [vmem:[%s3 + $0x20] sm:$0xff]
    %v345 = vld [vmem:[%s3 + $0x28] sm:$0xff]
    %v346 = vld [vmem:[%s3 + $0x30] sm:$0xff]
    %v347 = vld [vmem:[%s3 + $0x38] sm:$0xff]
    %v349 = vsel %vm154, %v332, 0
    %v352 = vsel %vm154, %v333, 0
    %v355 = vsel %vm154, %v334, 0
    %v358 = vsel %vm154, %v335, 0
    %v361 = vsel %vm154, %v336, 0
    %v364 = vsel %vm154, %v337, 0
    %v367 = vsel %vm154, %v338, 0
    %v370 = vsel %vm154, %v339, 0
    %372 = vmatprep.subr.mxu0 0.0
    %373 = vmatpush1.msra.mxu0 %v340
    %374 = vmatprep.subr.mxu0 0.0
    %375 = vmatpush1.msra.mxu0 %v341
    %376 = vmatprep.subr.mxu0 0.0
    %377 = vmatpush1.msra.mxu0 %v342
    %378 = vmatprep.subr.mxu0 0.0
    %379 = vmatpush1.msra.mxu0 %v343
    %380 = vmatprep.subr.mxu0 0.0
    %381 = vmatpush1.msra.mxu0 %v344
    %382 = vmatprep.subr.mxu0 0.0
    %383 = vmatpush1.msra.mxu0 %v345
    %384 = vmatprep.subr.mxu0 0.0
    %385 = vmatpush1.msra.mxu0 %v346
    %386 = vmatprep.subr.mxu0 0.0
    %387 = vmatpush1.msra.mxu0 %v347
    %388 = vmatprep.subr.mxu0 0.0
    %389 = vmatpush1.msra.mxu0 0.0
    %390 = vmatprep.subr.mxu0 0.0
    %391 = vmatpush1.msra.mxu0 0.0
    %392 = vmatprep.subr.mxu0 0.0
    %393 = vmatpush1.msra.mxu0 0.0
    %394 = vmatprep.subr.mxu0 0.0
    %395 = vmatpush1.msra.mxu0 0.0
    %396 = vmatprep.subr.mxu0 0.0
    %397 = vmatpush1.msra.mxu0 0.0
    %398 = vmatprep.subr.mxu0 0.0
    %399 = vmatpush1.msra.mxu0 0.0
    %400 = vmatprep.subr.mxu0 0.0
    %401 = vmatpush1.msra.mxu0 0.0
    %402 = vmatprep.subr.mxu0 0.0
    %403 = vmatpush1.msra.mxu0 0.0
    %404 = vmatprep.subr.mxu0 0.0
    %405 = vmatpush1.msra.mxu0 0.0
    %406 = vmatprep.subr.mxu0 0.0
    %407 = vmatpush1.msra.mxu0 0.0
    %408 = vmatprep.subr.mxu0 0.0
    %409 = vmatpush1.msra.mxu0 0.0
    %410 = vmatprep.subr.mxu0 0.0
    %411 = vmatpush1.msra.mxu0 0.0
    %412 = vmatprep.subr.mxu0 0.0
    %413 = vmatpush1.msra.mxu0 0.0
    %414 = vmatprep.subr.mxu0 0.0
    %415 = vmatpush1.msra.mxu0 0.0
    %416 = vmatprep.subr.mxu0 0.0
    %417 = vmatpush1.msra.mxu0 0.0
    %418 = vmatprep.subr.mxu0 0.0
    %419 = vmatpush1.msra.mxu0 0.0
    %420 = vmatprep.subr.mxu0 0.0
    %421 = vmatpush1.msra.mxu0 0.0
    %422 = vmatprep.subr.mxu0 0.0
    %423 = vmatpush1.msra.mxu0 0.0
    %424 = vmatprep.subr.mxu0 0.0
    %425 = vmatpush1.msra.mxu0 0.0
    %426 = vmatprep.subr.mxu0 0.0
    %427 = vmatpush1.msra.mxu0 0.0
    %428 = vmatprep.subr.mxu0 0.0
    %429 = vmatpush1.msra.mxu0 0.0
    %430 = vmatprep.subr.mxu0 0.0
    %431 = vmatpush1.msra.mxu0 0.0
    %432 = vmatprep.subr.mxu0 0.0
    %433 = vmatpush1.msra.mxu0 0.0
    %434 = vmatprep.subr.mxu0 0.0
    %435 = vmatpush1.msra.mxu0 0.0
    %436 = vmatprep.mubr.f32.mxu0 0.0
    %437 = vmatmul.mubr.f32.gmra.mrb[0].mxu0 %v349
    %v438 = vpop.f32.mrb[0].mxu0
    %v439 = vadd.f32 0.0, %v438
    %v440 = vpop.f32.mrb[0].mxu0
    %441 = vmatprep.mubr.f32.mxu0 0.0
    %442 = vmatmul.mubr.f32.gmra.mrb[0].mxu0 %v352
    %v443 = vpop.f32.mrb[0].mxu0
    %v444 = vadd.f32 0.0, %v443
    %v445 = vpop.f32.mrb[0].mxu0
    %446 = vmatprep.mubr.f32.mxu0 0.0
    %447 = vmatmul.mubr.f32.gmra.mrb[0].mxu0 %v355
    %v448 = vpop.f32.mrb[0].mxu0
    %v449 = vadd.f32 0.0, %v448
    %v450 = vpop.f32.mrb[0].mxu0
    %451 = vmatprep.mubr.f32.mxu0 0.0
    %452 = vmatmul.mubr.f32.gmra.mrb[0].mxu0 %v358
    %v453 = vpop.f32.mrb[0].mxu0
    %v454 = vadd.f32 0.0, %v453
    %v455 = vpop.f32.mrb[0].mxu0
    %456 = vmatprep.mubr.f32.mxu0 0.0
    %457 = vmatmul.mubr.f32.gmra.mrb[0].mxu0 %v361
    %v458 = vpop.f32.mrb[0].mxu0
    %v459 = vadd.f32 0.0, %v458
    %v460 = vpop.f32.mrb[0].mxu0
    %461 = vmatprep.mubr.f32.mxu0 0.0
    %462 = vmatmul.mubr.f32.gmra.mrb[0].mxu0 %v364
    %v463 = vpop.f32.mrb[0].mxu0
    %v464 = vadd.f32 0.0, %v463
    %v465 = vpop.f32.mrb[0].mxu0
    %466 = vmatprep.mubr.f32.mxu0 0.0
    %467 = vmatmul.mubr.f32.gmra.mrb[0].mxu0 %v367
    %v468 = vpop.f32.mrb[0].mxu0
    %v469 = vadd.f32 0.0, %v468
    %v470 = vpop.f32.mrb[0].mxu0
    %471 = vmatprep.mubr.f32.mxu0 0.0
    %472 = vmatmul.mubr.f32.gmra.mrb[0].mxu0 %v370
    %v473 = vpop.f32.mrb[0].mxu0
    %v474 = vadd.f32 0.0, %v473
    %v475 = vpop.f32.mrb[0].mxu0
    %476 = vdwg.mxu0
    %v477 = vld [vmem:[%s4] sm:$0xff]
    %v478 = vld [vmem:[%s4 + $0x8] sm:$0xff]
    %v479 = vld [vmem:[%s4 + $0x10] sm:$0xff]
    %v480 = vld [vmem:[%s4 + $0x18] sm:$0xff]
    %v481 = vld [vmem:[%s6] sm:$0x1]
    %v483 = vlaneseq
    %v484 = vshrl.u32 %v483, 7
    %v485 = vsub.s32 0, %v484
    %v486 = vrot.slane %v481, %v485
    %vm488 = vcmask 261120
    %v490 = vsel %vm488, %v246, 0
    %v493 = vsel %vm488, %v251, 0
    %v496 = vsel %vm488, %v256, 0
    %v499 = vsel %vm488, %v261, 0
    %v502 = vsel %vm488, %v266, 0
    %v505 = vsel %vm488, %v271, 0
    %v508 = vsel %vm488, %v276, 0
    %v511 = vsel %vm488, %v281, 0
    %513 = vmatprep.subr.mxu0 0.0
    %514 = vmatpush1.msra.mxu0 %v477
    %515 = vmatprep.subr.mxu0 0.0
    %516 = vmatpush1.msra.mxu0 %v478
    %517 = vmatprep.subr.mxu0 0.0
    %518 = vmatpush1.msra.mxu0 %v479
    %519 = vmatprep.subr.mxu0 0.0
    %520 = vmatpush1.msra.mxu0 %v480
    %521 = vmatprep.subr.mxu0 0.0
    %522 = vmatpush1.msra.mxu0 0.0
    %523 = vmatprep.subr.mxu0 0.0
    %524 = vmatpush1.msra.mxu0 0.0
    %525 = vmatprep.subr.mxu0 0.0
    %526 = vmatpush1.msra.mxu0 0.0
    %527 = vmatprep.subr.mxu0 0.0
    %528 = vmatpush1.msra.mxu0 0.0
    %529 = vmatprep.subr.mxu0 0.0
    %530 = vmatpush1.msra.mxu0 0.0
    %531 = vmatprep.subr.mxu0 0.0
    %532 = vmatpush1.msra.mxu0 0.0
    %533 = vmatprep.subr.mxu0 0.0
    %534 = vmatpush1.msra.mxu0 0.0
    %535 = vmatprep.subr.mxu0 0.0
    %536 = vmatpush1.msra.mxu0 0.0
    %537 = vmatprep.subr.mxu0 0.0
    %538 = vmatpush1.msra.mxu0 0.0
    %539 = vmatprep.subr.mxu0 0.0
    %540 = vmatpush1.msra.mxu0 0.0
    %541 = vmatprep.subr.mxu0 0.0
    %542 = vmatpush1.msra.mxu0 0.0
    %543 = vmatprep.subr.mxu0 0.0
    %544 = vmatpush1.msra.mxu0 0.0
    %545 = vmatprep.subr.mxu0 0.0
    %546 = vmatpush1.msra.mxu0 0.0
    %547 = vmatprep.subr.mxu0 0.0
    %548 = vmatpush1.msra.mxu0 0.0
    %549 = vmatprep.subr.mxu0 0.0
    %550 = vmatpush1.msra.mxu0 0.0
    %551 = vmatprep.subr.mxu0 0.0
    %552 = vmatpush1.msra.mxu0 0.0
    %553 = vmatprep.subr.mxu0 0.0
    %554 = vmatpush1.msra.mxu0 0.0
    %555 = vmatprep.subr.mxu0 0.0
    %556 = vmatpush1.msra.mxu0 0.0
    %557 = vmatprep.subr.mxu0 0.0
    %558 = vmatpush1.msra.mxu0 0.0
    %559 = vmatprep.subr.mxu0 0.0
    %560 = vmatpush1.msra.mxu0 0.0
    %561 = vmatprep.subr.mxu0 0.0
    %562 = vmatpush1.msra.mxu0 0.0
    %563 = vmatprep.subr.mxu0 0.0
    %564 = vmatpush1.msra.mxu0 0.0
    %565 = vmatprep.subr.mxu0 0.0
    %566 = vmatpush1.msra.mxu0 0.0
    %567 = vmatprep.subr.mxu0 0.0
    %568 = vmatpush1.msra.mxu0 0.0
    %569 = vmatprep.subr.mxu0 0.0
    %570 = vmatpush1.msra.mxu0 0.0
    %571 = vmatprep.subr.mxu0 0.0
    %572 = vmatpush1.msra.mxu0 0.0
    %573 = vmatprep.subr.mxu0 0.0
    %574 = vmatpush1.msra.mxu0 0.0
    %575 = vmatprep.subr.mxu0 0.0
    %576 = vmatpush1.msra.mxu0 0.0
    %577 = vmatprep.mubr.f32.mxu0 0.0
    %578 = vmatmul.mubr.f32.gmra.mrb[0].mxu0 %v490
    %v579 = vpop.f32.mrb[0].mxu0
    %v580 = vadd.f32 %v486, %v579
    %v581 = vpop.f32.mrb[0].mxu0
    %582 = vmatprep.mubr.f32.mxu0 0.0
    %583 = vmatmul.mubr.f32.gmra.mrb[0].mxu0 %v493
    %v584 = vpop.f32.mrb[0].mxu0
    %v585 = vadd.f32 %v486, %v584
    %v586 = vpop.f32.mrb[0].mxu0
    %587 = vmatprep.mubr.f32.mxu0 0.0
    %588 = vmatmul.mubr.f32.gmra.mrb[0].mxu0 %v496
    %v589 = vpop.f32.mrb[0].mxu0
    %v590 = vadd.f32 %v486, %v589
    %v591 = vpop.f32.mrb[0].mxu0
    %592 = vmatprep.mubr.f32.mxu0 0.0
    %593 = vmatmul.mubr.f32.gmra.mrb[0].mxu0 %v499
    %v594 = vpop.f32.mrb[0].mxu0
    %v595 = vadd.f32 %v486, %v594
    %v596 = vpop.f32.mrb[0].mxu0
    %597 = vmatprep.mubr.f32.mxu0 0.0
    %598 = vmatmul.mubr.f32.gmra.mrb[0].mxu0 %v502
    %v599 = vpop.f32.mrb[0].mxu0
    %v600 = vadd.f32 %v486, %v599
    %v601 = vpop.f32.mrb[0].mxu0
    %602 = vmatprep.mubr.f32.mxu0 0.0
    %603 = vmatmul.mubr.f32.gmra.mrb[0].mxu0 %v505
    %v604 = vpop.f32.mrb[0].mxu0
    %v605 = vadd.f32 %v486, %v604
    %v606 = vpop.f32.mrb[0].mxu0
    %607 = vmatprep.mubr.f32.mxu0 0.0
    %608 = vmatmul.mubr.f32.gmra.mrb[0].mxu0 %v508
    %v609 = vpop.f32.mrb[0].mxu0
    %v610 = vadd.f32 %v486, %v609
    %v611 = vpop.f32.mrb[0].mxu0
    %612 = vmatprep.mubr.f32.mxu0 0.0
    %613 = vmatmul.mubr.f32.gmra.mrb[0].mxu0 %v511
    %v614 = vpop.f32.mrb[0].mxu0
    %v615 = vadd.f32 %v486, %v614
    %v616 = vpop.f32.mrb[0].mxu0
    %617 = vdwg.mxu0
    %v618 = vld [vmem:[%s8] sm:$0xff]
    %v619 = vld [vmem:[%s8 + $0x8] sm:$0xff]
    %v620 = vld [vmem:[%s8 + $0x10] sm:$0xff]
    %v621 = vld [vmem:[%s8 + $0x18] sm:$0xff]
    %v622 = vld [vmem:[#allocation4] sm:$0x1]
    %v624 = vlaneseq
    %v625 = vshrl.u32 %v624, 7
    %v626 = vsub.s32 0, %v625
    %v627 = vrot.slane %v622, %v626
    %v630 = vsel %vm488, %v439, 0
    %v633 = vsel %vm488, %v444, 0
    %v636 = vsel %vm488, %v449, 0
    %v639 = vsel %vm488, %v454, 0
    %v642 = vsel %vm488, %v459, 0
    %v645 = vsel %vm488, %v464, 0
    %v648 = vsel %vm488, %v469, 0
    %v651 = vsel %vm488, %v474, 0
    %653 = vmatprep.subr.mxu0 0.0
    %654 = vmatpush1.msra.mxu0 %v618
    %655 = vmatprep.subr.mxu0 0.0
    %656 = vmatpush1.msra.mxu0 %v619
    %657 = vmatprep.subr.mxu0 0.0
    %658 = vmatpush1.msra.mxu0 %v620
    %659 = vmatprep.subr.mxu0 0.0
    %660 = vmatpush1.msra.mxu0 %v621
    %661 = vmatprep.subr.mxu0 0.0
    %662 = vmatpush1.msra.mxu0 0.0
    %663 = vmatprep.subr.mxu0 0.0
    %664 = vmatpush1.msra.mxu0 0.0
    %665 = vmatprep.subr.mxu0 0.0
    %666 = vmatpush1.msra.mxu0 0.0
    %667 = vmatprep.subr.mxu0 0.0
    %668 = vmatpush1.msra.mxu0 0.0
    %669 = vmatprep.subr.mxu0 0.0
    %670 = vmatpush1.msra.mxu0 0.0
    %671 = vmatprep.subr.mxu0 0.0
    %672 = vmatpush1.msra.mxu0 0.0
    %673 = vmatprep.subr.mxu0 0.0
    %674 = vmatpush1.msra.mxu0 0.0
    %675 = vmatprep.subr.mxu0 0.0
    %676 = vmatpush1.msra.mxu0 0.0
    %677 = vmatprep.subr.mxu0 0.0
    %678 = vmatpush1.msra.mxu0 0.0
    %679 = vmatprep.subr.mxu0 0.0
    %680 = vmatpush1.msra.mxu0 0.0
    %681 = vmatprep.subr.mxu0 0.0
    %682 = vmatpush1.msra.mxu0 0.0
    %683 = vmatprep.subr.mxu0 0.0
    %684 = vmatpush1.msra.mxu0 0.0
    %685 = vmatprep.subr.mxu0 0.0
    %686 = vmatpush1.msra.mxu0 0.0
    %687 = vmatprep.subr.mxu0 0.0
    %688 = vmatpush1.msra.mxu0 0.0
    %689 = vmatprep.subr.mxu0 0.0
    %690 = vmatpush1.msra.mxu0 0.0
    %691 = vmatprep.subr.mxu0 0.0
    %692 = vmatpush1.msra.mxu0 0.0
    %693 = vmatprep.subr.mxu0 0.0
    %694 = vmatpush1.msra.mxu0 0.0
    %695 = vmatprep.subr.mxu0 0.0
    %696 = vmatpush1.msra.mxu0 0.0
    %697 = vmatprep.subr.mxu0 0.0
    %698 = vmatpush1.msra.mxu0 0.0
    %699 = vmatprep.subr.mxu0 0.0
    %700 = vmatpush1.msra.mxu0 0.0
    %701 = vmatprep.subr.mxu0 0.0
    %702 = vmatpush1.msra.mxu0 0.0
    %703 = vmatprep.subr.mxu0 0.0
    %704 = vmatpush1.msra.mxu0 0.0
    %705 = vmatprep.subr.mxu0 0.0
    %706 = vmatpush1.msra.mxu0 0.0
    %707 = vmatprep.subr.mxu0 0.0
    %708 = vmatpush1.msra.mxu0 0.0
    %709 = vmatprep.subr.mxu0 0.0
    %710 = vmatpush1.msra.mxu0 0.0
    %711 = vmatprep.subr.mxu0 0.0
    %712 = vmatpush1.msra.mxu0 0.0
    %713 = vmatprep.subr.mxu0 0.0
    %714 = vmatpush1.msra.mxu0 0.0
    %715 = vmatprep.subr.mxu0 0.0
    %716 = vmatpush1.msra.mxu0 0.0
    %717 = vmatprep.mubr.f32.mxu0 0.0
    %718 = vmatmul.mubr.f32.gmra.mrb[0].mxu0 %v630
    %v719 = vpop.f32.mrb[0].mxu0
    %v720 = vadd.f32 %v627, %v719
    %v721 = vpop.f32.mrb[0].mxu0
    %722 = vmatprep.mubr.f32.mxu0 0.0
    %723 = vmatmul.mubr.f32.gmra.mrb[0].mxu0 %v633
    %v724 = vpop.f32.mrb[0].mxu0
    %v725 = vadd.f32 %v627, %v724
    %v726 = vpop.f32.mrb[0].mxu0
    %727 = vmatprep.mubr.f32.mxu0 0.0
    %728 = vmatmul.mubr.f32.gmra.mrb[0].mxu0 %v636
    %v729 = vpop.f32.mrb[0].mxu0
    %v730 = vadd.f32 %v627, %v729
    %v731 = vpop.f32.mrb[0].mxu0
    %732 = vmatprep.mubr.f32.mxu0 0.0
    %733 = vmatmul.mubr.f32.gmra.mrb[0].mxu0 %v639
    %v734 = vpop.f32.mrb[0].mxu0
    %v735 = vadd.f32 %v627, %v734
    %v736 = vpop.f32.mrb[0].mxu0
    %737 = vmatprep.mubr.f32.mxu0 0.0
    %738 = vmatmul.mubr.f32.gmra.mrb[0].mxu0 %v642
    %v739 = vpop.f32.mrb[0].mxu0
    %v740 = vadd.f32 %v627, %v739
    %v741 = vpop.f32.mrb[0].mxu0
    %742 = vmatprep.mubr.f32.mxu0 0.0
    %743 = vmatmul.mubr.f32.gmra.mrb[0].mxu0 %v645
    %v744 = vpop.f32.mrb[0].mxu0
    %v745 = vadd.f32 %v627, %v744
    %v746 = vpop.f32.mrb[0].mxu0
    %747 = vmatprep.mubr.f32.mxu0 0.0
    %748 = vmatmul.mubr.f32.gmra.mrb[0].mxu0 %v648
    %v749 = vpop.f32.mrb[0].mxu0
    %v750 = vadd.f32 %v627, %v749
    %v751 = vpop.f32.mrb[0].mxu0
    %752 = vmatprep.mubr.f32.mxu0 0.0
    %753 = vmatmul.mubr.f32.gmra.mrb[0].mxu0 %v651
    %v754 = vpop.f32.mrb[0].mxu0
    %v755 = vadd.f32 %v627, %v754
    %v756 = vpop.f32.mrb[0].mxu0
    %757 = vdwg.mxu0
    %v758 = vld [vmem:[%s5] sm:$0xff]
    %v759 = vld [vmem:[%s5 + $0x8] sm:$0xff]
    %v760 = vld [vmem:[%s5 + $0x10] sm:$0xff]
    %v761 = vld [vmem:[%s5 + $0x18] sm:$0xff]
    %v762 = vld [vmem:[%s7] sm:$0x1]
    %v764 = vlaneseq
    %v765 = vshrl.u32 %v764, 7
    %v766 = vsub.s32 0, %v765
    %v767 = vrot.slane %v762, %v766
    %v770 = vsel %vm488, 0.0, 0
    %772 = vmatprep.subr.mxu0 0.0
    %773 = vmatpush1.msra.mxu0 %v758
    %774 = vmatprep.subr.mxu0 0.0
    %775 = vmatpush1.msra.mxu0 %v759
    %776 = vmatprep.subr.mxu0 0.0
    %777 = vmatpush1.msra.mxu0 %v760
    %778 = vmatprep.subr.mxu0 0.0
    %779 = vmatpush1.msra.mxu0 %v761
    %780 = vmatprep.subr.mxu0 0.0
    %781 = vmatpush1.msra.mxu0 0.0
    %782 = vmatprep.subr.mxu0 0.0
    %783 = vmatpush1.msra.mxu0 0.0
    %784 = vmatprep.subr.mxu0 0.0
    %785 = vmatpush1.msra.mxu0 0.0
    %786 = vmatprep.subr.mxu0 0.0
    %787 = vmatpush1.msra.mxu0 0.0
    %788 = vmatprep.subr.mxu0 0.0
    %789 = vmatpush1.msra.mxu0 0.0
    %790 = vmatprep.subr.mxu0 0.0
    %791 = vmatpush1.msra.mxu0 0.0
    %792 = vmatprep.subr.mxu0 0.0
    %793 = vmatpush1.msra.mxu0 0.0
    %794 = vmatprep.subr.mxu0 0.0
    %795 = vmatpush1.msra.mxu0 0.0
    %796 = vmatprep.subr.mxu0 0.0
    %797 = vmatpush1.msra.mxu0 0.0
    %798 = vmatprep.subr.mxu0 0.0
    %799 = vmatpush1.msra.mxu0 0.0
    %800 = vmatprep.subr.mxu0 0.0
    %801 = vmatpush1.msra.mxu0 0.0
    %802 = vmatprep.subr.mxu0 0.0
    %803 = vmatpush1.msra.mxu0 0.0
    %804 = vmatprep.subr.mxu0 0.0
    %805 = vmatpush1.msra.mxu0 0.0
    %806 = vmatprep.subr.mxu0 0.0
    %807 = vmatpush1.msra.mxu0 0.0
    %808 = vmatprep.subr.mxu0 0.0
    %809 = vmatpush1.msra.mxu0 0.0
    %810 = vmatprep.subr.mxu0 0.0
    %811 = vmatpush1.msra.mxu0 0.0
    %812 = vmatprep.subr.mxu0 0.0
    %813 = vmatpush1.msra.mxu0 0.0
    %814 = vmatprep.subr.mxu0 0.0
    %815 = vmatpush1.msra.mxu0 0.0
    %816 = vmatprep.subr.mxu0 0.0
    %817 = vmatpush1.msra.mxu0 0.0
    %818 = vmatprep.subr.mxu0 0.0
    %819 = vmatpush1.msra.mxu0 0.0
    %820 = vmatprep.subr.mxu0 0.0
    %821 = vmatpush1.msra.mxu0 0.0
    %822 = vmatprep.subr.mxu0 0.0
    %823 = vmatpush1.msra.mxu0 0.0
    %824 = vmatprep.subr.mxu0 0.0
    %825 = vmatpush1.msra.mxu0 0.0
    %826 = vmatprep.subr.mxu0 0.0
    %827 = vmatpush1.msra.mxu0 0.0
    %828 = vmatprep.subr.mxu0 0.0
    %829 = vmatpush1.msra.mxu0 0.0
    %830 = vmatprep.subr.mxu0 0.0
    %831 = vmatpush1.msra.mxu0 0.0
    %832 = vmatprep.subr.mxu0 0.0
    %833 = vmatpush1.msra.mxu0 0.0
    %834 = vmatprep.subr.mxu0 0.0
    %835 = vmatpush1.msra.mxu0 0.0
    %836 = vmatprep.mubr.f32.mxu0 0.0
    %837 = vmatmul.mubr.f32.gmra.mrb[0].mxu0 %v770
    %v838 = vpop.f32.mrb[0].mxu0
    %v839 = vadd.f32 %v767, %v838
    %v840 = vpop.f32.mrb[0].mxu0
    %841 = vdwg.mxu0
    %v842 = vadd.f32 %v580, %v839
    %v843 = vxor.u32 %v842, 2147483648
    %v844 = vmul.f32 %v843, 1.442695
    %v845 = vpow.pop %v844
    %v846 = vadd.f32 %v845, 1.0
    %v847 = vrcp.pop %v846
    %v848 = vmul.f32 1.0, %v847
    %850 = vrot.lane.b32.xlu0 %v839, 64
    %v851 = vpop.permute.xlu0 %850
    %v853 = vmul.f32 %v848, %v851
    %855 = vrot.lane.b32.xlu0 %v853, 64
    %v856 = vpop.permute.xlu0 %855
    %v858 = vadd.f32 %v580, %v856
    %v859 = vtanh.pop %v858
    %v860 = vsub.f32 0.0, %v859
    %862 = vrot.lane.b32.xlu0 %v860, 96
    %v863 = vpop.permute.xlu0 %862
    %v865 = vmul.f32 %v848, %v863
    %867 = vrot.lane.b32.xlu0 %v865, 32
    %v868 = vpop.permute.xlu0 %867
    %v870 = vadd.f32 %v859, %v868
    %872 = vrot.lane.b32.xlu0 %v870, 64
    %v873 = vpop.permute.xlu0 %872
    %875 = vst.msk [vmem:[#allocation2] sm:$0xff] %vm488, %v873
    %v876 = vsel %vm488, %v873, 0
    %878 = vmatprep.subr.mxu0 0.0
    %879 = vmatpush1.msra.mxu0 %v758
    %880 = vmatprep.subr.mxu0 0.0
    %881 = vmatpush1.msra.mxu0 %v759
    %882 = vmatprep.subr.mxu0 0.0
    %883 = vmatpush1.msra.mxu0 %v760
    %884 = vmatprep.subr.mxu0 0.0
    %885 = vmatpush1.msra.mxu0 %v761
    %886 = vmatprep.subr.mxu0 0.0
    %887 = vmatpush1.msra.mxu0 0.0
    %888 = vmatprep.subr.mxu0 0.0
    %889 = vmatpush1.msra.mxu0 0.0
    %890 = vmatprep.subr.mxu0 0.0
    %891 = vmatpush1.msra.mxu0 0.0
    %892 = vmatprep.subr.mxu0 0.0
    %893 = vmatpush1.msra.mxu0 0.0
    %894 = vmatprep.subr.mxu0 0.0
    %895 = vmatpush1.msra.mxu0 0.0
    %896 = vmatprep.subr.mxu0 0.0
    %897 = vmatpush1.msra.mxu0 0.0
    %898 = vmatprep.subr.mxu0 0.0
    %899 = vmatpush1.msra.mxu0 0.0
    %900 = vmatprep.subr.mxu0 0.0
    %901 = vmatpush1.msra.mxu0 0.0
    %902 = vmatprep.subr.mxu0 0.0
    %903 = vmatpush1.msra.mxu0 0.0
    %904 = vmatprep.subr.mxu0 0.0
    %905 = vmatpush1.msra.mxu0 0.0
    %906 = vmatprep.subr.mxu0 0.0
    %907 = vmatpush1.msra.mxu0 0.0
    %908 = vmatprep.subr.mxu0 0.0
    %909 = vmatpush1.msra.mxu0 0.0
    %910 = vmatprep.subr.mxu0 0.0
    %911 = vmatpush1.msra.mxu0 0.0
    %912 = vmatprep.subr.mxu0 0.0
    %913 = vmatpush1.msra.mxu0 0.0
    %914 = vmatprep.subr.mxu0 0.0
    %915 = vmatpush1.msra.mxu0 0.0
    %916 = vmatprep.subr.mxu0 0.0
    %917 = vmatpush1.msra.mxu0 0.0
    %918 = vmatprep.subr.mxu0 0.0
    %919 = vmatpush1.msra.mxu0 0.0
    %920 = vmatprep.subr.mxu0 0.0
    %921 = vmatpush1.msra.mxu0 0.0
    %922 = vmatprep.subr.mxu0 0.0
    %923 = vmatpush1.msra.mxu0 0.0
    %924 = vmatprep.subr.mxu0 0.0
    %925 = vmatpush1.msra.mxu0 0.0
    %926 = vmatprep.subr.mxu0 0.0
    %927 = vmatpush1.msra.mxu0 0.0
    %928 = vmatprep.subr.mxu0 0.0
    %929 = vmatpush1.msra.mxu0 0.0
    %930 = vmatprep.subr.mxu0 0.0
    %931 = vmatpush1.msra.mxu0 0.0
    %932 = vmatprep.subr.mxu0 0.0
    %933 = vmatpush1.msra.mxu0 0.0
    %934 = vmatprep.subr.mxu0 0.0
    %935 = vmatpush1.msra.mxu0 0.0
    %936 = vmatprep.subr.mxu0 0.0
    %937 = vmatpush1.msra.mxu0 0.0
    %938 = vmatprep.subr.mxu0 0.0
    %939 = vmatpush1.msra.mxu0 0.0
    %940 = vmatprep.subr.mxu0 0.0
    %941 = vmatpush1.msra.mxu0 0.0
    %942 = vmatprep.mubr.f32.mxu0 0.0
    %943 = vmatmul.mubr.f32.gmra.mrb[0].mxu0 %v876
    %v944 = vpop.f32.mrb[0].mxu0
    %v945 = vadd.f32 %v767, %v944
    %v946 = vpop.f32.mrb[0].mxu0
    %947 = vdwg.mxu0
    %v948 = vadd.f32 %v585, %v945
    %v949 = vxor.u32 %v948, 2147483648
    %v950 = vmul.f32 %v949, 1.442695
    %v951 = vpow.pop %v950
    %v952 = vadd.f32 %v951, 1.0
    %v953 = vrcp.pop %v952
    %v954 = vmul.f32 1.0, %v953
    %956 = vrot.lane.b32.xlu0 %v945, 64
    %v957 = vpop.permute.xlu0 %956
    %v959 = vmul.f32 %v954, %v957
    %961 = vrot.lane.b32.xlu0 %v959, 64
    %v962 = vpop.permute.xlu0 %961
    %v964 = vadd.f32 %v585, %v962
    %v965 = vtanh.pop %v964
    %v966 = vsub.f32 %v870, %v965
    %968 = vrot.lane.b32.xlu0 %v966, 96
    %v969 = vpop.permute.xlu0 %968
    %v971 = vmul.f32 %v954, %v969
    %973 = vrot.lane.b32.xlu0 %v971, 32
    %v974 = vpop.permute.xlu0 %973
    %v976 = vadd.f32 %v965, %v974
    %978 = vrot.lane.b32.xlu0 %v976, 64
    %v979 = vpop.permute.xlu0 %978
    %981 = vst.msk [vmem:[#allocation2 + $0x8] sm:$0xff] %vm488, %v979
    %v982 = vsel %vm488, %v979, 0
    %984 = vmatprep.subr.mxu0 0.0
    %985 = vmatpush1.msra.mxu0 %v758
    %986 = vmatprep.subr.mxu0 0.0
    %987 = vmatpush1.msra.mxu0 %v759
    %988 = vmatprep.subr.mxu0 0.0
    %989 = vmatpush1.msra.mxu0 %v760
    %990 = vmatprep.subr.mxu0 0.0
    %991 = vmatpush1.msra.mxu0 %v761
    %992 = vmatprep.subr.mxu0 0.0
    %993 = vmatpush1.msra.mxu0 0.0
    %994 = vmatprep.subr.mxu0 0.0
    %995 = vmatpush1.msra.mxu0 0.0
    %996 = vmatprep.subr.mxu0 0.0
    %997 = vmatpush1.msra.mxu0 0.0
    %998 = vmatprep.subr.mxu0 0.0
    %999 = vmatpush1.msra.mxu0 0.0
    %1000 = vmatprep.subr.mxu0 0.0
    %1001 = vmatpush1.msra.mxu0 0.0
    %1002 = vmatprep.subr.mxu0 0.0
    %1003 = vmatpush1.msra.mxu0 0.0
    %1004 = vmatprep.subr.mxu0 0.0
    %1005 = vmatpush1.msra.mxu0 0.0
    %1006 = vmatprep.subr.mxu0 0.0
    %1007 = vmatpush1.msra.mxu0 0.0
    %1008 = vmatprep.subr.mxu0 0.0
    %1009 = vmatpush1.msra.mxu0 0.0
    %1010 = vmatprep.subr.mxu0 0.0
    %1011 = vmatpush1.msra.mxu0 0.0
    %1012 = vmatprep.subr.mxu0 0.0
    %1013 = vmatpush1.msra.mxu0 0.0
    %1014 = vmatprep.subr.mxu0 0.0
    %1015 = vmatpush1.msra.mxu0 0.0
    %1016 = vmatprep.subr.mxu0 0.0
    %1017 = vmatpush1.msra.mxu0 0.0
    %1018 = vmatprep.subr.mxu0 0.0
    %1019 = vmatpush1.msra.mxu0 0.0
    %1020 = vmatprep.subr.mxu0 0.0
    %1021 = vmatpush1.msra.mxu0 0.0
    %1022 = vmatprep.subr.mxu0 0.0
    %1023 = vmatpush1.msra.mxu0 0.0
    %1024 = vmatprep.subr.mxu0 0.0
    %1025 = vmatpush1.msra.mxu0 0.0
    %1026 = vmatprep.subr.mxu0 0.0
    %1027 = vmatpush1.msra.mxu0 0.0
    %1028 = vmatprep.subr.mxu0 0.0
    %1029 = vmatpush1.msra.mxu0 0.0
    %1030 = vmatprep.subr.mxu0 0.0
    %1031 = vmatpush1.msra.mxu0 0.0
    %1032 = vmatprep.subr.mxu0 0.0
    %1033 = vmatpush1.msra.mxu0 0.0
    %1034 = vmatprep.subr.mxu0 0.0
    %1035 = vmatpush1.msra.mxu0 0.0
    %1036 = vmatprep.subr.mxu0 0.0
    %1037 = vmatpush1.msra.mxu0 0.0
    %1038 = vmatprep.subr.mxu0 0.0
    %1039 = vmatpush1.msra.mxu0 0.0
    %1040 = vmatprep.subr.mxu0 0.0
    %1041 = vmatpush1.msra.mxu0 0.0
    %1042 = vmatprep.subr.mxu0 0.0
    %1043 = vmatpush1.msra.mxu0 0.0
    %1044 = vmatprep.subr.mxu0 0.0
    %1045 = vmatpush1.msra.mxu0 0.0
    %1046 = vmatprep.subr.mxu0 0.0
    %1047 = vmatpush1.msra.mxu0 0.0
    %1048 = vmatprep.mubr.f32.mxu0 0.0
    %1049 = vmatmul.mubr.f32.gmra.mrb[0].mxu0 %v982
    %v1050 = vpop.f32.mrb[0].mxu0
    %v1051 = vadd.f32 %v767, %v1050
    %v1052 = vpop.f32.mrb[0].mxu0
    %1053 = vdwg.mxu0
    %v1054 = vadd.f32 %v590, %v1051
    %v1055 = vxor.u32 %v1054, 2147483648
    %v1056 = vmul.f32 %v1055, 1.442695
    %v1057 = vpow.pop %v1056
    %v1058 = vadd.f32 %v1057, 1.0
    %v1059 = vrcp.pop %v1058
    %v1060 = vmul.f32 1.0, %v1059
    %1062 = vrot.lane.b32.xlu0 %v1051, 64
    %v1063 = vpop.permute.xlu0 %1062
    %v1065 = vmul.f32 %v1060, %v1063
    %1067 = vrot.lane.b32.xlu0 %v1065, 64
    %v1068 = vpop.permute.xlu0 %1067
    %v1070 = vadd.f32 %v590, %v1068
    %v1071 = vtanh.pop %v1070
    %v1072 = vsub.f32 %v976, %v1071
    %1074 = vrot.lane.b32.xlu0 %v1072, 96
    %v1075 = vpop.permute.xlu0 %1074
    %v1077 = vmul.f32 %v1060, %v1075
    %1079 = vrot.lane.b32.xlu0 %v1077, 32
    %v1080 = vpop.permute.xlu0 %1079
    %v1082 = vadd.f32 %v1071, %v1080
    %1084 = vrot.lane.b32.xlu0 %v1082, 64
    %v1085 = vpop.permute.xlu0 %1084
    %1087 = vst.msk [vmem:[#allocation2 + $0x10] sm:$0xff] %vm488, %v1085
    %v1088 = vsel %vm488, %v1085, 0
    %1090 = vmatprep.subr.mxu0 0.0
    %1091 = vmatpush1.msra.mxu0 %v758
    %1092 = vmatprep.subr.mxu0 0.0
    %1093 = vmatpush1.msra.mxu0 %v759
    %1094 = vmatprep.subr.mxu0 0.0
    %1095 = vmatpush1.msra.mxu0 %v760
    %1096 = vmatprep.subr.mxu0 0.0
    %1097 = vmatpush1.msra.mxu0 %v761
    %1098 = vmatprep.subr.mxu0 0.0
    %1099 = vmatpush1.msra.mxu0 0.0
    %1100 = vmatprep.subr.mxu0 0.0
    %1101 = vmatpush1.msra.mxu0 0.0
    %1102 = vmatprep.subr.mxu0 0.0
    %1103 = vmatpush1.msra.mxu0 0.0
    %1104 = vmatprep.subr.mxu0 0.0
    %1105 = vmatpush1.msra.mxu0 0.0
    %1106 = vmatprep.subr.mxu0 0.0
    %1107 = vmatpush1.msra.mxu0 0.0
    %1108 = vmatprep.subr.mxu0 0.0
    %1109 = vmatpush1.msra.mxu0 0.0
    %1110 = vmatprep.subr.mxu0 0.0
    %1111 = vmatpush1.msra.mxu0 0.0
    %1112 = vmatprep.subr.mxu0 0.0
    %1113 = vmatpush1.msra.mxu0 0.0
    %1114 = vmatprep.subr.mxu0 0.0
    %1115 = vmatpush1.msra.mxu0 0.0
    %1116 = vmatprep.subr.mxu0 0.0
    %1117 = vmatpush1.msra.mxu0 0.0
    %1118 = vmatprep.subr.mxu0 0.0
    %1119 = vmatpush1.msra.mxu0 0.0
    %1120 = vmatprep.subr.mxu0 0.0
    %1121 = vmatpush1.msra.mxu0 0.0
    %1122 = vmatprep.subr.mxu0 0.0
    %1123 = vmatpush1.msra.mxu0 0.0
    %1124 = vmatprep.subr.mxu0 0.0
    %1125 = vmatpush1.msra.mxu0 0.0
    %1126 = vmatprep.subr.mxu0 0.0
    %1127 = vmatpush1.msra.mxu0 0.0
    %1128 = vmatprep.subr.mxu0 0.0
    %1129 = vmatpush1.msra.mxu0 0.0
    %1130 = vmatprep.subr.mxu0 0.0
    %1131 = vmatpush1.msra.mxu0 0.0
    %1132 = vmatprep.subr.mxu0 0.0
    %1133 = vmatpush1.msra.mxu0 0.0
    %1134 = vmatprep.subr.mxu0 0.0
    %1135 = vmatpush1.msra.mxu0 0.0
    %1136 = vmatprep.subr.mxu0 0.0
    %1137 = vmatpush1.msra.mxu0 0.0
    %1138 = vmatprep.subr.mxu0 0.0
    %1139 = vmatpush1.msra.mxu0 0.0
    %1140 = vmatprep.subr.mxu0 0.0
    %1141 = vmatpush1.msra.mxu0 0.0
    %1142 = vmatprep.subr.mxu0 0.0
    %1143 = vmatpush1.msra.mxu0 0.0
    %1144 = vmatprep.subr.mxu0 0.0
    %1145 = vmatpush1.msra.mxu0 0.0
    %1146 = vmatprep.subr.mxu0 0.0
    %1147 = vmatpush1.msra.mxu0 0.0
    %1148 = vmatprep.subr.mxu0 0.0
    %1149 = vmatpush1.msra.mxu0 0.0
    %1150 = vmatprep.subr.mxu0 0.0
    %1151 = vmatpush1.msra.mxu0 0.0
    %1152 = vmatprep.subr.mxu0 0.0
    %1153 = vmatpush1.msra.mxu0 0.0
    %1154 = vmatprep.mubr.f32.mxu0 0.0
    %1155 = vmatmul.mubr.f32.gmra.mrb[0].mxu0 %v1088
    %v1156 = vpop.f32.mrb[0].mxu0
    %v1157 = vadd.f32 %v767, %v1156
    %v1158 = vpop.f32.mrb[0].mxu0
    %1159 = vdwg.mxu0
    %v1160 = vadd.f32 %v595, %v1157
    %v1161 = vxor.u32 %v1160, 2147483648
    %v1162 = vmul.f32 %v1161, 1.442695
    %v1163 = vpow.pop %v1162
    %v1164 = vadd.f32 %v1163, 1.0
    %v1165 = vrcp.pop %v1164
    %v1166 = vmul.f32 1.0, %v1165
    %1168 = vrot.lane.b32.xlu0 %v1157, 64
    %v1169 = vpop.permute.xlu0 %1168
    %v1171 = vmul.f32 %v1166, %v1169
    %1173 = vrot.lane.b32.xlu0 %v1171, 64
    %v1174 = vpop.permute.xlu0 %1173
    %v1176 = vadd.f32 %v595, %v1174
    %v1177 = vtanh.pop %v1176
    %v1178 = vsub.f32 %v1082, %v1177
    %1180 = vrot.lane.b32.xlu0 %v1178, 96
    %v1181 = vpop.permute.xlu0 %1180
    %v1183 = vmul.f32 %v1166, %v1181
    %1185 = vrot.lane.b32.xlu0 %v1183, 32
    %v1186 = vpop.permute.xlu0 %1185
    %v1188 = vadd.f32 %v1177, %v1186
    %1190 = vrot.lane.b32.xlu0 %v1188, 64
    %v1191 = vpop.permute.xlu0 %1190
    %1193 = vst.msk [vmem:[#allocation2 + $0x18] sm:$0xff] %vm488, %v1191
    %v1194 = vsel %vm488, %v1191, 0
    %1196 = vmatprep.subr.mxu0 0.0
    %1197 = vmatpush1.msra.mxu0 %v758
    %1198 = vmatprep.subr.mxu0 0.0
    %1199 = vmatpush1.msra.mxu0 %v759
    %1200 = vmatprep.subr.mxu0 0.0
    %1201 = vmatpush1.msra.mxu0 %v760
    %1202 = vmatprep.subr.mxu0 0.0
    %1203 = vmatpush1.msra.mxu0 %v761
    %1204 = vmatprep.subr.mxu0 0.0
    %1205 = vmatpush1.msra.mxu0 0.0
    %1206 = vmatprep.subr.mxu0 0.0
    %1207 = vmatpush1.msra.mxu0 0.0
    %1208 = vmatprep.subr.mxu0 0.0
    %1209 = vmatpush1.msra.mxu0 0.0
    %1210 = vmatprep.subr.mxu0 0.0
    %1211 = vmatpush1.msra.mxu0 0.0
    %1212 = vmatprep.subr.mxu0 0.0
    %1213 = vmatpush1.msra.mxu0 0.0
    %1214 = vmatprep.subr.mxu0 0.0
    %1215 = vmatpush1.msra.mxu0 0.0
    %1216 = vmatprep.subr.mxu0 0.0
    %1217 = vmatpush1.msra.mxu0 0.0
    %1218 = vmatprep.subr.mxu0 0.0
    %1219 = vmatpush1.msra.mxu0 0.0
    %1220 = vmatprep.subr.mxu0 0.0
    %1221 = vmatpush1.msra.mxu0 0.0
    %1222 = vmatprep.subr.mxu0 0.0
    %1223 = vmatpush1.msra.mxu0 0.0
    %1224 = vmatprep.subr.mxu0 0.0
    %1225 = vmatpush1.msra.mxu0 0.0
    %1226 = vmatprep.subr.mxu0 0.0
    %1227 = vmatpush1.msra.mxu0 0.0
    %1228 = vmatprep.subr.mxu0 0.0
    %1229 = vmatpush1.msra.mxu0 0.0
    %1230 = vmatprep.subr.mxu0 0.0
    %1231 = vmatpush1.msra.mxu0 0.0
    %1232 = vmatprep.subr.mxu0 0.0
    %1233 = vmatpush1.msra.mxu0 0.0
    %1234 = vmatprep.subr.mxu0 0.0
    %1235 = vmatpush1.msra.mxu0 0.0
    %1236 = vmatprep.subr.mxu0 0.0
    %1237 = vmatpush1.msra.mxu0 0.0
    %1238 = vmatprep.subr.mxu0 0.0
    %1239 = vmatpush1.msra.mxu0 0.0
    %1240 = vmatprep.subr.mxu0 0.0
    %1241 = vmatpush1.msra.mxu0 0.0
    %1242 = vmatprep.subr.mxu0 0.0
    %1243 = vmatpush1.msra.mxu0 0.0
    %1244 = vmatprep.subr.mxu0 0.0
    %1245 = vmatpush1.msra.mxu0 0.0
    %1246 = vmatprep.subr.mxu0 0.0
    %1247 = vmatpush1.msra.mxu0 0.0
    %1248 = vmatprep.subr.mxu0 0.0
    %1249 = vmatpush1.msra.mxu0 0.0
    %1250 = vmatprep.subr.mxu0 0.0
    %1251 = vmatpush1.msra.mxu0 0.0
    %1252 = vmatprep.subr.mxu0 0.0
    %1253 = vmatpush1.msra.mxu0 0.0
    %1254 = vmatprep.subr.mxu0 0.0
    %1255 = vmatpush1.msra.mxu0 0.0
    %1256 = vmatprep.subr.mxu0 0.0
    %1257 = vmatpush1.msra.mxu0 0.0
    %1258 = vmatprep.subr.mxu0 0.0
    %1259 = vmatpush1.msra.mxu0 0.0
    %1260 = vmatprep.mubr.f32.mxu0 0.0
    %1261 = vmatmul.mubr.f32.gmra.mrb[0].mxu0 %v1194
    %v1262 = vpop.f32.mrb[0].mxu0
    %v1263 = vadd.f32 %v767, %v1262
    %v1264 = vpop.f32.mrb[0].mxu0
    %1265 = vdwg.mxu0
    %v1266 = vadd.f32 %v600, %v1263
    %v1267 = vxor.u32 %v1266, 2147483648
    %v1268 = vmul.f32 %v1267, 1.442695
    %v1269 = vpow.pop %v1268
    %v1270 = vadd.f32 %v1269, 1.0
    %v1271 = vrcp.pop %v1270
    %v1272 = vmul.f32 1.0, %v1271
    %1274 = vrot.lane.b32.xlu0 %v1263, 64
    %v1275 = vpop.permute.xlu0 %1274
    %v1277 = vmul.f32 %v1272, %v1275
    %1279 = vrot.lane.b32.xlu0 %v1277, 64
    %v1280 = vpop.permute.xlu0 %1279
    %v1282 = vadd.f32 %v600, %v1280
    %v1283 = vtanh.pop %v1282
    %v1284 = vsub.f32 %v1188, %v1283
    %1286 = vrot.lane.b32.xlu0 %v1284, 96
    %v1287 = vpop.permute.xlu0 %1286
    %v1289 = vmul.f32 %v1272, %v1287
    %1291 = vrot.lane.b32.xlu0 %v1289, 32
    %v1292 = vpop.permute.xlu0 %1291
    %v1294 = vadd.f32 %v1283, %v1292
    %1296 = vrot.lane.b32.xlu0 %v1294, 64
    %v1297 = vpop.permute.xlu0 %1296
    %1299 = vst.msk [vmem:[#allocation2 + $0x20] sm:$0xff] %vm488, %v1297
    %v1300 = vsel %vm488, %v1297, 0
    %1302 = vmatprep.subr.mxu0 0.0
    %1303 = vmatpush1.msra.mxu0 %v758
    %1304 = vmatprep.subr.mxu0 0.0
    %1305 = vmatpush1.msra.mxu0 %v759
    %1306 = vmatprep.subr.mxu0 0.0
    %1307 = vmatpush1.msra.mxu0 %v760
    %1308 = vmatprep.subr.mxu0 0.0
    %1309 = vmatpush1.msra.mxu0 %v761
    %1310 = vmatprep.subr.mxu0 0.0
    %1311 = vmatpush1.msra.mxu0 0.0
    %1312 = vmatprep.subr.mxu0 0.0
    %1313 = vmatpush1.msra.mxu0 0.0
    %1314 = vmatprep.subr.mxu0 0.0
    %1315 = vmatpush1.msra.mxu0 0.0
    %1316 = vmatprep.subr.mxu0 0.0
    %1317 = vmatpush1.msra.mxu0 0.0
    %1318 = vmatprep.subr.mxu0 0.0
    %1319 = vmatpush1.msra.mxu0 0.0
    %1320 = vmatprep.subr.mxu0 0.0
    %1321 = vmatpush1.msra.mxu0 0.0
    %1322 = vmatprep.subr.mxu0 0.0
    %1323 = vmatpush1.msra.mxu0 0.0
    %1324 = vmatprep.subr.mxu0 0.0
    %1325 = vmatpush1.msra.mxu0 0.0
    %1326 = vmatprep.subr.mxu0 0.0
    %1327 = vmatpush1.msra.mxu0 0.0
    %1328 = vmatprep.subr.mxu0 0.0
    %1329 = vmatpush1.msra.mxu0 0.0
    %1330 = vmatprep.subr.mxu0 0.0
    %1331 = vmatpush1.msra.mxu0 0.0
    %1332 = vmatprep.subr.mxu0 0.0
    %1333 = vmatpush1.msra.mxu0 0.0
    %1334 = vmatprep.subr.mxu0 0.0
    %1335 = vmatpush1.msra.mxu0 0.0
    %1336 = vmatprep.subr.mxu0 0.0
    %1337 = vmatpush1.msra.mxu0 0.0
    %1338 = vmatprep.subr.mxu0 0.0
    %1339 = vmatpush1.msra.mxu0 0.0
    %1340 = vmatprep.subr.mxu0 0.0
    %1341 = vmatpush1.msra.mxu0 0.0
    %1342 = vmatprep.subr.mxu0 0.0
    %1343 = vmatpush1.msra.mxu0 0.0
    %1344 = vmatprep.subr.mxu0 0.0
    %1345 = vmatpush1.msra.mxu0 0.0
    %1346 = vmatprep.subr.mxu0 0.0
    %1347 = vmatpush1.msra.mxu0 0.0
    %1348 = vmatprep.subr.mxu0 0.0
    %1349 = vmatpush1.msra.mxu0 0.0
    %1350 = vmatprep.subr.mxu0 0.0
    %1351 = vmatpush1.msra.mxu0 0.0
    %1352 = vmatprep.subr.mxu0 0.0
    %1353 = vmatpush1.msra.mxu0 0.0
    %1354 = vmatprep.subr.mxu0 0.0
    %1355 = vmatpush1.msra.mxu0 0.0
    %1356 = vmatprep.subr.mxu0 0.0
    %1357 = vmatpush1.msra.mxu0 0.0
    %1358 = vmatprep.subr.mxu0 0.0
    %1359 = vmatpush1.msra.mxu0 0.0
    %1360 = vmatprep.subr.mxu0 0.0
    %1361 = vmatpush1.msra.mxu0 0.0
    %1362 = vmatprep.subr.mxu0 0.0
    %1363 = vmatpush1.msra.mxu0 0.0
    %1364 = vmatprep.subr.mxu0 0.0
    %1365 = vmatpush1.msra.mxu0 0.0
    %1366 = vmatprep.mubr.f32.mxu0 0.0
    %1367 = vmatmul.mubr.f32.gmra.mrb[0].mxu0 %v1300
    %v1368 = vpop.f32.mrb[0].mxu0
    %v1369 = vadd.f32 %v767, %v1368
    %v1370 = vpop.f32.mrb[0].mxu0
    %1371 = vdwg.mxu0
    %v1372 = vadd.f32 %v605, %v1369
    %v1373 = vxor.u32 %v1372, 2147483648
    %v1374 = vmul.f32 %v1373, 1.442695
    %v1375 = vpow.pop %v1374
    %v1376 = vadd.f32 %v1375, 1.0
    %v1377 = vrcp.pop %v1376
    %v1378 = vmul.f32 1.0, %v1377
    %1380 = vrot.lane.b32.xlu0 %v1369, 64
    %v1381 = vpop.permute.xlu0 %1380
    %v1383 = vmul.f32 %v1378, %v1381
    %1385 = vrot.lane.b32.xlu0 %v1383, 64
    %v1386 = vpop.permute.xlu0 %1385
    %v1388 = vadd.f32 %v605, %v1386
    %v1389 = vtanh.pop %v1388
    %v1390 = vsub.f32 %v1294, %v1389
    %1392 = vrot.lane.b32.xlu0 %v1390, 96
    %v1393 = vpop.permute.xlu0 %1392
    %v1395 = vmul.f32 %v1378, %v1393
    %1397 = vrot.lane.b32.xlu0 %v1395, 32
    %v1398 = vpop.permute.xlu0 %1397
    %v1400 = vadd.f32 %v1389, %v1398
    %1402 = vrot.lane.b32.xlu0 %v1400, 64
    %v1403 = vpop.permute.xlu0 %1402
    %1405 = vst.msk [vmem:[#allocation2 + $0x28] sm:$0xff] %vm488, %v1403
    %v1406 = vsel %vm488, %v1403, 0
    %1408 = vmatprep.subr.mxu0 0.0
    %1409 = vmatpush1.msra.mxu0 %v758
    %1410 = vmatprep.subr.mxu0 0.0
    %1411 = vmatpush1.msra.mxu0 %v759
    %1412 = vmatprep.subr.mxu0 0.0
    %1413 = vmatpush1.msra.mxu0 %v760
    %1414 = vmatprep.subr.mxu0 0.0
    %1415 = vmatpush1.msra.mxu0 %v761
    %1416 = vmatprep.subr.mxu0 0.0
    %1417 = vmatpush1.msra.mxu0 0.0
    %1418 = vmatprep.subr.mxu0 0.0
    %1419 = vmatpush1.msra.mxu0 0.0
    %1420 = vmatprep.subr.mxu0 0.0
    %1421 = vmatpush1.msra.mxu0 0.0
    %1422 = vmatprep.subr.mxu0 0.0
    %1423 = vmatpush1.msra.mxu0 0.0
    %1424 = vmatprep.subr.mxu0 0.0
    %1425 = vmatpush1.msra.mxu0 0.0
    %1426 = vmatprep.subr.mxu0 0.0
    %1427 = vmatpush1.msra.mxu0 0.0
    %1428 = vmatprep.subr.mxu0 0.0
    %1429 = vmatpush1.msra.mxu0 0.0
    %1430 = vmatprep.subr.mxu0 0.0
    %1431 = vmatpush1.msra.mxu0 0.0
    %1432 = vmatprep.subr.mxu0 0.0
    %1433 = vmatpush1.msra.mxu0 0.0
    %1434 = vmatprep.subr.mxu0 0.0
    %1435 = vmatpush1.msra.mxu0 0.0
    %1436 = vmatprep.subr.mxu0 0.0
    %1437 = vmatpush1.msra.mxu0 0.0
    %1438 = vmatprep.subr.mxu0 0.0
    %1439 = vmatpush1.msra.mxu0 0.0
    %1440 = vmatprep.subr.mxu0 0.0
    %1441 = vmatpush1.msra.mxu0 0.0
    %1442 = vmatprep.subr.mxu0 0.0
    %1443 = vmatpush1.msra.mxu0 0.0
    %1444 = vmatprep.subr.mxu0 0.0
    %1445 = vmatpush1.msra.mxu0 0.0
    %1446 = vmatprep.subr.mxu0 0.0
    %1447 = vmatpush1.msra.mxu0 0.0
    %1448 = vmatprep.subr.mxu0 0.0
    %1449 = vmatpush1.msra.mxu0 0.0
    %1450 = vmatprep.subr.mxu0 0.0
    %1451 = vmatpush1.msra.mxu0 0.0
    %1452 = vmatprep.subr.mxu0 0.0
    %1453 = vmatpush1.msra.mxu0 0.0
    %1454 = vmatprep.subr.mxu0 0.0
    %1455 = vmatpush1.msra.mxu0 0.0
    %1456 = vmatprep.subr.mxu0 0.0
    %1457 = vmatpush1.msra.mxu0 0.0
    %1458 = vmatprep.subr.mxu0 0.0
    %1459 = vmatpush1.msra.mxu0 0.0
    %1460 = vmatprep.subr.mxu0 0.0
    %1461 = vmatpush1.msra.mxu0 0.0
    %1462 = vmatprep.subr.mxu0 0.0
    %1463 = vmatpush1.msra.mxu0 0.0
    %1464 = vmatprep.subr.mxu0 0.0
    %1465 = vmatpush1.msra.mxu0 0.0
    %1466 = vmatprep.subr.mxu0 0.0
    %1467 = vmatpush1.msra.mxu0 0.0
    %1468 = vmatprep.subr.mxu0 0.0
    %1469 = vmatpush1.msra.mxu0 0.0
    %1470 = vmatprep.subr.mxu0 0.0
    %1471 = vmatpush1.msra.mxu0 0.0
    %1472 = vmatprep.mubr.f32.mxu0 0.0
    %1473 = vmatmul.mubr.f32.gmra.mrb[0].mxu0 %v1406
    %v1474 = vpop.f32.mrb[0].mxu0
    %v1475 = vadd.f32 %v767, %v1474
    %v1476 = vpop.f32.mrb[0].mxu0
    %1477 = vdwg.mxu0
    %v1478 = vadd.f32 %v610, %v1475
    %v1479 = vxor.u32 %v1478, 2147483648
    %v1480 = vmul.f32 %v1479, 1.442695
    %v1481 = vpow.pop %v1480
    %v1482 = vadd.f32 %v1481, 1.0
    %v1483 = vrcp.pop %v1482
    %v1484 = vmul.f32 1.0, %v1483
    %1486 = vrot.lane.b32.xlu0 %v1475, 64
    %v1487 = vpop.permute.xlu0 %1486
    %v1489 = vmul.f32 %v1484, %v1487
    %1491 = vrot.lane.b32.xlu0 %v1489, 64
    %v1492 = vpop.permute.xlu0 %1491
    %v1494 = vadd.f32 %v610, %v1492
    %v1495 = vtanh.pop %v1494
    %v1496 = vsub.f32 %v1400, %v1495
    %1498 = vrot.lane.b32.xlu0 %v1496, 96
    %v1499 = vpop.permute.xlu0 %1498
    %v1501 = vmul.f32 %v1484, %v1499
    %1503 = vrot.lane.b32.xlu0 %v1501, 32
    %v1504 = vpop.permute.xlu0 %1503
    %v1506 = vadd.f32 %v1495, %v1504
    %1508 = vrot.lane.b32.xlu0 %v1506, 64
    %v1509 = vpop.permute.xlu0 %1508
    %1511 = vst.msk [vmem:[#allocation2 + $0x30] sm:$0xff] %vm488, %v1509
    %v1512 = vsel %vm488, %v1509, 0
    %1514 = vmatprep.subr.mxu0 0.0
    %1515 = vmatpush1.msra.mxu0 %v758
    %1516 = vmatprep.subr.mxu0 0.0
    %1517 = vmatpush1.msra.mxu0 %v759
    %1518 = vmatprep.subr.mxu0 0.0
    %1519 = vmatpush1.msra.mxu0 %v760
    %1520 = vmatprep.subr.mxu0 0.0
    %1521 = vmatpush1.msra.mxu0 %v761
    %1522 = vmatprep.subr.mxu0 0.0
    %1523 = vmatpush1.msra.mxu0 0.0
    %1524 = vmatprep.subr.mxu0 0.0
    %1525 = vmatpush1.msra.mxu0 0.0
    %1526 = vmatprep.subr.mxu0 0.0
    %1527 = vmatpush1.msra.mxu0 0.0
    %1528 = vmatprep.subr.mxu0 0.0
    %1529 = vmatpush1.msra.mxu0 0.0
    %1530 = vmatprep.subr.mxu0 0.0
    %1531 = vmatpush1.msra.mxu0 0.0
    %1532 = vmatprep.subr.mxu0 0.0
    %1533 = vmatpush1.msra.mxu0 0.0
    %1534 = vmatprep.subr.mxu0 0.0
    %1535 = vmatpush1.msra.mxu0 0.0
    %1536 = vmatprep.subr.mxu0 0.0
    %1537 = vmatpush1.msra.mxu0 0.0
    %1538 = vmatprep.subr.mxu0 0.0
    %1539 = vmatpush1.msra.mxu0 0.0
    %1540 = vmatprep.subr.mxu0 0.0
    %1541 = vmatpush1.msra.mxu0 0.0
    %1542 = vmatprep.subr.mxu0 0.0
    %1543 = vmatpush1.msra.mxu0 0.0
    %1544 = vmatprep.subr.mxu0 0.0
    %1545 = vmatpush1.msra.mxu0 0.0
    %1546 = vmatprep.subr.mxu0 0.0
    %1547 = vmatpush1.msra.mxu0 0.0
    %1548 = vmatprep.subr.mxu0 0.0
    %1549 = vmatpush1.msra.mxu0 0.0
    %1550 = vmatprep.subr.mxu0 0.0
    %1551 = vmatpush1.msra.mxu0 0.0
    %1552 = vmatprep.subr.mxu0 0.0
    %1553 = vmatpush1.msra.mxu0 0.0
    %1554 = vmatprep.subr.mxu0 0.0
    %1555 = vmatpush1.msra.mxu0 0.0
    %1556 = vmatprep.subr.mxu0 0.0
    %1557 = vmatpush1.msra.mxu0 0.0
    %1558 = vmatprep.subr.mxu0 0.0
    %1559 = vmatpush1.msra.mxu0 0.0
    %1560 = vmatprep.subr.mxu0 0.0
    %1561 = vmatpush1.msra.mxu0 0.0
    %1562 = vmatprep.subr.mxu0 0.0
    %1563 = vmatpush1.msra.mxu0 0.0
    %1564 = vmatprep.subr.mxu0 0.0
    %1565 = vmatpush1.msra.mxu0 0.0
    %1566 = vmatprep.subr.mxu0 0.0
    %1567 = vmatpush1.msra.mxu0 0.0
    %1568 = vmatprep.subr.mxu0 0.0
    %1569 = vmatpush1.msra.mxu0 0.0
    %1570 = vmatprep.subr.mxu0 0.0
    %1571 = vmatpush1.msra.mxu0 0.0
    %1572 = vmatprep.subr.mxu0 0.0
    %1573 = vmatpush1.msra.mxu0 0.0
    %1574 = vmatprep.subr.mxu0 0.0
    %1575 = vmatpush1.msra.mxu0 0.0
    %1576 = vmatprep.subr.mxu0 0.0
    %1577 = vmatpush1.msra.mxu0 0.0
    %1578 = vmatprep.mubr.f32.mxu0 0.0
    %1579 = vmatmul.mubr.f32.gmra.mrb[0].mxu0 %v1512
    %v1580 = vpop.f32.mrb[0].mxu0
    %v1581 = vadd.f32 %v767, %v1580
    %v1582 = vpop.f32.mrb[0].mxu0
    %1583 = vdwg.mxu0
    %v1584 = vadd.f32 %v615, %v1581
    %v1585 = vxor.u32 %v1584, 2147483648
    %v1586 = vmul.f32 %v1585, 1.442695
    %v1587 = vpow.pop %v1586
    %v1588 = vadd.f32 %v1587, 1.0
    %v1589 = vrcp.pop %v1588
    %v1590 = vmul.f32 1.0, %v1589
    %1592 = vrot.lane.b32.xlu0 %v1581, 64
    %v1593 = vpop.permute.xlu0 %1592
    %v1595 = vmul.f32 %v1590, %v1593
    %1597 = vrot.lane.b32.xlu0 %v1595, 64
    %v1598 = vpop.permute.xlu0 %1597
    %v1600 = vadd.f32 %v615, %v1598
    %v1601 = vtanh.pop %v1600
    %v1602 = vsub.f32 %v1506, %v1601
    %1604 = vrot.lane.b32.xlu0 %v1602, 96
    %v1605 = vpop.permute.xlu0 %1604
    %v1607 = vmul.f32 %v1590, %v1605
    %1609 = vrot.lane.b32.xlu0 %v1607, 32
    %v1610 = vpop.permute.xlu0 %1609
    %v1612 = vadd.f32 %v1601, %v1610
    %1614 = vrot.lane.b32.xlu0 %v1612, 64
    %v1615 = vpop.permute.xlu0 %1614
    %1617 = vst.msk [vmem:[#allocation2 + $0x38] sm:$0xff] %vm488, %v1615
    %v1618 = vld [vmem:[%s9] sm:$0xff]
    %v1619 = vld [vmem:[%s9 + $0x8] sm:$0xff]
    %v1620 = vld [vmem:[%s9 + $0x10] sm:$0xff]
    %v1621 = vld [vmem:[%s9 + $0x18] sm:$0xff]
    %v1622 = vld [vmem:[#allocation6] sm:$0x1]
    %v1624 = vlaneseq
    %v1625 = vshrl.u32 %v1624, 7
    %v1626 = vsub.s32 0, %v1625
    %v1627 = vrot.slane %v1622, %v1626
    %v1629 = vsel %vm488, %v1615, 0
    %1631 = vmatprep.subr.mxu0 0.0
    %1632 = vmatpush1.msra.mxu0 %v1618
    %1633 = vmatprep.subr.mxu0 0.0
    %1634 = vmatpush1.msra.mxu0 %v1619
    %1635 = vmatprep.subr.mxu0 0.0
    %1636 = vmatpush1.msra.mxu0 %v1620
    %1637 = vmatprep.subr.mxu0 0.0
    %1638 = vmatpush1.msra.mxu0 %v1621
    %1639 = vmatprep.subr.mxu0 0.0
    %1640 = vmatpush1.msra.mxu0 0.0
    %1641 = vmatprep.subr.mxu0 0.0
    %1642 = vmatpush1.msra.mxu0 0.0
    %1643 = vmatprep.subr.mxu0 0.0
    %1644 = vmatpush1.msra.mxu0 0.0
    %1645 = vmatprep.subr.mxu0 0.0
    %1646 = vmatpush1.msra.mxu0 0.0
    %1647 = vmatprep.subr.mxu0 0.0
    %1648 = vmatpush1.msra.mxu0 0.0
    %1649 = vmatprep.subr.mxu0 0.0
    %1650 = vmatpush1.msra.mxu0 0.0
    %1651 = vmatprep.subr.mxu0 0.0
    %1652 = vmatpush1.msra.mxu0 0.0
    %1653 = vmatprep.subr.mxu0 0.0
    %1654 = vmatpush1.msra.mxu0 0.0
    %1655 = vmatprep.subr.mxu0 0.0
    %1656 = vmatpush1.msra.mxu0 0.0
    %1657 = vmatprep.subr.mxu0 0.0
    %1658 = vmatpush1.msra.mxu0 0.0
    %1659 = vmatprep.subr.mxu0 0.0
    %1660 = vmatpush1.msra.mxu0 0.0
    %1661 = vmatprep.subr.mxu0 0.0
    %1662 = vmatpush1.msra.mxu0 0.0
    %1663 = vmatprep.subr.mxu0 0.0
    %1664 = vmatpush1.msra.mxu0 0.0
    %1665 = vmatprep.subr.mxu0 0.0
    %1666 = vmatpush1.msra.mxu0 0.0
    %1667 = vmatprep.subr.mxu0 0.0
    %1668 = vmatpush1.msra.mxu0 0.0
    %1669 = vmatprep.subr.mxu0 0.0
    %1670 = vmatpush1.msra.mxu0 0.0
    %1671 = vmatprep.subr.mxu0 0.0
    %1672 = vmatpush1.msra.mxu0 0.0
    %1673 = vmatprep.subr.mxu0 0.0
    %1674 = vmatpush1.msra.mxu0 0.0
    %1675 = vmatprep.subr.mxu0 0.0
    %1676 = vmatpush1.msra.mxu0 0.0
    %1677 = vmatprep.subr.mxu0 0.0
    %1678 = vmatpush1.msra.mxu0 0.0
    %1679 = vmatprep.subr.mxu0 0.0
    %1680 = vmatpush1.msra.mxu0 0.0
    %1681 = vmatprep.subr.mxu0 0.0
    %1682 = vmatpush1.msra.mxu0 0.0
    %1683 = vmatprep.subr.mxu0 0.0
    %1684 = vmatpush1.msra.mxu0 0.0
    %1685 = vmatprep.subr.mxu0 0.0
    %1686 = vmatpush1.msra.mxu0 0.0
    %1687 = vmatprep.subr.mxu0 0.0
    %1688 = vmatpush1.msra.mxu0 0.0
    %1689 = vmatprep.subr.mxu0 0.0
    %1690 = vmatpush1.msra.mxu0 0.0
    %1691 = vmatprep.subr.mxu0 0.0
    %1692 = vmatpush1.msra.mxu0 0.0
    %1693 = vmatprep.subr.mxu0 0.0
    %1694 = vmatpush1.msra.mxu0 0.0
    %1695 = vmatprep.mubr.f32.mxu0 0.0
    %1696 = vmatmul.mubr.f32.gmra.mrb[0].mxu0 %v1629
    %v1697 = vpop.f32.mrb[0].mxu0
    %v1698 = vadd.f32 %v1627, %v1697
    %v1699 = vpop.f32.mrb[0].mxu0
    %1700 = vdwg.mxu0
    %v1701 = vadd.f32 %v720, %v1698
    %v1702 = vxor.u32 %v1701, 2147483648
    %v1703 = vmul.f32 %v1702, 1.442695
    %v1704 = vpow.pop %v1703
    %v1705 = vadd.f32 %v1704, 1.0
    %v1706 = vrcp.pop %v1705
    %v1707 = vmul.f32 1.0, %v1706
    %1709 = vrot.lane.b32.xlu0 %v1698, 64
    %v1710 = vpop.permute.xlu0 %1709
    %v1712 = vmul.f32 %v1707, %v1710
    %1714 = vrot.lane.b32.xlu0 %v1712, 64
    %v1715 = vpop.permute.xlu0 %1714
    %v1717 = vadd.f32 %v720, %v1715
    %v1718 = vtanh.pop %v1717
    %v1719 = vsub.f32 %v1612, %v1718
    %1721 = vrot.lane.b32.xlu0 %v1719, 96
    %v1722 = vpop.permute.xlu0 %1721
    %v1724 = vmul.f32 %v1707, %v1722
    %1726 = vrot.lane.b32.xlu0 %v1724, 32
    %v1727 = vpop.permute.xlu0 %1726
    %v1729 = vadd.f32 %v1718, %v1727
    %1731 = vrot.lane.b32.xlu0 %v1729, 64
    %v1732 = vpop.permute.xlu0 %1731
    %1734 = vst.msk [vmem:[#allocation3] sm:$0xff] %vm488, %v1732
    %v1735 = vsel %vm488, %v1732, 0
    %1737 = vmatprep.subr.mxu0 0.0
    %1738 = vmatpush1.msra.mxu0 %v1618
    %1739 = vmatprep.subr.mxu0 0.0
    %1740 = vmatpush1.msra.mxu0 %v1619
    %1741 = vmatprep.subr.mxu0 0.0
    %1742 = vmatpush1.msra.mxu0 %v1620
    %1743 = vmatprep.subr.mxu0 0.0
    %1744 = vmatpush1.msra.mxu0 %v1621
    %1745 = vmatprep.subr.mxu0 0.0
    %1746 = vmatpush1.msra.mxu0 0.0
    %1747 = vmatprep.subr.mxu0 0.0
    %1748 = vmatpush1.msra.mxu0 0.0
    %1749 = vmatprep.subr.mxu0 0.0
    %1750 = vmatpush1.msra.mxu0 0.0
    %1751 = vmatprep.subr.mxu0 0.0
    %1752 = vmatpush1.msra.mxu0 0.0
    %1753 = vmatprep.subr.mxu0 0.0
    %1754 = vmatpush1.msra.mxu0 0.0
    %1755 = vmatprep.subr.mxu0 0.0
    %1756 = vmatpush1.msra.mxu0 0.0
    %1757 = vmatprep.subr.mxu0 0.0
    %1758 = vmatpush1.msra.mxu0 0.0
    %1759 = vmatprep.subr.mxu0 0.0
    %1760 = vmatpush1.msra.mxu0 0.0
    %1761 = vmatprep.subr.mxu0 0.0
    %1762 = vmatpush1.msra.mxu0 0.0
    %1763 = vmatprep.subr.mxu0 0.0
    %1764 = vmatpush1.msra.mxu0 0.0
    %1765 = vmatprep.subr.mxu0 0.0
    %1766 = vmatpush1.msra.mxu0 0.0
    %1767 = vmatprep.subr.mxu0 0.0
    %1768 = vmatpush1.msra.mxu0 0.0
    %1769 = vmatprep.subr.mxu0 0.0
    %1770 = vmatpush1.msra.mxu0 0.0
    %1771 = vmatprep.subr.mxu0 0.0
    %1772 = vmatpush1.msra.mxu0 0.0
    %1773 = vmatprep.subr.mxu0 0.0
    %1774 = vmatpush1.msra.mxu0 0.0
    %1775 = vmatprep.subr.mxu0 0.0
    %1776 = vmatpush1.msra.mxu0 0.0
    %1777 = vmatprep.subr.mxu0 0.0
    %1778 = vmatpush1.msra.mxu0 0.0
    %1779 = vmatprep.subr.mxu0 0.0
    %1780 = vmatpush1.msra.mxu0 0.0
    %1781 = vmatprep.subr.mxu0 0.0
    %1782 = vmatpush1.msra.mxu0 0.0
    %1783 = vmatprep.subr.mxu0 0.0
    %1784 = vmatpush1.msra.mxu0 0.0
    %1785 = vmatprep.subr.mxu0 0.0
    %1786 = vmatpush1.msra.mxu0 0.0
    %1787 = vmatprep.subr.mxu0 0.0
    %1788 = vmatpush1.msra.mxu0 0.0
    %1789 = vmatprep.subr.mxu0 0.0
    %1790 = vmatpush1.msra.mxu0 0.0
    %1791 = vmatprep.subr.mxu0 0.0
    %1792 = vmatpush1.msra.mxu0 0.0
    %1793 = vmatprep.subr.mxu0 0.0
    %1794 = vmatpush1.msra.mxu0 0.0
    %1795 = vmatprep.subr.mxu0 0.0
    %1796 = vmatpush1.msra.mxu0 0.0
    %1797 = vmatprep.subr.mxu0 0.0
    %1798 = vmatpush1.msra.mxu0 0.0
    %1799 = vmatprep.subr.mxu0 0.0
    %1800 = vmatpush1.msra.mxu0 0.0
    %1801 = vmatprep.mubr.f32.mxu0 0.0
    %1802 = vmatmul.mubr.f32.gmra.mrb[0].mxu0 %v1735
    %v1803 = vpop.f32.mrb[0].mxu0
    %v1804 = vadd.f32 %v1627, %v1803
    %v1805 = vpop.f32.mrb[0].mxu0
    %1806 = vdwg.mxu0
    %v1807 = vadd.f32 %v725, %v1804
    %v1808 = vxor.u32 %v1807, 2147483648
    %v1809 = vmul.f32 %v1808, 1.442695
    %v1810 = vpow.pop %v1809
    %v1811 = vadd.f32 %v1810, 1.0
    %v1812 = vrcp.pop %v1811
    %v1813 = vmul.f32 1.0, %v1812
    %1815 = vrot.lane.b32.xlu0 %v1804, 64
    %v1816 = vpop.permute.xlu0 %1815
    %v1818 = vmul.f32 %v1813, %v1816
    %1820 = vrot.lane.b32.xlu0 %v1818, 64
    %v1821 = vpop.permute.xlu0 %1820
    %v1823 = vadd.f32 %v725, %v1821
    %v1824 = vtanh.pop %v1823
    %v1825 = vsub.f32 %v1729, %v1824
    %1827 = vrot.lane.b32.xlu0 %v1825, 96
    %v1828 = vpop.permute.xlu0 %1827
    %v1830 = vmul.f32 %v1813, %v1828
    %1832 = vrot.lane.b32.xlu0 %v1830, 32
    %v1833 = vpop.permute.xlu0 %1832
    %v1835 = vadd.f32 %v1824, %v1833
    %1837 = vrot.lane.b32.xlu0 %v1835, 64
    %v1838 = vpop.permute.xlu0 %1837
    %1840 = vst.msk [vmem:[#allocation3 + $0x8] sm:$0xff] %vm488, %v1838
    %v1841 = vsel %vm488, %v1838, 0
    %1843 = vmatprep.subr.mxu0 0.0
    %1844 = vmatpush1.msra.mxu0 %v1618
    %1845 = vmatprep.subr.mxu0 0.0
    %1846 = vmatpush1.msra.mxu0 %v1619
    %1847 = vmatprep.subr.mxu0 0.0
    %1848 = vmatpush1.msra.mxu0 %v1620
    %1849 = vmatprep.subr.mxu0 0.0
    %1850 = vmatpush1.msra.mxu0 %v1621
    %1851 = vmatprep.subr.mxu0 0.0
    %1852 = vmatpush1.msra.mxu0 0.0
    %1853 = vmatprep.subr.mxu0 0.0
    %1854 = vmatpush1.msra.mxu0 0.0
    %1855 = vmatprep.subr.mxu0 0.0
    %1856 = vmatpush1.msra.mxu0 0.0
    %1857 = vmatprep.subr.mxu0 0.0
    %1858 = vmatpush1.msra.mxu0 0.0
    %1859 = vmatprep.subr.mxu0 0.0
    %1860 = vmatpush1.msra.mxu0 0.0
    %1861 = vmatprep.subr.mxu0 0.0
    %1862 = vmatpush1.msra.mxu0 0.0
    %1863 = vmatprep.subr.mxu0 0.0
    %1864 = vmatpush1.msra.mxu0 0.0
    %1865 = vmatprep.subr.mxu0 0.0
    %1866 = vmatpush1.msra.mxu0 0.0
    %1867 = vmatprep.subr.mxu0 0.0
    %1868 = vmatpush1.msra.mxu0 0.0
    %1869 = vmatprep.subr.mxu0 0.0
    %1870 = vmatpush1.msra.mxu0 0.0
    %1871 = vmatprep.subr.mxu0 0.0
    %1872 = vmatpush1.msra.mxu0 0.0
    %1873 = vmatprep.subr.mxu0 0.0
    %1874 = vmatpush1.msra.mxu0 0.0
    %1875 = vmatprep.subr.mxu0 0.0
    %1876 = vmatpush1.msra.mxu0 0.0
    %1877 = vmatprep.subr.mxu0 0.0
    %1878 = vmatpush1.msra.mxu0 0.0
    %1879 = vmatprep.subr.mxu0 0.0
    %1880 = vmatpush1.msra.mxu0 0.0
    %1881 = vmatprep.subr.mxu0 0.0
    %1882 = vmatpush1.msra.mxu0 0.0
    %1883 = vmatprep.subr.mxu0 0.0
    %1884 = vmatpush1.msra.mxu0 0.0
    %1885 = vmatprep.subr.mxu0 0.0
    %1886 = vmatpush1.msra.mxu0 0.0
    %1887 = vmatprep.subr.mxu0 0.0
    %1888 = vmatpush1.msra.mxu0 0.0
    %1889 = vmatprep.subr.mxu0 0.0
    %1890 = vmatpush1.msra.mxu0 0.0
    %1891 = vmatprep.subr.mxu0 0.0
    %1892 = vmatpush1.msra.mxu0 0.0
    %1893 = vmatprep.subr.mxu0 0.0
    %1894 = vmatpush1.msra.mxu0 0.0
    %1895 = vmatprep.subr.mxu0 0.0
    %1896 = vmatpush1.msra.mxu0 0.0
    %1897 = vmatprep.subr.mxu0 0.0
    %1898 = vmatpush1.msra.mxu0 0.0
    %1899 = vmatprep.subr.mxu0 0.0
    %1900 = vmatpush1.msra.mxu0 0.0
    %1901 = vmatprep.subr.mxu0 0.0
    %1902 = vmatpush1.msra.mxu0 0.0
    %1903 = vmatprep.subr.mxu0 0.0
    %1904 = vmatpush1.msra.mxu0 0.0
    %1905 = vmatprep.subr.mxu0 0.0
    %1906 = vmatpush1.msra.mxu0 0.0
    %1907 = vmatprep.mubr.f32.mxu0 0.0
    %1908 = vmatmul.mubr.f32.gmra.mrb[0].mxu0 %v1841
    %v1909 = vpop.f32.mrb[0].mxu0
    %v1910 = vadd.f32 %v1627, %v1909
    %v1911 = vpop.f32.mrb[0].mxu0
    %1912 = vdwg.mxu0
    %v1913 = vadd.f32 %v730, %v1910
    %v1914 = vxor.u32 %v1913, 2147483648
    %v1915 = vmul.f32 %v1914, 1.442695
    %v1916 = vpow.pop %v1915
    %v1917 = vadd.f32 %v1916, 1.0
    %v1918 = vrcp.pop %v1917
    %v1919 = vmul.f32 1.0, %v1918
    %1921 = vrot.lane.b32.xlu0 %v1910, 64
    %v1922 = vpop.permute.xlu0 %1921
    %v1924 = vmul.f32 %v1919, %v1922
    %1926 = vrot.lane.b32.xlu0 %v1924, 64
    %v1927 = vpop.permute.xlu0 %1926
    %v1929 = vadd.f32 %v730, %v1927
    %v1930 = vtanh.pop %v1929
    %v1931 = vsub.f32 %v1835, %v1930
    %1933 = vrot.lane.b32.xlu0 %v1931, 96
    %v1934 = vpop.permute.xlu0 %1933
    %v1936 = vmul.f32 %v1919, %v1934
    %1938 = vrot.lane.b32.xlu0 %v1936, 32
    %v1939 = vpop.permute.xlu0 %1938
    %v1941 = vadd.f32 %v1930, %v1939
    %1943 = vrot.lane.b32.xlu0 %v1941, 64
    %v1944 = vpop.permute.xlu0 %1943
    %1946 = vst.msk [vmem:[#allocation3 + $0x10] sm:$0xff] %vm488, %v1944
    %v1947 = vsel %vm488, %v1944, 0
    %1949 = vmatprep.subr.mxu0 0.0
    %1950 = vmatpush1.msra.mxu0 %v1618
    %1951 = vmatprep.subr.mxu0 0.0
    %1952 = vmatpush1.msra.mxu0 %v1619
    %1953 = vmatprep.subr.mxu0 0.0
    %1954 = vmatpush1.msra.mxu0 %v1620
    %1955 = vmatprep.subr.mxu0 0.0
    %1956 = vmatpush1.msra.mxu0 %v1621
    %1957 = vmatprep.subr.mxu0 0.0
    %1958 = vmatpush1.msra.mxu0 0.0
    %1959 = vmatprep.subr.mxu0 0.0
    %1960 = vmatpush1.msra.mxu0 0.0
    %1961 = vmatprep.subr.mxu0 0.0
    %1962 = vmatpush1.msra.mxu0 0.0
    %1963 = vmatprep.subr.mxu0 0.0
    %1964 = vmatpush1.msra.mxu0 0.0
    %1965 = vmatprep.subr.mxu0 0.0
    %1966 = vmatpush1.msra.mxu0 0.0
    %1967 = vmatprep.subr.mxu0 0.0
    %1968 = vmatpush1.msra.mxu0 0.0
    %1969 = vmatprep.subr.mxu0 0.0
    %1970 = vmatpush1.msra.mxu0 0.0
    %1971 = vmatprep.subr.mxu0 0.0
    %1972 = vmatpush1.msra.mxu0 0.0
    %1973 = vmatprep.subr.mxu0 0.0
    %1974 = vmatpush1.msra.mxu0 0.0
    %1975 = vmatprep.subr.mxu0 0.0
    %1976 = vmatpush1.msra.mxu0 0.0
    %1977 = vmatprep.subr.mxu0 0.0
    %1978 = vmatpush1.msra.mxu0 0.0
    %1979 = vmatprep.subr.mxu0 0.0
    %1980 = vmatpush1.msra.mxu0 0.0
    %1981 = vmatprep.subr.mxu0 0.0
    %1982 = vmatpush1.msra.mxu0 0.0
    %1983 = vmatprep.subr.mxu0 0.0
    %1984 = vmatpush1.msra.mxu0 0.0
    %1985 = vmatprep.subr.mxu0 0.0
    %1986 = vmatpush1.msra.mxu0 0.0
    %1987 = vmatprep.subr.mxu0 0.0
    %1988 = vmatpush1.msra.mxu0 0.0
    %1989 = vmatprep.subr.mxu0 0.0
    %1990 = vmatpush1.msra.mxu0 0.0
    %1991 = vmatprep.subr.mxu0 0.0
    %1992 = vmatpush1.msra.mxu0 0.0
    %1993 = vmatprep.subr.mxu0 0.0
    %1994 = vmatpush1.msra.mxu0 0.0
    %1995 = vmatprep.subr.mxu0 0.0
    %1996 = vmatpush1.msra.mxu0 0.0
    %1997 = vmatprep.subr.mxu0 0.0
    %1998 = vmatpush1.msra.mxu0 0.0
    %1999 = vmatprep.subr.mxu0 0.0
    %2000 = vmatpush1.msra.mxu0 0.0
    %2001 = vmatprep.subr.mxu0 0.0
    %2002 = vmatpush1.msra.mxu0 0.0
    %2003 = vmatprep.subr.mxu0 0.0
    %2004 = vmatpush1.msra.mxu0 0.0
    %2005 = vmatprep.subr.mxu0 0.0
    %2006 = vmatpush1.msra.mxu0 0.0
    %2007 = vmatprep.subr.mxu0 0.0
    %2008 = vmatpush1.msra.mxu0 0.0
    %2009 = vmatprep.subr.mxu0 0.0
    %2010 = vmatpush1.msra.mxu0 0.0
    %2011 = vmatprep.subr.mxu0 0.0
    %2012 = vmatpush1.msra.mxu0 0.0
    %2013 = vmatprep.mubr.f32.mxu0 0.0
    %2014 = vmatmul.mubr.f32.gmra.mrb[0].mxu0 %v1947
    %v2015 = vpop.f32.mrb[0].mxu0
    %v2016 = vadd.f32 %v1627, %v2015
    %v2017 = vpop.f32.mrb[0].mxu0
    %2018 = vdwg.mxu0
    %v2019 = vadd.f32 %v735, %v2016
    %v2020 = vxor.u32 %v2019, 2147483648
    %v2021 = vmul.f32 %v2020, 1.442695
    %v2022 = vpow.pop %v2021
    %v2023 = vadd.f32 %v2022, 1.0
    %v2024 = vrcp.pop %v2023
    %v2025 = vmul.f32 1.0, %v2024
    %2027 = vrot.lane.b32.xlu0 %v2016, 64
    %v2028 = vpop.permute.xlu0 %2027
    %v2030 = vmul.f32 %v2025, %v2028
    %2032 = vrot.lane.b32.xlu0 %v2030, 64
    %v2033 = vpop.permute.xlu0 %2032
    %v2035 = vadd.f32 %v735, %v2033
    %v2036 = vtanh.pop %v2035
    %v2037 = vsub.f32 %v1941, %v2036
    %2039 = vrot.lane.b32.xlu0 %v2037, 96
    %v2040 = vpop.permute.xlu0 %2039
    %v2042 = vmul.f32 %v2025, %v2040
    %2044 = vrot.lane.b32.xlu0 %v2042, 32
    %v2045 = vpop.permute.xlu0 %2044
    %v2047 = vadd.f32 %v2036, %v2045
    %2049 = vrot.lane.b32.xlu0 %v2047, 64
    %v2050 = vpop.permute.xlu0 %2049
    %2052 = vst.msk [vmem:[#allocation3 + $0x18] sm:$0xff] %vm488, %v2050
    %v2053 = vsel %vm488, %v2050, 0
    %2055 = vmatprep.subr.mxu0 0.0
    %2056 = vmatpush1.msra.mxu0 %v1618
    %2057 = vmatprep.subr.mxu0 0.0
    %2058 = vmatpush1.msra.mxu0 %v1619
    %2059 = vmatprep.subr.mxu0 0.0
    %2060 = vmatpush1.msra.mxu0 %v1620
    %2061 = vmatprep.subr.mxu0 0.0
    %2062 = vmatpush1.msra.mxu0 %v1621
    %2063 = vmatprep.subr.mxu0 0.0
    %2064 = vmatpush1.msra.mxu0 0.0
    %2065 = vmatprep.subr.mxu0 0.0
    %2066 = vmatpush1.msra.mxu0 0.0
    %2067 = vmatprep.subr.mxu0 0.0
    %2068 = vmatpush1.msra.mxu0 0.0
    %2069 = vmatprep.subr.mxu0 0.0
    %2070 = vmatpush1.msra.mxu0 0.0
    %2071 = vmatprep.subr.mxu0 0.0
    %2072 = vmatpush1.msra.mxu0 0.0
    %2073 = vmatprep.subr.mxu0 0.0
    %2074 = vmatpush1.msra.mxu0 0.0
    %2075 = vmatprep.subr.mxu0 0.0
    %2076 = vmatpush1.msra.mxu0 0.0
    %2077 = vmatprep.subr.mxu0 0.0
    %2078 = vmatpush1.msra.mxu0 0.0
    %2079 = vmatprep.subr.mxu0 0.0
    %2080 = vmatpush1.msra.mxu0 0.0
    %2081 = vmatprep.subr.mxu0 0.0
    %2082 = vmatpush1.msra.mxu0 0.0
    %2083 = vmatprep.subr.mxu0 0.0
    %2084 = vmatpush1.msra.mxu0 0.0
    %2085 = vmatprep.subr.mxu0 0.0
    %2086 = vmatpush1.msra.mxu0 0.0
    %2087 = vmatprep.subr.mxu0 0.0
    %2088 = vmatpush1.msra.mxu0 0.0
    %2089 = vmatprep.subr.mxu0 0.0
    %2090 = vmatpush1.msra.mxu0 0.0
    %2091 = vmatprep.subr.mxu0 0.0
    %2092 = vmatpush1.msra.mxu0 0.0
    %2093 = vmatprep.subr.mxu0 0.0
    %2094 = vmatpush1.msra.mxu0 0.0
    %2095 = vmatprep.subr.mxu0 0.0
    %2096 = vmatpush1.msra.mxu0 0.0
    %2097 = vmatprep.subr.mxu0 0.0
    %2098 = vmatpush1.msra.mxu0 0.0
    %2099 = vmatprep.subr.mxu0 0.0
    %2100 = vmatpush1.msra.mxu0 0.0
    %2101 = vmatprep.subr.mxu0 0.0
    %2102 = vmatpush1.msra.mxu0 0.0
    %2103 = vmatprep.subr.mxu0 0.0
    %2104 = vmatpush1.msra.mxu0 0.0
    %2105 = vmatprep.subr.mxu0 0.0
    %2106 = vmatpush1.msra.mxu0 0.0
    %2107 = vmatprep.subr.mxu0 0.0
    %2108 = vmatpush1.msra.mxu0 0.0
    %2109 = vmatprep.subr.mxu0 0.0
    %2110 = vmatpush1.msra.mxu0 0.0
    %2111 = vmatprep.subr.mxu0 0.0
    %2112 = vmatpush1.msra.mxu0 0.0
    %2113 = vmatprep.subr.mxu0 0.0
    %2114 = vmatpush1.msra.mxu0 0.0
    %2115 = vmatprep.subr.mxu0 0.0
    %2116 = vmatpush1.msra.mxu0 0.0
    %2117 = vmatprep.subr.mxu0 0.0
    %2118 = vmatpush1.msra.mxu0 0.0
    %2119 = vmatprep.mubr.f32.mxu0 0.0
    %2120 = vmatmul.mubr.f32.gmra.mrb[0].mxu0 %v2053
    %v2121 = vpop.f32.mrb[0].mxu0
    %v2122 = vadd.f32 %v1627, %v2121
    %v2123 = vpop.f32.mrb[0].mxu0
    %2124 = vdwg.mxu0
    %v2125 = vadd.f32 %v740, %v2122
    %v2126 = vxor.u32 %v2125, 2147483648
    %v2127 = vmul.f32 %v2126, 1.442695
    %v2128 = vpow.pop %v2127
    %v2129 = vadd.f32 %v2128, 1.0
    %v2130 = vrcp.pop %v2129
    %v2131 = vmul.f32 1.0, %v2130
    %2133 = vrot.lane.b32.xlu0 %v2122, 64
    %v2134 = vpop.permute.xlu0 %2133
    %v2136 = vmul.f32 %v2131, %v2134
    %2138 = vrot.lane.b32.xlu0 %v2136, 64
    %v2139 = vpop.permute.xlu0 %2138
    %v2141 = vadd.f32 %v740, %v2139
    %v2142 = vtanh.pop %v2141
    %v2143 = vsub.f32 %v2047, %v2142
    %2145 = vrot.lane.b32.xlu0 %v2143, 96
    %v2146 = vpop.permute.xlu0 %2145
    %v2148 = vmul.f32 %v2131, %v2146
    %2150 = vrot.lane.b32.xlu0 %v2148, 32
    %v2151 = vpop.permute.xlu0 %2150
    %v2153 = vadd.f32 %v2142, %v2151
    %2155 = vrot.lane.b32.xlu0 %v2153, 64
    %v2156 = vpop.permute.xlu0 %2155
    %2158 = vst.msk [vmem:[#allocation3 + $0x20] sm:$0xff] %vm488, %v2156
    %v2159 = vsel %vm488, %v2156, 0
    %2161 = vmatprep.subr.mxu0 0.0
    %2162 = vmatpush1.msra.mxu0 %v1618
    %2163 = vmatprep.subr.mxu0 0.0
    %2164 = vmatpush1.msra.mxu0 %v1619
    %2165 = vmatprep.subr.mxu0 0.0
    %2166 = vmatpush1.msra.mxu0 %v1620
    %2167 = vmatprep.subr.mxu0 0.0
    %2168 = vmatpush1.msra.mxu0 %v1621
    %2169 = vmatprep.subr.mxu0 0.0
    %2170 = vmatpush1.msra.mxu0 0.0
    %2171 = vmatprep.subr.mxu0 0.0
    %2172 = vmatpush1.msra.mxu0 0.0
    %2173 = vmatprep.subr.mxu0 0.0
    %2174 = vmatpush1.msra.mxu0 0.0
    %2175 = vmatprep.subr.mxu0 0.0
    %2176 = vmatpush1.msra.mxu0 0.0
    %2177 = vmatprep.subr.mxu0 0.0
    %2178 = vmatpush1.msra.mxu0 0.0
    %2179 = vmatprep.subr.mxu0 0.0
    %2180 = vmatpush1.msra.mxu0 0.0
    %2181 = vmatprep.subr.mxu0 0.0
    %2182 = vmatpush1.msra.mxu0 0.0
    %2183 = vmatprep.subr.mxu0 0.0
    %2184 = vmatpush1.msra.mxu0 0.0
    %2185 = vmatprep.subr.mxu0 0.0
    %2186 = vmatpush1.msra.mxu0 0.0
    %2187 = vmatprep.subr.mxu0 0.0
    %2188 = vmatpush1.msra.mxu0 0.0
    %2189 = vmatprep.subr.mxu0 0.0
    %2190 = vmatpush1.msra.mxu0 0.0
    %2191 = vmatprep.subr.mxu0 0.0
    %2192 = vmatpush1.msra.mxu0 0.0
    %2193 = vmatprep.subr.mxu0 0.0
    %2194 = vmatpush1.msra.mxu0 0.0
    %2195 = vmatprep.subr.mxu0 0.0
    %2196 = vmatpush1.msra.mxu0 0.0
    %2197 = vmatprep.subr.mxu0 0.0
    %2198 = vmatpush1.msra.mxu0 0.0
    %2199 = vmatprep.subr.mxu0 0.0
    %2200 = vmatpush1.msra.mxu0 0.0
    %2201 = vmatprep.subr.mxu0 0.0
    %2202 = vmatpush1.msra.mxu0 0.0
    %2203 = vmatprep.subr.mxu0 0.0
    %2204 = vmatpush1.msra.mxu0 0.0
    %2205 = vmatprep.subr.mxu0 0.0
    %2206 = vmatpush1.msra.mxu0 0.0
    %2207 = vmatprep.subr.mxu0 0.0
    %2208 = vmatpush1.msra.mxu0 0.0
    %2209 = vmatprep.subr.mxu0 0.0
    %2210 = vmatpush1.msra.mxu0 0.0
    %2211 = vmatprep.subr.mxu0 0.0
    %2212 = vmatpush1.msra.mxu0 0.0
    %2213 = vmatprep.subr.mxu0 0.0
    %2214 = vmatpush1.msra.mxu0 0.0
    %2215 = vmatprep.subr.mxu0 0.0
    %2216 = vmatpush1.msra.mxu0 0.0
    %2217 = vmatprep.subr.mxu0 0.0
    %2218 = vmatpush1.msra.mxu0 0.0
    %2219 = vmatprep.subr.mxu0 0.0
    %2220 = vmatpush1.msra.mxu0 0.0
    %2221 = vmatprep.subr.mxu0 0.0
    %2222 = vmatpush1.msra.mxu0 0.0
    %2223 = vmatprep.subr.mxu0 0.0
    %2224 = vmatpush1.msra.mxu0 0.0
    %2225 = vmatprep.mubr.f32.mxu0 0.0
    %2226 = vmatmul.mubr.f32.gmra.mrb[0].mxu0 %v2159
    %v2227 = vpop.f32.mrb[0].mxu0
    %v2228 = vadd.f32 %v1627, %v2227
    %v2229 = vpop.f32.mrb[0].mxu0
    %2230 = vdwg.mxu0
    %v2231 = vadd.f32 %v745, %v2228
    %v2232 = vxor.u32 %v2231, 2147483648
    %v2233 = vmul.f32 %v2232, 1.442695
    %v2234 = vpow.pop %v2233
    %v2235 = vadd.f32 %v2234, 1.0
    %v2236 = vrcp.pop %v2235
    %v2237 = vmul.f32 1.0, %v2236
    %2239 = vrot.lane.b32.xlu0 %v2228, 64
    %v2240 = vpop.permute.xlu0 %2239
    %v2242 = vmul.f32 %v2237, %v2240
    %2244 = vrot.lane.b32.xlu0 %v2242, 64
    %v2245 = vpop.permute.xlu0 %2244
    %v2247 = vadd.f32 %v745, %v2245
    %v2248 = vtanh.pop %v2247
    %v2249 = vsub.f32 %v2153, %v2248
    %2251 = vrot.lane.b32.xlu0 %v2249, 96
    %v2252 = vpop.permute.xlu0 %2251
    %v2254 = vmul.f32 %v2237, %v2252
    %2256 = vrot.lane.b32.xlu0 %v2254, 32
    %v2257 = vpop.permute.xlu0 %2256
    %v2259 = vadd.f32 %v2248, %v2257
    %2261 = vrot.lane.b32.xlu0 %v2259, 64
    %v2262 = vpop.permute.xlu0 %2261
    %2264 = vst.msk [vmem:[#allocation3 + $0x28] sm:$0xff] %vm488, %v2262
    %v2265 = vsel %vm488, %v2262, 0
    %2267 = vmatprep.subr.mxu0 0.0
    %2268 = vmatpush1.msra.mxu0 %v1618
    %2269 = vmatprep.subr.mxu0 0.0
    %2270 = vmatpush1.msra.mxu0 %v1619
    %2271 = vmatprep.subr.mxu0 0.0
    %2272 = vmatpush1.msra.mxu0 %v1620
    %2273 = vmatprep.subr.mxu0 0.0
    %2274 = vmatpush1.msra.mxu0 %v1621
    %2275 = vmatprep.subr.mxu0 0.0
    %2276 = vmatpush1.msra.mxu0 0.0
    %2277 = vmatprep.subr.mxu0 0.0
    %2278 = vmatpush1.msra.mxu0 0.0
    %2279 = vmatprep.subr.mxu0 0.0
    %2280 = vmatpush1.msra.mxu0 0.0
    %2281 = vmatprep.subr.mxu0 0.0
    %2282 = vmatpush1.msra.mxu0 0.0
    %2283 = vmatprep.subr.mxu0 0.0
    %2284 = vmatpush1.msra.mxu0 0.0
    %2285 = vmatprep.subr.mxu0 0.0
    %2286 = vmatpush1.msra.mxu0 0.0
    %2287 = vmatprep.subr.mxu0 0.0
    %2288 = vmatpush1.msra.mxu0 0.0
    %2289 = vmatprep.subr.mxu0 0.0
    %2290 = vmatpush1.msra.mxu0 0.0
    %2291 = vmatprep.subr.mxu0 0.0
    %2292 = vmatpush1.msra.mxu0 0.0
    %2293 = vmatprep.subr.mxu0 0.0
    %2294 = vmatpush1.msra.mxu0 0.0
    %2295 = vmatprep.subr.mxu0 0.0
    %2296 = vmatpush1.msra.mxu0 0.0
    %2297 = vmatprep.subr.mxu0 0.0
    %2298 = vmatpush1.msra.mxu0 0.0
    %2299 = vmatprep.subr.mxu0 0.0
    %2300 = vmatpush1.msra.mxu0 0.0
    %2301 = vmatprep.subr.mxu0 0.0
    %2302 = vmatpush1.msra.mxu0 0.0
    %2303 = vmatprep.subr.mxu0 0.0
    %2304 = vmatpush1.msra.mxu0 0.0
    %2305 = vmatprep.subr.mxu0 0.0
    %2306 = vmatpush1.msra.mxu0 0.0
    %2307 = vmatprep.subr.mxu0 0.0
    %2308 = vmatpush1.msra.mxu0 0.0
    %2309 = vmatprep.subr.mxu0 0.0
    %2310 = vmatpush1.msra.mxu0 0.0
    %2311 = vmatprep.subr.mxu0 0.0
    %2312 = vmatpush1.msra.mxu0 0.0
    %2313 = vmatprep.subr.mxu0 0.0
    %2314 = vmatpush1.msra.mxu0 0.0
    %2315 = vmatprep.subr.mxu0 0.0
    %2316 = vmatpush1.msra.mxu0 0.0
    %2317 = vmatprep.subr.mxu0 0.0
    %2318 = vmatpush1.msra.mxu0 0.0
    %2319 = vmatprep.subr.mxu0 0.0
    %2320 = vmatpush1.msra.mxu0 0.0
    %2321 = vmatprep.subr.mxu0 0.0
    %2322 = vmatpush1.msra.mxu0 0.0
    %2323 = vmatprep.subr.mxu0 0.0
    %2324 = vmatpush1.msra.mxu0 0.0
    %2325 = vmatprep.subr.mxu0 0.0
    %2326 = vmatpush1.msra.mxu0 0.0
    %2327 = vmatprep.subr.mxu0 0.0
    %2328 = vmatpush1.msra.mxu0 0.0
    %2329 = vmatprep.subr.mxu0 0.0
    %2330 = vmatpush1.msra.mxu0 0.0
    %2331 = vmatprep.mubr.f32.mxu0 0.0
    %2332 = vmatmul.mubr.f32.gmra.mrb[0].mxu0 %v2265
    %v2333 = vpop.f32.mrb[0].mxu0
    %v2334 = vadd.f32 %v1627, %v2333
    %v2335 = vpop.f32.mrb[0].mxu0
    %2336 = vdwg.mxu0
    %v2337 = vadd.f32 %v750, %v2334
    %v2338 = vxor.u32 %v2337, 2147483648
    %v2339 = vmul.f32 %v2338, 1.442695
    %v2340 = vpow.pop %v2339
    %v2341 = vadd.f32 %v2340, 1.0
    %v2342 = vrcp.pop %v2341
    %v2343 = vmul.f32 1.0, %v2342
    %2345 = vrot.lane.b32.xlu0 %v2334, 64
    %v2346 = vpop.permute.xlu0 %2345
    %v2348 = vmul.f32 %v2343, %v2346
    %2350 = vrot.lane.b32.xlu0 %v2348, 64
    %v2351 = vpop.permute.xlu0 %2350
    %v2353 = vadd.f32 %v750, %v2351
    %v2354 = vtanh.pop %v2353
    %v2355 = vsub.f32 %v2259, %v2354
    %2357 = vrot.lane.b32.xlu0 %v2355, 96
    %v2358 = vpop.permute.xlu0 %2357
    %v2360 = vmul.f32 %v2343, %v2358
    %2362 = vrot.lane.b32.xlu0 %v2360, 32
    %v2363 = vpop.permute.xlu0 %2362
    %v2365 = vadd.f32 %v2354, %v2363
    %2367 = vrot.lane.b32.xlu0 %v2365, 64
    %v2368 = vpop.permute.xlu0 %2367
    %2370 = vst.msk [vmem:[#allocation3 + $0x30] sm:$0xff] %vm488, %v2368
    %v2371 = vsel %vm488, %v2368, 0
    %2373 = vmatprep.subr.mxu0 0.0
    %2374 = vmatpush1.msra.mxu0 %v1618
    %2375 = vmatprep.subr.mxu0 0.0
    %2376 = vmatpush1.msra.mxu0 %v1619
    %2377 = vmatprep.subr.mxu0 0.0
    %2378 = vmatpush1.msra.mxu0 %v1620
    %2379 = vmatprep.subr.mxu0 0.0
    %2380 = vmatpush1.msra.mxu0 %v1621
    %2381 = vmatprep.subr.mxu0 0.0
    %2382 = vmatpush1.msra.mxu0 0.0
    %2383 = vmatprep.subr.mxu0 0.0
    %2384 = vmatpush1.msra.mxu0 0.0
    %2385 = vmatprep.subr.mxu0 0.0
    %2386 = vmatpush1.msra.mxu0 0.0
    %2387 = vmatprep.subr.mxu0 0.0
    %2388 = vmatpush1.msra.mxu0 0.0
    %2389 = vmatprep.subr.mxu0 0.0
    %2390 = vmatpush1.msra.mxu0 0.0
    %2391 = vmatprep.subr.mxu0 0.0
    %2392 = vmatpush1.msra.mxu0 0.0
    %2393 = vmatprep.subr.mxu0 0.0
    %2394 = vmatpush1.msra.mxu0 0.0
    %2395 = vmatprep.subr.mxu0 0.0
    %2396 = vmatpush1.msra.mxu0 0.0
    %2397 = vmatprep.subr.mxu0 0.0
    %2398 = vmatpush1.msra.mxu0 0.0
    %2399 = vmatprep.subr.mxu0 0.0
    %2400 = vmatpush1.msra.mxu0 0.0
    %2401 = vmatprep.subr.mxu0 0.0
    %2402 = vmatpush1.msra.mxu0 0.0
    %2403 = vmatprep.subr.mxu0 0.0
    %2404 = vmatpush1.msra.mxu0 0.0
    %2405 = vmatprep.subr.mxu0 0.0
    %2406 = vmatpush1.msra.mxu0 0.0
    %2407 = vmatprep.subr.mxu0 0.0
    %2408 = vmatpush1.msra.mxu0 0.0
    %2409 = vmatprep.subr.mxu0 0.0
    %2410 = vmatpush1.msra.mxu0 0.0
    %2411 = vmatprep.subr.mxu0 0.0
    %2412 = vmatpush1.msra.mxu0 0.0
    %2413 = vmatprep.subr.mxu0 0.0
    %2414 = vmatpush1.msra.mxu0 0.0
    %2415 = vmatprep.subr.mxu0 0.0
    %2416 = vmatpush1.msra.mxu0 0.0
    %2417 = vmatprep.subr.mxu0 0.0
    %2418 = vmatpush1.msra.mxu0 0.0
    %2419 = vmatprep.subr.mxu0 0.0
    %2420 = vmatpush1.msra.mxu0 0.0
    %2421 = vmatprep.subr.mxu0 0.0
    %2422 = vmatpush1.msra.mxu0 0.0
    %2423 = vmatprep.subr.mxu0 0.0
    %2424 = vmatpush1.msra.mxu0 0.0
    %2425 = vmatprep.subr.mxu0 0.0
    %2426 = vmatpush1.msra.mxu0 0.0
    %2427 = vmatprep.subr.mxu0 0.0
    %2428 = vmatpush1.msra.mxu0 0.0
    %2429 = vmatprep.subr.mxu0 0.0
    %2430 = vmatpush1.msra.mxu0 0.0
    %2431 = vmatprep.subr.mxu0 0.0
    %2432 = vmatpush1.msra.mxu0 0.0
    %2433 = vmatprep.subr.mxu0 0.0
    %2434 = vmatpush1.msra.mxu0 0.0
    %2435 = vmatprep.subr.mxu0 0.0
    %2436 = vmatpush1.msra.mxu0 0.0
    %2437 = vmatprep.mubr.f32.mxu0 0.0
    %2438 = vmatmul.mubr.f32.gmra.mrb[0].mxu0 %v2371
    %v2439 = vpop.f32.mrb[0].mxu0
    %v2440 = vadd.f32 %v1627, %v2439
    %v2441 = vpop.f32.mrb[0].mxu0
    %2442 = vdwg.mxu0
    %v2443 = vadd.f32 %v755, %v2440
    %v2444 = vxor.u32 %v2443, 2147483648
    %v2445 = vmul.f32 %v2444, 1.442695
    %v2446 = vpow.pop %v2445
    %v2447 = vadd.f32 %v2446, 1.0
    %v2448 = vrcp.pop %v2447
    %v2449 = vmul.f32 1.0, %v2448
    %2451 = vrot.lane.b32.xlu0 %v2440, 64
    %v2452 = vpop.permute.xlu0 %2451
    %v2454 = vmul.f32 %v2449, %v2452
    %2456 = vrot.lane.b32.xlu0 %v2454, 64
    %v2457 = vpop.permute.xlu0 %2456
    %v2459 = vadd.f32 %v755, %v2457
    %v2460 = vtanh.pop %v2459
    %v2461 = vsub.f32 %v2365, %v2460
    %2463 = vrot.lane.b32.xlu0 %v2461, 96
    %v2464 = vpop.permute.xlu0 %2463
    %v2466 = vmul.f32 %v2449, %v2464
    %2468 = vrot.lane.b32.xlu0 %v2466, 32
    %v2469 = vpop.permute.xlu0 %2468
    %v2471 = vadd.f32 %v2460, %v2469
    %2473 = vrot.lane.b32.xlu0 %v2471, 64
    %v2474 = vpop.permute.xlu0 %2473
    %2476 = vst.msk [vmem:[#allocation3 + $0x38] sm:$0xff] %vm488, %v2474
    %v2477 = vld [vmem:[#allocation2] sm:$0xff]
    %v2478 = vld [vmem:[#allocation2 + $0x8] sm:$0xff]
    %v2479 = vld [vmem:[#allocation2 + $0x10] sm:$0xff]
    %v2480 = vld [vmem:[#allocation2 + $0x18] sm:$0xff]
    %v2481 = vld [vmem:[#allocation2 + $0x20] sm:$0xff]
    %v2482 = vld [vmem:[#allocation2 + $0x28] sm:$0xff]
    %v2483 = vld [vmem:[#allocation2 + $0x30] sm:$0xff]
    %v2484 = vld [vmem:[#allocation2 + $0x38] sm:$0xff]
    %v2485 = vld [vmem:[#allocation3] sm:$0xff]
    %v2486 = vld [vmem:[#allocation3 + $0x8] sm:$0xff]
    %v2487 = vld [vmem:[#allocation3 + $0x10] sm:$0xff]
    %v2488 = vld [vmem:[#allocation3 + $0x18] sm:$0xff]
    %v2489 = vld [vmem:[#allocation3 + $0x20] sm:$0xff]
    %v2490 = vld [vmem:[#allocation3 + $0x28] sm:$0xff]
    %v2491 = vld [vmem:[#allocation3 + $0x30] sm:$0xff]
    %v2492 = vld [vmem:[#allocation3 + $0x38] sm:$0xff]
    %v2494 = vsel %vm488, %v2485, 0
    %v2497 = vsel %vm488, %v2486, 0
    %v2500 = vsel %vm488, %v2487, 0
    %v2503 = vsel %vm488, %v2488, 0
    %v2506 = vsel %vm488, %v2489, 0
    %v2509 = vsel %vm488, %v2490, 0
    %v2512 = vsel %vm488, %v2491, 0
    %v2515 = vsel %vm488, %v2492, 0
    %v2518 = vsel %vm488, %v2477, 0
    %v2521 = vsel %vm488, %v2478, 0
    %v2524 = vsel %vm488, %v2479, 0
    %v2527 = vsel %vm488, %v2480, 0
    %v2530 = vsel %vm488, %v2481, 0
    %v2533 = vsel %vm488, %v2482, 0
    %v2536 = vsel %vm488, %v2483, 0
    %v2539 = vsel %vm488, %v2484, 0
    %2541 = vmatprep.subr.mxu0 0.0
    %2542 = vmatpush1.xpose.msra.mxu0 %v2518
    %2543 = vmatprep.subr.mxu0 0.0
    %2544 = vmatpush1.xpose.msra.mxu0 %v2521
    %2545 = vmatprep.subr.mxu0 0.0
    %2546 = vmatpush1.xpose.msra.mxu0 %v2524
    %2547 = vmatprep.subr.mxu0 0.0
    %2548 = vmatpush1.xpose.msra.mxu0 %v2527
    %2549 = vmatprep.subr.mxu0 0.0
    %2550 = vmatpush1.xpose.msra.mxu0 %v2530
    %2551 = vmatprep.subr.mxu0 0.0
    %2552 = vmatpush1.xpose.msra.mxu0 %v2533
    %2553 = vmatprep.subr.mxu0 0.0
    %2554 = vmatpush1.xpose.msra.mxu0 %v2536
    %2555 = vmatprep.subr.mxu0 0.0
    %2556 = vmatpush1.xpose.msra.mxu0 %v2539
    %2557 = vmatprep.subr.mxu0 0.0
    %2558 = vmatpush1.xpose.msra.mxu0 0.0
    %2559 = vmatprep.subr.mxu0 0.0
    %2560 = vmatpush1.xpose.msra.mxu0 0.0
    %2561 = vmatprep.subr.mxu0 0.0
    %2562 = vmatpush1.xpose.msra.mxu0 0.0
    %2563 = vmatprep.subr.mxu0 0.0
    %2564 = vmatpush1.xpose.msra.mxu0 0.0
    %2565 = vmatprep.subr.mxu0 0.0
    %2566 = vmatpush1.xpose.msra.mxu0 0.0
    %2567 = vmatprep.subr.mxu0 0.0
    %2568 = vmatpush1.xpose.msra.mxu0 0.0
    %2569 = vmatprep.subr.mxu0 0.0
    %2570 = vmatpush1.xpose.msra.mxu0 0.0
    %2571 = vmatprep.subr.mxu0 0.0
    %2572 = vmatpush1.xpose.msra.mxu0 0.0
    %2573 = vmatprep.subr.mxu0 0.0
    %2574 = vmatpush1.xpose.msra.mxu0 0.0
    %2575 = vmatprep.subr.mxu0 0.0
    %2576 = vmatpush1.xpose.msra.mxu0 0.0
    %2577 = vmatprep.subr.mxu0 0.0
    %2578 = vmatpush1.xpose.msra.mxu0 0.0
    %2579 = vmatprep.subr.mxu0 0.0
    %2580 = vmatpush1.xpose.msra.mxu0 0.0
    %2581 = vmatprep.subr.mxu0 0.0
    %2582 = vmatpush1.xpose.msra.mxu0 0.0
    %2583 = vmatprep.subr.mxu0 0.0
    %2584 = vmatpush1.xpose.msra.mxu0 0.0
    %2585 = vmatprep.subr.mxu0 0.0
    %2586 = vmatpush1.xpose.msra.mxu0 0.0
    %2587 = vmatprep.subr.mxu0 0.0
    %2588 = vmatpush1.xpose.msra.mxu0 0.0
    %2589 = vmatprep.subr.mxu0 0.0
    %2590 = vmatpush1.xpose.msra.mxu0 0.0
    %2591 = vmatprep.subr.mxu0 0.0
    %2592 = vmatpush1.xpose.msra.mxu0 0.0
    %2593 = vmatprep.subr.mxu0 0.0
    %2594 = vmatpush1.xpose.msra.mxu0 0.0
    %2595 = vmatprep.subr.mxu0 0.0
    %2596 = vmatpush1.xpose.msra.mxu0 0.0
    %2597 = vmatprep.subr.mxu0 0.0
    %2598 = vmatpush1.xpose.msra.mxu0 0.0
    %2599 = vmatprep.subr.mxu0 0.0
    %2600 = vmatpush1.xpose.msra.mxu0 0.0
    %2601 = vmatprep.subr.mxu0 0.0
    %2602 = vmatpush1.xpose.msra.mxu0 0.0
    %2603 = vmatprep.subr.mxu0 0.0
    %2604 = vmatpush1.xpose.msra.mxu0 0.0
    %2605 = vmatprep.mubr.f32.mxu0 0.0
    %2606 = vmatmul.mubr.f32.gmra.mrb[0].mxu0 %v2494
    %v2607 = vpop.f32.mrb[0].mxu0
    %v2608 = vadd.f32 0.0, %v2607
    %v2609 = vpop.f32.mrb[0].mxu0
    %2610 = vmatprep.mubr.f32.mxu0 0.0
    %2611 = vmatmul.mubr.f32.gmra.mrb[0].mxu0 %v2497
    %v2612 = vpop.f32.mrb[0].mxu0
    %v2613 = vadd.f32 0.0, %v2612
    %v2614 = vpop.f32.mrb[0].mxu0
    %2615 = vmatprep.mubr.f32.mxu0 0.0
    %2616 = vmatmul.mubr.f32.gmra.mrb[0].mxu0 %v2500
    %v2617 = vpop.f32.mrb[0].mxu0
    %v2618 = vadd.f32 0.0, %v2617
    %v2619 = vpop.f32.mrb[0].mxu0
    %2620 = vmatprep.mubr.f32.mxu0 0.0
    %2621 = vmatmul.mubr.f32.gmra.mrb[0].mxu0 %v2503
    %v2622 = vpop.f32.mrb[0].mxu0
    %v2623 = vadd.f32 0.0, %v2622
    %v2624 = vpop.f32.mrb[0].mxu0
    %2625 = vmatprep.mubr.f32.mxu0 0.0
    %2626 = vmatmul.mubr.f32.gmra.mrb[0].mxu0 %v2506
    %v2627 = vpop.f32.mrb[0].mxu0
    %v2628 = vadd.f32 0.0, %v2627
    %v2629 = vpop.f32.mrb[0].mxu0
    %2630 = vmatprep.mubr.f32.mxu0 0.0
    %2631 = vmatmul.mubr.f32.gmra.mrb[0].mxu0 %v2509
    %v2632 = vpop.f32.mrb[0].mxu0
    %v2633 = vadd.f32 0.0, %v2632
    %v2634 = vpop.f32.mrb[0].mxu0
    %2635 = vmatprep.mubr.f32.mxu0 0.0
    %2636 = vmatmul.mubr.f32.gmra.mrb[0].mxu0 %v2512
    %v2637 = vpop.f32.mrb[0].mxu0
    %v2638 = vadd.f32 0.0, %v2637
    %v2639 = vpop.f32.mrb[0].mxu0
    %2640 = vmatprep.mubr.f32.mxu0 0.0
    %2641 = vmatmul.mubr.f32.gmra.mrb[0].mxu0 %v2515
    %v2642 = vpop.f32.mrb[0].mxu0
    %v2643 = vadd.f32 0.0, %v2642
    %v2644 = vpop.f32.mrb[0].mxu0
    %2645 = vdwg.mxu0
    %v2646 = vlaneseq
    %v2647 = vshrl.u32 %v2646, 7
    %v2648 = vadd.s32 %v2647, 8
    %v2649 = vadd.s32 %v2647, 16
    %v2650 = vadd.s32 %v2647, 24
    %v2651 = vadd.s32 %v2647, 32
    %v2652 = vadd.s32 %v2647, 40
    %v2653 = vadd.s32 %v2647, 48
    %v2654 = vadd.s32 %v2647, 56
    %v2655 = vand.u32 %v2647, 7
    %v2656 = vand.u32 %v2648, 7
    %v2657 = vand.u32 %v2649, 7
    %v2658 = vand.u32 %v2650, 7
    %v2659 = vand.u32 %v2651, 7
    %v2660 = vand.u32 %v2652, 7
    %v2661 = vand.u32 %v2653, 7
    %v2662 = vand.u32 %v2654, 7
    %v2663 = vand.u32 %v97, 7
    %vm2664 = vcmp.eq.s32.totalorder %v2655, %v2663
    %vm2665 = vcmp.eq.s32.totalorder %v2656, %v2663
    %vm2666 = vcmp.eq.s32.totalorder %v2657, %v2663
    %vm2667 = vcmp.eq.s32.totalorder %v2658, %v2663
    %vm2668 = vcmp.eq.s32.totalorder %v2659, %v2663
    %vm2669 = vcmp.eq.s32.totalorder %v2660, %v2663
    %vm2670 = vcmp.eq.s32.totalorder %v2661, %v2663
    %vm2671 = vcmp.eq.s32.totalorder %v2662, %v2663
    %v2672 = vsel %vm2664, %v2608, -1e+30
    %v2673 = vsel %vm2665, %v2613, -1e+30
    %v2674 = vsel %vm2666, %v2618, -1e+30
    %v2675 = vsel %vm2667, %v2623, -1e+30
    %v2676 = vsel %vm2668, %v2628, -1e+30
    %v2677 = vsel %vm2669, %v2633, -1e+30
    %v2678 = vsel %vm2670, %v2638, -1e+30
    %v2679 = vsel %vm2671, %v2643, -1e+30
    %v2680 = vsel %vm154, %v2672, -inf
    %2681 = vmax.xlane.f32.xlu0 %v2680
    %v2682 = vpop.xlane.xlu0 %2681
    %v2683 = vsel %vm154, %v2673, -inf
    %2684 = vmax.xlane.f32.xlu0 %v2683
    %v2685 = vpop.xlane.xlu0 %2684
    %v2686 = vsel %vm154, %v2674, -inf
    %2687 = vmax.xlane.f32.xlu0 %v2686
    %v2688 = vpop.xlane.xlu0 %2687
    %v2689 = vsel %vm154, %v2675, -inf
    %2690 = vmax.xlane.f32.xlu0 %v2689
    %v2691 = vpop.xlane.xlu0 %2690
    %v2692 = vsel %vm154, %v2676, -inf
    %2693 = vmax.xlane.f32.xlu0 %v2692
    %v2694 = vpop.xlane.xlu0 %2693
    %v2695 = vsel %vm154, %v2677, -inf
    %2696 = vmax.xlane.f32.xlu0 %v2695
    %v2697 = vpop.xlane.xlu0 %2696
    %v2698 = vsel %vm154, %v2678, -inf
    %2699 = vmax.xlane.f32.xlu0 %v2698
    %v2700 = vpop.xlane.xlu0 %2699
    %v2701 = vsel %vm154, %v2679, -inf
    %2702 = vmax.xlane.f32.xlu0 %v2701
    %v2703 = vpop.xlane.xlu0 %2702
    %v2704 = vsub.f32 %v2672, %v2682
    %v2705 = vsub.f32 %v2673, %v2685
    %v2706 = vsub.f32 %v2674, %v2688
    %v2707 = vsub.f32 %v2675, %v2691
    %v2708 = vsub.f32 %v2676, %v2694
    %v2709 = vsub.f32 %v2677, %v2697
    %v2710 = vsub.f32 %v2678, %v2700
    %v2711 = vsub.f32 %v2679, %v2703
    %v2712 = vmul.f32 %v2704, 1.442695
    %v2713 = vpow.pop %v2712
    %v2714 = vmul.f32 %v2705, 1.442695
    %v2715 = vpow.pop %v2714
    %v2716 = vmul.f32 %v2706, 1.442695
    %v2717 = vpow.pop %v2716
    %v2718 = vmul.f32 %v2707, 1.442695
    %v2719 = vpow.pop %v2718
    %v2720 = vmul.f32 %v2708, 1.442695
    %v2721 = vpow.pop %v2720
    %v2722 = vmul.f32 %v2709, 1.442695
    %v2723 = vpow.pop %v2722
    %v2724 = vmul.f32 %v2710, 1.442695
    %v2725 = vpow.pop %v2724
    %v2726 = vmul.f32 %v2711, 1.442695
    %v2727 = vpow.pop %v2726
    %v2728 = vsel %vm154, %v2713, 0.0
    %2729 = vadd.xlane.f32.xlu0 %v2728
    %v2730 = vpop.xlane.xlu0 %2729
    %v2731 = vsel %vm154, %v2715, 0.0
    %2732 = vadd.xlane.f32.xlu0 %v2731
    %v2733 = vpop.xlane.xlu0 %2732
    %v2734 = vsel %vm154, %v2717, 0.0
    %2735 = vadd.xlane.f32.xlu0 %v2734
    %v2736 = vpop.xlane.xlu0 %2735
    %v2737 = vsel %vm154, %v2719, 0.0
    %2738 = vadd.xlane.f32.xlu0 %v2737
    %v2739 = vpop.xlane.xlu0 %2738
    %v2740 = vsel %vm154, %v2721, 0.0
    %2741 = vadd.xlane.f32.xlu0 %v2740
    %v2742 = vpop.xlane.xlu0 %2741
    %v2743 = vsel %vm154, %v2723, 0.0
    %2744 = vadd.xlane.f32.xlu0 %v2743
    %v2745 = vpop.xlane.xlu0 %2744
    %v2746 = vsel %vm154, %v2725, 0.0
    %2747 = vadd.xlane.f32.xlu0 %v2746
    %v2748 = vpop.xlane.xlu0 %2747
    %v2749 = vsel %vm154, %v2727, 0.0
    %2750 = vadd.xlane.f32.xlu0 %v2749
    %v2751 = vpop.xlane.xlu0 %2750
    %v2752 = vrcp.pop %v2730
    %v2753 = vrcp.pop %v2733
    %v2754 = vrcp.pop %v2736
    %v2755 = vrcp.pop %v2739
    %v2756 = vrcp.pop %v2742
    %v2757 = vrcp.pop %v2745
    %v2758 = vrcp.pop %v2748
    %v2759 = vrcp.pop %v2751
    %v2760 = vmul.f32 %v2713, %v2752
    %v2761 = vmul.f32 %v2715, %v2753
    %v2762 = vmul.f32 %v2717, %v2754
    %v2763 = vmul.f32 %v2719, %v2755
    %v2764 = vmul.f32 %v2721, %v2756
    %v2765 = vmul.f32 %v2723, %v2757
    %v2766 = vmul.f32 %v2725, %v2758
    %v2767 = vmul.f32 %v2727, %v2759
    %v2769 = vsel %vm154, %v2760, 0
    %v2772 = vsel %vm154, %v2761, 0
    %v2775 = vsel %vm154, %v2762, 0
    %v2778 = vsel %vm154, %v2763, 0
    %v2781 = vsel %vm154, %v2764, 0
    %v2784 = vsel %vm154, %v2765, 0
    %v2787 = vsel %vm154, %v2766, 0
    %v2790 = vsel %vm154, %v2767, 0
    %2792 = vmatprep.subr.mxu0 0.0
    %2793 = vmatpush1.msra.mxu0 %v2477
    %2794 = vmatprep.subr.mxu0 0.0
    %2795 = vmatpush1.msra.mxu0 %v2478
    %2796 = vmatprep.subr.mxu0 0.0
    %2797 = vmatpush1.msra.mxu0 %v2479
    %2798 = vmatprep.subr.mxu0 0.0
    %2799 = vmatpush1.msra.mxu0 %v2480
    %2800 = vmatprep.subr.mxu0 0.0
    %2801 = vmatpush1.msra.mxu0 %v2481
    %2802 = vmatprep.subr.mxu0 0.0
    %2803 = vmatpush1.msra.mxu0 %v2482
    %2804 = vmatprep.subr.mxu0 0.0
    %2805 = vmatpush1.msra.mxu0 %v2483
    %2806 = vmatprep.subr.mxu0 0.0
    %2807 = vmatpush1.msra.mxu0 %v2484
    %2808 = vmatprep.subr.mxu0 0.0
    %2809 = vmatpush1.msra.mxu0 0.0
    %2810 = vmatprep.subr.mxu0 0.0
    %2811 = vmatpush1.msra.mxu0 0.0
    %2812 = vmatprep.subr.mxu0 0.0
    %2813 = vmatpush1.msra.mxu0 0.0
    %2814 = vmatprep.subr.mxu0 0.0
    %2815 = vmatpush1.msra.mxu0 0.0
    %2816 = vmatprep.subr.mxu0 0.0
    %2817 = vmatpush1.msra.mxu0 0.0
    %2818 = vmatprep.subr.mxu0 0.0
    %2819 = vmatpush1.msra.mxu0 0.0
    %2820 = vmatprep.subr.mxu0 0.0
    %2821 = vmatpush1.msra.mxu0 0.0
    %2822 = vmatprep.subr.mxu0 0.0
    %2823 = vmatpush1.msra.mxu0 0.0
    %2824 = vmatprep.subr.mxu0 0.0
    %2825 = vmatpush1.msra.mxu0 0.0
    %2826 = vmatprep.subr.mxu0 0.0
    %2827 = vmatpush1.msra.mxu0 0.0
    %2828 = vmatprep.subr.mxu0 0.0
    %2829 = vmatpush1.msra.mxu0 0.0
    %2830 = vmatprep.subr.mxu0 0.0
    %2831 = vmatpush1.msra.mxu0 0.0
    %2832 = vmatprep.subr.mxu0 0.0
    %2833 = vmatpush1.msra.mxu0 0.0
    %2834 = vmatprep.subr.mxu0 0.0
    %2835 = vmatpush1.msra.mxu0 0.0
    %2836 = vmatprep.subr.mxu0 0.0
    %2837 = vmatpush1.msra.mxu0 0.0
    %2838 = vmatprep.subr.mxu0 0.0
    %2839 = vmatpush1.msra.mxu0 0.0
    %2840 = vmatprep.subr.mxu0 0.0
    %2841 = vmatpush1.msra.mxu0 0.0
    %2842 = vmatprep.subr.mxu0 0.0
    %2843 = vmatpush1.msra.mxu0 0.0
    %2844 = vmatprep.subr.mxu0 0.0
    %2845 = vmatpush1.msra.mxu0 0.0
    %2846 = vmatprep.subr.mxu0 0.0
    %2847 = vmatpush1.msra.mxu0 0.0
    %2848 = vmatprep.subr.mxu0 0.0
    %2849 = vmatpush1.msra.mxu0 0.0
    %2850 = vmatprep.subr.mxu0 0.0
    %2851 = vmatpush1.msra.mxu0 0.0
    %2852 = vmatprep.subr.mxu0 0.0
    %2853 = vmatpush1.msra.mxu0 0.0
    %2854 = vmatprep.subr.mxu0 0.0
    %2855 = vmatpush1.msra.mxu0 0.0
    %2856 = vmatprep.mubr.f32.mxu0 0.0
    %2857 = vmatmul.mubr.f32.gmra.mrb[0].mxu0 %v2769
    %v2858 = vpop.f32.mrb[0].mxu0
    %v2859 = vadd.f32 0.0, %v2858
    %v2860 = vpop.f32.mrb[0].mxu0
    %2861 = vmatprep.mubr.f32.mxu0 0.0
    %2862 = vmatmul.mubr.f32.gmra.mrb[0].mxu0 %v2772
    %v2863 = vpop.f32.mrb[0].mxu0
    %v2864 = vadd.f32 0.0, %v2863
    %v2865 = vpop.f32.mrb[0].mxu0
    %2866 = vmatprep.mubr.f32.mxu0 0.0
    %2867 = vmatmul.mubr.f32.gmra.mrb[0].mxu0 %v2775
    %v2868 = vpop.f32.mrb[0].mxu0
    %v2869 = vadd.f32 0.0, %v2868
    %v2870 = vpop.f32.mrb[0].mxu0
    %2871 = vmatprep.mubr.f32.mxu0 0.0
    %2872 = vmatmul.mubr.f32.gmra.mrb[0].mxu0 %v2778
    %v2873 = vpop.f32.mrb[0].mxu0
    %v2874 = vadd.f32 0.0, %v2873
    %v2875 = vpop.f32.mrb[0].mxu0
    %2876 = vmatprep.mubr.f32.mxu0 0.0
    %2877 = vmatmul.mubr.f32.gmra.mrb[0].mxu0 %v2781
    %v2878 = vpop.f32.mrb[0].mxu0
    %v2879 = vadd.f32 0.0, %v2878
    %v2880 = vpop.f32.mrb[0].mxu0
    %2881 = vmatprep.mubr.f32.mxu0 0.0
    %2882 = vmatmul.mubr.f32.gmra.mrb[0].mxu0 %v2784
    %v2883 = vpop.f32.mrb[0].mxu0
    %v2884 = vadd.f32 0.0, %v2883
    %v2885 = vpop.f32.mrb[0].mxu0
    %2886 = vmatprep.mubr.f32.mxu0 0.0
    %2887 = vmatmul.mubr.f32.gmra.mrb[0].mxu0 %v2787
    %v2888 = vpop.f32.mrb[0].mxu0
    %v2889 = vadd.f32 0.0, %v2888
    %v2890 = vpop.f32.mrb[0].mxu0
    %2891 = vmatprep.mubr.f32.mxu0 0.0
    %2892 = vmatmul.mubr.f32.gmra.mrb[0].mxu0 %v2790
    %v2893 = vpop.f32.mrb[0].mxu0
    %v2894 = vadd.f32 0.0, %v2893
    %v2895 = vpop.f32.mrb[0].mxu0
    %2896 = vdwg.mxu0
    %v2897 = vld [vmem:[%s12] sm:$0xff]
    %v2898 = vld [vmem:[%s12 + $0x8] sm:$0xff]
    %v2899 = vld [vmem:[%s12 + $0x10] sm:$0xff]
    %v2900 = vld [vmem:[%s12 + $0x18] sm:$0xff]
    %v2901 = vld [vmem:[%s13] sm:$0xff]
    %v2902 = vld [vmem:[%s13 + $0x8] sm:$0xff]
    %v2903 = vld [vmem:[%s13 + $0x10] sm:$0xff]
    %v2904 = vld [vmem:[%s13 + $0x18] sm:$0xff]
    %2905 = vmatprep.subr.mxu0 0.0
    %2906 = vmatpush1.msra.mxu0 %v2901
    %2907 = vmatprep.subr.mxu0 0.0
    %2908 = vmatpush1.msra.mxu0 %v2902
    %2909 = vmatprep.subr.mxu0 0.0
    %2910 = vmatpush1.msra.mxu0 %v2903
    %2911 = vmatprep.subr.mxu0 0.0
    %2912 = vmatpush1.msra.mxu0 %v2904
    %2913 = vmatprep.subr.mxu0 0.0
    %2914 = vmatpush1.msra.mxu0 0.0
    %2915 = vmatprep.subr.mxu0 0.0
    %2916 = vmatpush1.msra.mxu0 0.0
    %2917 = vmatprep.subr.mxu0 0.0
    %2918 = vmatpush1.msra.mxu0 0.0
    %2919 = vmatprep.subr.mxu0 0.0
    %2920 = vmatpush1.msra.mxu0 0.0
    %2921 = vmatprep.subr.mxu0 0.0
    %2922 = vmatpush1.msra.mxu0 0.0
    %2923 = vmatprep.subr.mxu0 0.0
    %2924 = vmatpush1.msra.mxu0 0.0
    %2925 = vmatprep.subr.mxu0 0.0
    %2926 = vmatpush1.msra.mxu0 0.0
    %2927 = vmatprep.subr.mxu0 0.0
    %2928 = vmatpush1.msra.mxu0 0.0
    %2929 = vmatprep.subr.mxu0 0.0
    %2930 = vmatpush1.msra.mxu0 0.0
    %2931 = vmatprep.subr.mxu0 0.0
    %2932 = vmatpush1.msra.mxu0 0.0
    %2933 = vmatprep.subr.mxu0 0.0
    %2934 = vmatpush1.msra.mxu0 0.0
    %2935 = vmatprep.subr.mxu0 0.0
    %2936 = vmatpush1.msra.mxu0 0.0
    %2937 = vmatprep.subr.mxu0 0.0
    %2938 = vmatpush1.msra.mxu0 0.0
    %2939 = vmatprep.subr.mxu0 0.0
    %2940 = vmatpush1.msra.mxu0 0.0
    %2941 = vmatprep.subr.mxu0 0.0
    %2942 = vmatpush1.msra.mxu0 0.0
    %2943 = vmatprep.subr.mxu0 0.0
    %2944 = vmatpush1.msra.mxu0 0.0
    %2945 = vmatprep.subr.mxu0 0.0
    %2946 = vmatpush1.msra.mxu0 0.0
    %2947 = vmatprep.subr.mxu0 0.0
    %2948 = vmatpush1.msra.mxu0 0.0
    %2949 = vmatprep.subr.mxu0 0.0
    %2950 = vmatpush1.msra.mxu0 0.0
    %2951 = vmatprep.subr.mxu0 0.0
    %2952 = vmatpush1.msra.mxu0 0.0
    %2953 = vmatprep.subr.mxu0 0.0
    %2954 = vmatpush1.msra.mxu0 0.0
    %2955 = vmatprep.subr.mxu0 0.0
    %2956 = vmatpush1.msra.mxu0 0.0
    %2957 = vmatprep.subr.mxu0 0.0
    %2958 = vmatpush1.msra.mxu0 0.0
    %2959 = vmatprep.subr.mxu0 0.0
    %2960 = vmatpush1.msra.mxu0 0.0
    %2961 = vmatprep.subr.mxu0 0.0
    %2962 = vmatpush1.msra.mxu0 0.0
    %2963 = vmatprep.subr.mxu0 0.0
    %2964 = vmatpush1.msra.mxu0 0.0
    %2965 = vmatprep.subr.mxu0 0.0
    %2966 = vmatpush1.msra.mxu0 0.0
    %2967 = vmatprep.subr.mxu0 0.0
    %2968 = vmatpush1.msra.mxu0 0.0
    %2969 = vmatprep.mubr.f32.mxu0 0.0
    %2970 = vmatmul.mubr.f32.gmra.mrb[0].mxu0 %v2494
    %v2971 = vpop.f32.mrb[0].mxu0
    %v2972 = vadd.f32 0.0, %v2971
    %v2973 = vpop.f32.mrb[0].mxu0
    %2974 = vmatprep.mubr.f32.mxu0 0.0
    %2975 = vmatmul.mubr.f32.gmra.mrb[0].mxu0 %v2497
    %v2976 = vpop.f32.mrb[0].mxu0
    %v2977 = vadd.f32 0.0, %v2976
    %v2978 = vpop.f32.mrb[0].mxu0
    %2979 = vmatprep.mubr.f32.mxu0 0.0
    %2980 = vmatmul.mubr.f32.gmra.mrb[0].mxu0 %v2500
    %v2981 = vpop.f32.mrb[0].mxu0
    %v2982 = vadd.f32 0.0, %v2981
    %v2983 = vpop.f32.mrb[0].mxu0
    %2984 = vmatprep.mubr.f32.mxu0 0.0
    %2985 = vmatmul.mubr.f32.gmra.mrb[0].mxu0 %v2503
    %v2986 = vpop.f32.mrb[0].mxu0
    %v2987 = vadd.f32 0.0, %v2986
    %v2988 = vpop.f32.mrb[0].mxu0
    %2989 = vmatprep.mubr.f32.mxu0 0.0
    %2990 = vmatmul.mubr.f32.gmra.mrb[0].mxu0 %v2506
    %v2991 = vpop.f32.mrb[0].mxu0
    %v2992 = vadd.f32 0.0, %v2991
    %v2993 = vpop.f32.mrb[0].mxu0
    %2994 = vmatprep.mubr.f32.mxu0 0.0
    %2995 = vmatmul.mubr.f32.gmra.mrb[0].mxu0 %v2509
    %v2996 = vpop.f32.mrb[0].mxu0
    %v2997 = vadd.f32 0.0, %v2996
    %v2998 = vpop.f32.mrb[0].mxu0
    %2999 = vmatprep.mubr.f32.mxu0 0.0
    %3000 = vmatmul.mubr.f32.gmra.mrb[0].mxu0 %v2512
    %v3001 = vpop.f32.mrb[0].mxu0
    %v3002 = vadd.f32 0.0, %v3001
    %v3003 = vpop.f32.mrb[0].mxu0
    %3004 = vmatprep.mubr.f32.mxu0 0.0
    %3005 = vmatmul.mubr.f32.gmra.mrb[0].mxu0 %v2515
    %v3006 = vpop.f32.mrb[0].mxu0
    %v3007 = vadd.f32 0.0, %v3006
    %v3008 = vpop.f32.mrb[0].mxu0
    %3009 = vdwg.mxu0
    %v3011 = vsel %vm488, %v2859, 0
    %v3014 = vsel %vm488, %v2864, 0
    %v3017 = vsel %vm488, %v2869, 0
    %v3020 = vsel %vm488, %v2874, 0
    %v3023 = vsel %vm488, %v2879, 0
    %v3026 = vsel %vm488, %v2884, 0
    %v3029 = vsel %vm488, %v2889, 0
    %v3032 = vsel %vm488, %v2894, 0
    %3034 = vmatprep.subr.mxu0 0.0
    %3035 = vmatpush1.msra.mxu0 %v2897
    %3036 = vmatprep.subr.mxu0 0.0
    %3037 = vmatpush1.msra.mxu0 %v2898
    %3038 = vmatprep.subr.mxu0 0.0
    %3039 = vmatpush1.msra.mxu0 %v2899
    %3040 = vmatprep.subr.mxu0 0.0
    %3041 = vmatpush1.msra.mxu0 %v2900
    %3042 = vmatprep.subr.mxu0 0.0
    %3043 = vmatpush1.msra.mxu0 0.0
    %3044 = vmatprep.subr.mxu0 0.0
    %3045 = vmatpush1.msra.mxu0 0.0
    %3046 = vmatprep.subr.mxu0 0.0
    %3047 = vmatpush1.msra.mxu0 0.0
    %3048 = vmatprep.subr.mxu0 0.0
    %3049 = vmatpush1.msra.mxu0 0.0
    %3050 = vmatprep.subr.mxu0 0.0
    %3051 = vmatpush1.msra.mxu0 0.0
    %3052 = vmatprep.subr.mxu0 0.0
    %3053 = vmatpush1.msra.mxu0 0.0
    %3054 = vmatprep.subr.mxu0 0.0
    %3055 = vmatpush1.msra.mxu0 0.0
    %3056 = vmatprep.subr.mxu0 0.0
    %3057 = vmatpush1.msra.mxu0 0.0
    %3058 = vmatprep.subr.mxu0 0.0
    %3059 = vmatpush1.msra.mxu0 0.0
    %3060 = vmatprep.subr.mxu0 0.0
    %3061 = vmatpush1.msra.mxu0 0.0
    %3062 = vmatprep.subr.mxu0 0.0
    %3063 = vmatpush1.msra.mxu0 0.0
    %3064 = vmatprep.subr.mxu0 0.0
    %3065 = vmatpush1.msra.mxu0 0.0
    %3066 = vmatprep.subr.mxu0 0.0
    %3067 = vmatpush1.msra.mxu0 0.0
    %3068 = vmatprep.subr.mxu0 0.0
    %3069 = vmatpush1.msra.mxu0 0.0
    %3070 = vmatprep.subr.mxu0 0.0
    %3071 = vmatpush1.msra.mxu0 0.0
    %3072 = vmatprep.subr.mxu0 0.0
    %3073 = vmatpush1.msra.mxu0 0.0
    %3074 = vmatprep.subr.mxu0 0.0
    %3075 = vmatpush1.msra.mxu0 0.0
    %3076 = vmatprep.subr.mxu0 0.0
    %3077 = vmatpush1.msra.mxu0 0.0
    %3078 = vmatprep.subr.mxu0 0.0
    %3079 = vmatpush1.msra.mxu0 0.0
    %3080 = vmatprep.subr.mxu0 0.0
    %3081 = vmatpush1.msra.mxu0 0.0
    %3082 = vmatprep.subr.mxu0 0.0
    %3083 = vmatpush1.msra.mxu0 0.0
    %3084 = vmatprep.subr.mxu0 0.0
    %3085 = vmatpush1.msra.mxu0 0.0
    %3086 = vmatprep.subr.mxu0 0.0
    %3087 = vmatpush1.msra.mxu0 0.0
    %3088 = vmatprep.subr.mxu0 0.0
    %3089 = vmatpush1.msra.mxu0 0.0
    %3090 = vmatprep.subr.mxu0 0.0
    %3091 = vmatpush1.msra.mxu0 0.0
    %3092 = vmatprep.subr.mxu0 0.0
    %3093 = vmatpush1.msra.mxu0 0.0
    %3094 = vmatprep.subr.mxu0 0.0
    %3095 = vmatpush1.msra.mxu0 0.0
    %3096 = vmatprep.subr.mxu0 0.0
    %3097 = vmatpush1.msra.mxu0 0.0
    %3098 = vmatprep.mubr.f32.mxu0 0.0
    %3099 = vmatmul.mubr.f32.gmra.mrb[0].mxu0 %v3011
    %v3100 = vpop.f32.mrb[0].mxu0
    %v3101 = vadd.f32 %v2972, %v3100
    %v3102 = vpop.f32.mrb[0].mxu0
    %3103 = vmatprep.mubr.f32.mxu0 0.0
    %3104 = vmatmul.mubr.f32.gmra.mrb[0].mxu0 %v3014
    %v3105 = vpop.f32.mrb[0].mxu0
    %v3106 = vadd.f32 %v2977, %v3105
    %v3107 = vpop.f32.mrb[0].mxu0
    %3108 = vmatprep.mubr.f32.mxu0 0.0
    %3109 = vmatmul.mubr.f32.gmra.mrb[0].mxu0 %v3017
    %v3110 = vpop.f32.mrb[0].mxu0
    %v3111 = vadd.f32 %v2982, %v3110
    %v3112 = vpop.f32.mrb[0].mxu0
    %3113 = vmatprep.mubr.f32.mxu0 0.0
    %3114 = vmatmul.mubr.f32.gmra.mrb[0].mxu0 %v3020
    %v3115 = vpop.f32.mrb[0].mxu0
    %v3116 = vadd.f32 %v2987, %v3115
    %v3117 = vpop.f32.mrb[0].mxu0
    %3118 = vmatprep.mubr.f32.mxu0 0.0
    %3119 = vmatmul.mubr.f32.gmra.mrb[0].mxu0 %v3023
    %v3120 = vpop.f32.mrb[0].mxu0
    %v3121 = vadd.f32 %v2992, %v3120
    %v3122 = vpop.f32.mrb[0].mxu0
    %3123 = vmatprep.mubr.f32.mxu0 0.0
    %3124 = vmatmul.mubr.f32.gmra.mrb[0].mxu0 %v3026
    %v3125 = vpop.f32.mrb[0].mxu0
    %v3126 = vadd.f32 %v2997, %v3125
    %v3127 = vpop.f32.mrb[0].mxu0
    %3128 = vmatprep.mubr.f32.mxu0 0.0
    %3129 = vmatmul.mubr.f32.gmra.mrb[0].mxu0 %v3029
    %v3130 = vpop.f32.mrb[0].mxu0
    %v3131 = vadd.f32 %v3002, %v3130
    %v3132 = vpop.f32.mrb[0].mxu0
    %3133 = vmatprep.mubr.f32.mxu0 0.0
    %3134 = vmatmul.mubr.f32.gmra.mrb[0].mxu0 %v3032
    %v3135 = vpop.f32.mrb[0].mxu0
    %v3136 = vadd.f32 %v3007, %v3135
    %v3137 = vpop.f32.mrb[0].mxu0
    %3138 = vdwg.mxu0
    %v3139 = vtanh.pop %v3101
    %v3140 = vtanh.pop %v3106
    %v3141 = vtanh.pop %v3111
    %v3142 = vtanh.pop %v3116
    %v3143 = vtanh.pop %v3121
    %v3144 = vtanh.pop %v3126
    %v3145 = vtanh.pop %v3131
    %v3146 = vtanh.pop %v3136
    %v3147 = vld [vmem:[%s14] sm:$0xff]
    %v3148 = vld [vmem:[%s14 + $0x8] sm:$0xff]
    %v3149 = vld [vmem:[%s14 + $0x10] sm:$0xff]
    %v3150 = vld [vmem:[%s14 + $0x18] sm:$0xff]
    %v3151 = vld [vmem:[#allocation8] sm:$0x1]
    %v3153 = vlaneseq
    %v3154 = vshrl.u32 %v3153, 7
    %v3155 = vsub.s32 0, %v3154
    %v3156 = vrot.slane %v3151, %v3155
    %v3159 = vsel %vm488, %v3139, 0
    %v3162 = vsel %vm488, %v3140, 0
    %v3165 = vsel %vm488, %v3141, 0
    %v3168 = vsel %vm488, %v3142, 0
    %v3171 = vsel %vm488, %v3143, 0
    %v3174 = vsel %vm488, %v3144, 0
    %v3177 = vsel %vm488, %v3145, 0
    %v3180 = vsel %vm488, %v3146, 0
    %3182 = vmatprep.subr.mxu0 0.0
    %3183 = vmatpush1.msra.mxu0 %v3147
    %3184 = vmatprep.subr.mxu0 0.0
    %3185 = vmatpush1.msra.mxu0 %v3148
    %3186 = vmatprep.subr.mxu0 0.0
    %3187 = vmatpush1.msra.mxu0 %v3149
    %3188 = vmatprep.subr.mxu0 0.0
    %3189 = vmatpush1.msra.mxu0 %v3150
    %3190 = vmatprep.subr.mxu0 0.0
    %3191 = vmatpush1.msra.mxu0 0.0
    %3192 = vmatprep.subr.mxu0 0.0
    %3193 = vmatpush1.msra.mxu0 0.0
    %3194 = vmatprep.subr.mxu0 0.0
    %3195 = vmatpush1.msra.mxu0 0.0
    %3196 = vmatprep.subr.mxu0 0.0
    %3197 = vmatpush1.msra.mxu0 0.0
    %3198 = vmatprep.subr.mxu0 0.0
    %3199 = vmatpush1.msra.mxu0 0.0
    %3200 = vmatprep.subr.mxu0 0.0
    %3201 = vmatpush1.msra.mxu0 0.0
    %3202 = vmatprep.subr.mxu0 0.0
    %3203 = vmatpush1.msra.mxu0 0.0
    %3204 = vmatprep.subr.mxu0 0.0
    %3205 = vmatpush1.msra.mxu0 0.0
    %3206 = vmatprep.subr.mxu0 0.0
    %3207 = vmatpush1.msra.mxu0 0.0
    %3208 = vmatprep.subr.mxu0 0.0
    %3209 = vmatpush1.msra.mxu0 0.0
    %3210 = vmatprep.subr.mxu0 0.0
    %3211 = vmatpush1.msra.mxu0 0.0
    %3212 = vmatprep.subr.mxu0 0.0
    %3213 = vmatpush1.msra.mxu0 0.0
    %3214 = vmatprep.subr.mxu0 0.0
    %3215 = vmatpush1.msra.mxu0 0.0
    %3216 = vmatprep.subr.mxu0 0.0
    %3217 = vmatpush1.msra.mxu0 0.0
    %3218 = vmatprep.subr.mxu0 0.0
    %3219 = vmatpush1.msra.mxu0 0.0
    %3220 = vmatprep.subr.mxu0 0.0
    %3221 = vmatpush1.msra.mxu0 0.0
    %3222 = vmatprep.subr.mxu0 0.0
    %3223 = vmatpush1.msra.mxu0 0.0
    %3224 = vmatprep.subr.mxu0 0.0
    %3225 = vmatpush1.msra.mxu0 0.0
    %3226 = vmatprep.subr.mxu0 0.0
    %3227 = vmatpush1.msra.mxu0 0.0
    %3228 = vmatprep.subr.mxu0 0.0
    %3229 = vmatpush1.msra.mxu0 0.0
    %3230 = vmatprep.subr.mxu0 0.0
    %3231 = vmatpush1.msra.mxu0 0.0
    %3232 = vmatprep.subr.mxu0 0.0
    %3233 = vmatpush1.msra.mxu0 0.0
    %3234 = vmatprep.subr.mxu0 0.0
    %3235 = vmatpush1.msra.mxu0 0.0
    %3236 = vmatprep.subr.mxu0 0.0
    %3237 = vmatpush1.msra.mxu0 0.0
    %3238 = vmatprep.subr.mxu0 0.0
    %3239 = vmatpush1.msra.mxu0 0.0
    %3240 = vmatprep.subr.mxu0 0.0
    %3241 = vmatpush1.msra.mxu0 0.0
    %3242 = vmatprep.subr.mxu0 0.0
    %3243 = vmatpush1.msra.mxu0 0.0
    %3244 = vmatprep.subr.mxu0 0.0
    %3245 = vmatpush1.msra.mxu0 0.0
    %3246 = vmatprep.mubr.f32.mxu0 0.0
    %3247 = vmatmul.mubr.f32.gmra.mrb[0].mxu0 %v3159
    %v3248 = vpop.f32.mrb[0].mxu0
    %v3249 = vadd.f32 %v3156, %v3248
    %v3250 = vpop.f32.mrb[0].mxu0
    %3251 = vmatprep.mubr.f32.mxu0 0.0
    %3252 = vmatmul.mubr.f32.gmra.mrb[0].mxu0 %v3162
    %v3253 = vpop.f32.mrb[0].mxu0
    %v3254 = vadd.f32 %v3156, %v3253
    %v3255 = vpop.f32.mrb[0].mxu0
    %3256 = vmatprep.mubr.f32.mxu0 0.0
    %3257 = vmatmul.mubr.f32.gmra.mrb[0].mxu0 %v3165
    %v3258 = vpop.f32.mrb[0].mxu0
    %v3259 = vadd.f32 %v3156, %v3258
    %v3260 = vpop.f32.mrb[0].mxu0
    %3261 = vmatprep.mubr.f32.mxu0 0.0
    %3262 = vmatmul.mubr.f32.gmra.mrb[0].mxu0 %v3168
    %v3263 = vpop.f32.mrb[0].mxu0
    %v3264 = vadd.f32 %v3156, %v3263
    %v3265 = vpop.f32.mrb[0].mxu0
    %3266 = vmatprep.mubr.f32.mxu0 0.0
    %3267 = vmatmul.mubr.f32.gmra.mrb[0].mxu0 %v3171
    %v3268 = vpop.f32.mrb[0].mxu0
    %v3269 = vadd.f32 %v3156, %v3268
    %v3270 = vpop.f32.mrb[0].mxu0
    %3271 = vmatprep.mubr.f32.mxu0 0.0
    %3272 = vmatmul.mubr.f32.gmra.mrb[0].mxu0 %v3174
    %v3273 = vpop.f32.mrb[0].mxu0
    %v3274 = vadd.f32 %v3156, %v3273
    %v3275 = vpop.f32.mrb[0].mxu0
    %3276 = vmatprep.mubr.f32.mxu0 0.0
    %3277 = vmatmul.mubr.f32.gmra.mrb[0].mxu0 %v3177
    %v3278 = vpop.f32.mrb[0].mxu0
    %v3279 = vadd.f32 %v3156, %v3278
    %v3280 = vpop.f32.mrb[0].mxu0
    %3281 = vmatprep.mubr.f32.mxu0 0.0
    %3282 = vmatmul.mubr.f32.gmra.mrb[0].mxu0 %v3180
    %v3283 = vpop.f32.mrb[0].mxu0
    %v3284 = vadd.f32 %v3156, %v3283
    %v3285 = vpop.f32.mrb[0].mxu0
    %3286 = vdwg.mxu0
    %3287 = vmax.xlane.f32.xlu0 %v3249
    %v3288 = vpop.xlane.xlu0 %3287
    %3289 = vmax.xlane.f32.xlu0 %v3254
    %v3290 = vpop.xlane.xlu0 %3289
    %3291 = vmax.xlane.f32.xlu0 %v3259
    %v3292 = vpop.xlane.xlu0 %3291
    %3293 = vmax.xlane.f32.xlu0 %v3264
    %v3294 = vpop.xlane.xlu0 %3293
    %3295 = vmax.xlane.f32.xlu0 %v3269
    %v3296 = vpop.xlane.xlu0 %3295
    %3297 = vmax.xlane.f32.xlu0 %v3274
    %v3298 = vpop.xlane.xlu0 %3297
    %3299 = vmax.xlane.f32.xlu0 %v3279
    %v3300 = vpop.xlane.xlu0 %3299
    %3301 = vmax.xlane.f32.xlu0 %v3284
    %v3302 = vpop.xlane.xlu0 %3301
    %v3303 = vsub.f32 %v3249, %v3288
    %v3304 = vsub.f32 %v3254, %v3290
    %v3305 = vsub.f32 %v3259, %v3292
    %v3306 = vsub.f32 %v3264, %v3294
    %v3307 = vsub.f32 %v3269, %v3296
    %v3308 = vsub.f32 %v3274, %v3298
    %v3309 = vsub.f32 %v3279, %v3300
    %v3310 = vsub.f32 %v3284, %v3302
    %v3311 = vmul.f32 %v3303, 1.442695
    %v3312 = vpow.pop %v3311
    %v3313 = vmul.f32 %v3304, 1.442695
    %v3314 = vpow.pop %v3313
    %v3315 = vmul.f32 %v3305, 1.442695
    %v3316 = vpow.pop %v3315
    %v3317 = vmul.f32 %v3306, 1.442695
    %v3318 = vpow.pop %v3317
    %v3319 = vmul.f32 %v3307, 1.442695
    %v3320 = vpow.pop %v3319
    %v3321 = vmul.f32 %v3308, 1.442695
    %v3322 = vpow.pop %v3321
    %v3323 = vmul.f32 %v3309, 1.442695
    %v3324 = vpow.pop %v3323
    %v3325 = vmul.f32 %v3310, 1.442695
    %v3326 = vpow.pop %v3325
    %3327 = vadd.xlane.f32.xlu0 %v3312
    %v3328 = vpop.xlane.xlu0 %3327
    %3329 = vadd.xlane.f32.xlu0 %v3314
    %v3330 = vpop.xlane.xlu0 %3329
    %3331 = vadd.xlane.f32.xlu0 %v3316
    %v3332 = vpop.xlane.xlu0 %3331
    %3333 = vadd.xlane.f32.xlu0 %v3318
    %v3334 = vpop.xlane.xlu0 %3333
    %3335 = vadd.xlane.f32.xlu0 %v3320
    %v3336 = vpop.xlane.xlu0 %3335
    %3337 = vadd.xlane.f32.xlu0 %v3322
    %v3338 = vpop.xlane.xlu0 %3337
    %3339 = vadd.xlane.f32.xlu0 %v3324
    %v3340 = vpop.xlane.xlu0 %3339
    %3341 = vadd.xlane.f32.xlu0 %v3326
    %v3342 = vpop.xlane.xlu0 %3341
    %v3343 = vlog2.pop %v3328
    %v3344 = vmul.f32 %v3343, 0.6931472
    %v3345 = vlog2.pop %v3330
    %v3346 = vmul.f32 %v3345, 0.6931472
    %v3347 = vlog2.pop %v3332
    %v3348 = vmul.f32 %v3347, 0.6931472
    %v3349 = vlog2.pop %v3334
    %v3350 = vmul.f32 %v3349, 0.6931472
    %v3351 = vlog2.pop %v3336
    %v3352 = vmul.f32 %v3351, 0.6931472
    %v3353 = vlog2.pop %v3338
    %v3354 = vmul.f32 %v3353, 0.6931472
    %v3355 = vlog2.pop %v3340
    %v3356 = vmul.f32 %v3355, 0.6931472
    %v3357 = vlog2.pop %v3342
    %v3358 = vmul.f32 %v3357, 0.6931472
    %v3359 = vsub.f32 %v3303, %v3344
    %v3360 = vsub.f32 %v3304, %v3346
    %v3361 = vsub.f32 %v3305, %v3348
    %v3362 = vsub.f32 %v3306, %v3350
    %v3363 = vsub.f32 %v3307, %v3352
    %v3364 = vsub.f32 %v3308, %v3354
    %v3365 = vsub.f32 %v3309, %v3356
    %v3366 = vsub.f32 %v3310, %v3358
    %3367 = vst [vmem:[%s16] sm:$0xff] %v3359
    %3368 = vst [vmem:[%s16 + $0x8] sm:$0xff] %v3360
    %3369 = vst [vmem:[%s16 + $0x10] sm:$0xff] %v3361
    %3370 = vst [vmem:[%s16 + $0x18] sm:$0xff] %v3362
    %3371 = vst [vmem:[%s16 + $0x20] sm:$0xff] %v3363
    %3372 = vst [vmem:[%s16 + $0x28] sm:$0xff] %v3364
    %3373 = vst [vmem:[%s16 + $0x30] sm:$0xff] %v3365
    %3374 = vst [vmem:[%s16 + $0x38] sm:$0xff] %v3366
    // Predicated region
    $region78: #{tagger_forward.1} parent=1 // pred_check
      _
    $region79: #{tagger_forward.1} parent=1 // pred_check_branch
      %3376 = sbr.rel (0) target = $region81
    $region80: #{tagger_forward.1} parent=1 // pred_region
      _
    $region81: #{tagger_forward.1} parent=1 // pred_fallthru
      _
    // Predicated region
    $region82: #{tagger_forward.1} parent=1 // pred_check
      _
    $region83: #{tagger_forward.1} parent=1 // pred_check_branch
      %3378 = sbr.rel (0) target = $region85
    $region84: #{tagger_forward.1} parent=1 // pred_region
      _
    $region85: #{tagger_forward.1} parent=1 // pred_fallthru
      _
    %3379 = vsyncpa [#allocation5], 1
    %3380 = vsyncpa [#allocation7], 1

</llo_original>
